<compile_context>
chip_gen: v7x
topology: tpu7x:2x2x1
jax: 0.10.0
libtpu: 0.0.40
codegen_flags: <defaults>
</compile_context>

<pallas_src>
import jax
import jax.numpy as jnp
from jax.experimental import pallas as pl
from jax.experimental.pallas import tpu as pltpu

CHAR_EMBED = 50   # fixed by the module (char_embed_size = 50)
KERNEL = 5        # CS224n CNN kernel size
PAD = 1           # conv padding


def _round_up(x, m):
    return ((x + m - 1) // m) * m


def _char_cnn_highway_kernel(ids_ref, table_ref, wconv_ref, bconv_ref,
                             whw_ref, bhw_ref, out_ref):
    ids = ids_ref[...]                                   # (tn, L) int32
    tn, l = ids.shape
    v, cin = table_ref.shape                             # char table (bf16), cin padded to 64
    e_pad = out_ref.shape[1]                             # word_embed padded to mult of 128
    l_out = l + 2 * PAD - KERNEL + 1

    # --- 1. char embedding lookup fused as one-hot @ table on the MXU (exact for 0/1) ---
    iota_v = jax.lax.broadcasted_iota(jnp.int32, (tn, l, v), 2)
    onehot = jnp.where(ids[:, :, None] == iota_v, 1.0, 0.0).astype(table_ref.dtype)
    emb = jnp.dot(onehot.reshape(tn * l, v), table_ref[...],
                  preferred_element_type=jnp.float32)    # (tn*l, cin) f32 (bf16-exact values)
    emb = emb.reshape(tn, l, cin)

    # --- 2. Conv1d (pad=1) as KERNEL accumulated per-tap dots (no unaligned im2col concat) ---
    zpad = jnp.zeros((tn, PAD, cin), jnp.float32)
    x = jnp.concatenate([zpad, emb, zpad], axis=1)       # (tn, l + 2*PAD, cin)
    acc = jnp.zeros((tn * l_out, e_pad), jnp.float32)
    for k in range(KERNEL):                              # small static unroll (5 taps)
        xk = x[:, k:k + l_out, :].reshape(tn * l_out, cin).astype(wconv_ref.dtype)
        acc = acc + jnp.dot(xk, wconv_ref[k], preferred_element_type=jnp.float32)
    conv = jnp.maximum(acc + bconv_ref[...], 0.0).reshape(tn, l_out, e_pad)

    # max-pool over time
    h = jnp.max(conv, axis=1)                            # (tn, e_pad) f32

    # --- 3. Highway: proj & gate fused into one matmul ---
    hw = jnp.dot(h.astype(whw_ref.dtype), whw_ref[...],
                 preferred_element_type=jnp.float32) + bhw_ref[...]   # (tn, 2*e_pad)
    proj = jnp.maximum(hw[:, :e_pad], 0.0)
    gate = jax.nn.sigmoid(hw[:, e_pad:])
    out = gate * proj + (1.0 - gate) * h                 # padded cols stay exactly 0

    # --- 4. dropout is identity at inference time ---
    # TODO(synk): nn.Dropout(p=0.3) training-mode masking omitted.
    out_ref[...] = out.astype(out_ref.dtype)


def init_params(key, vocab_size, word_embed_size, pad_idx=0):
    e = word_embed_size
    e_pad = _round_up(e, 128)                  # lane-dense output / MXU-friendly N
    cin_pad = _round_up(CHAR_EMBED, 64)        # 50 -> 64 (aligned per-tap K)
    ks = jax.random.split(key, 7)

    char_emb = 0.1 * jax.random.normal(ks[0], (vocab_size, CHAR_EMBED), jnp.float32)
    char_emb = char_emb.at[pad_idx].set(0.0)   # padding_idx row is zero
    table = jnp.zeros((vocab_size, cin_pad), jnp.float32).at[:, :CHAR_EMBED].set(char_emb)

    # PyTorch Conv1d weight (C_out, C_in, K) -> per-tap (K, C_in_pad, E_pad), zero padded
    wconv = 0.1 * jax.random.normal(ks[1], (e, CHAR_EMBED, KERNEL), jnp.float32)
    wconv_taps = jnp.zeros((KERNEL, cin_pad, e_pad), jnp.float32)
    wconv_taps = wconv_taps.at[:, :CHAR_EMBED, :e].set(jnp.transpose(wconv, (2, 1, 0)))
    bconv = jnp.zeros((1, e_pad), jnp.float32).at[0, :e].set(
        0.1 * jax.random.normal(ks[2], (e,), jnp.float32))

    # Highway: PyTorch Linear weights (out, in); fuse proj/gate into one (E_pad, 2*E_pad).
    # Columns [0, e) = proj, columns [e_pad, e_pad + e) = gate; padded cols/rows are zero
    # so padded output columns are exactly 0 (gate=0.5, proj=0, h=0).
    wproj = 0.1 * jax.random.normal(ks[3], (e, e), jnp.float32)
    bproj = 0.1 * jax.random.normal(ks[4], (e,), jnp.float32)
    wgate = 0.1 * jax.random.normal(ks[5], (e, e), jnp.float32)
    bgate = 0.1 * jax.random.normal(ks[6], (e,), jnp.float32)
    whw = jnp.zeros((e_pad, 2 * e_pad), jnp.float32)
    whw = whw.at[:e, :e].set(wproj.T).at[:e, e_pad:e_pad + e].set(wgate.T)
    bhw = jnp.zeros((1, 2 * e_pad), jnp.float32)
    bhw = bhw.at[0, :e].set(bproj).at[0, e_pad:e_pad + e].set(bgate)

    return dict(
        char_table=table.astype(jnp.bfloat16),     # bf16 transport, f32 accumulation
        wconv=wconv_taps.astype(jnp.bfloat16),
        bconv=bconv,                               # biases stay f32 (tiny)
        whw=whw.astype(jnp.bfloat16),
        bhw=bhw,
    )


def model_embeddings_forward(char_ids, params, *, word_embed_size, tile_n=256):
    """char_ids: (sentence_length, batch_size, max_word_length) int32
       returns : (sentence_length, batch_size, word_embed_size) float32"""
    sent_len, batch, max_word_len = char_ids.shape
    if max_word_len + 2 * PAD < KERNEL:
        raise ValueError("max_word_length too short for k=5 conv with pad=1")
    n = sent_len * batch

    vocab, cin_pad = params["char_table"].shape
    e_pad = params["bconv"].shape[1]

    # clamp tile to the problem size, keep it a multiple of 8, pad N (no divisibility assert)
    tile_n = _round_up(max(8, min(tile_n, _round_up(n, 8))), 8)
    n_pad = _round_up(n, tile_n)
    ids = char_ids.reshape(n, max_word_len).astype(jnp.int32)
    if n_pad != n:
        ids = jnp.pad(ids, ((0, n_pad - n), (0, 0)))   # padded rows computed then discarded

    out = pl.pallas_call(
        _char_cnn_highway_kernel,
        out_shape=jax.ShapeDtypeStruct((n_pad, e_pad), jnp.float32),
        grid_spec=pltpu.PrefetchScalarGridSpec(
            num_scalar_prefetch=0,
            grid=(n_pad // tile_n,),
            in_specs=[
                pl.BlockSpec((tile_n, max_word_len), lambda i: (i, 0)),      # char ids
                pl.BlockSpec((vocab, cin_pad), lambda i: (0, 0)),            # char table
                pl.BlockSpec((KERNEL, cin_pad, e_pad), lambda i: (0, 0, 0)), # conv taps
                pl.BlockSpec((1, e_pad), lambda i: (0, 0)),                  # conv bias
                pl.BlockSpec((e_pad, 2 * e_pad), lambda i: (0, 0)),          # fused highway W
                pl.BlockSpec((1, 2 * e_pad), lambda i: (0, 0)),              # fused highway b
            ],
            out_specs=pl.BlockSpec((tile_n, e_pad), lambda i: (i, 0)),       # lane-dense out
        ),
        compiler_params=pltpu.CompilerParams(
            dimension_semantics=("parallel",),        # megacore / 2-TC sharding on v7x
            vmem_limit_bytes=48 * 1024 * 1024,        # headroom for large tile_n (< 64 MiB v7x)
        ),
    )(ids, params["char_table"], params["wconv"], params["bconv"],
      params["whw"], params["bhw"])

    return out[:n, :word_embed_size].reshape(sent_len, batch, word_embed_size)


def _reference_forward(char_ids, params, word_embed_size):
    """Pure-JAX reference mirroring the PyTorch forward (same bf16 weight transport)."""
    sent_len, batch, l = char_ids.shape
    n = sent_len * batch
    e = word_embed_size
    e_pad = params["bconv"].shape[1]

    table = params["char_table"].astype(jnp.float32)
    emb = table[char_ids.reshape(n, l)]                        # (n, l, cin_pad)
    x = jnp.pad(emb, ((0, 0), (PAD, PAD), (0, 0)))
    l_out = l + 2 * PAD - KERNEL + 1

    acc = jnp.zeros((n, l_out, e_pad), jnp.float32)
    for k in range(KERNEL):
        acc = acc + jnp.einsum(
            "nlc,ce->nle",
            x[:, k:k + l_out, :].astype(jnp.bfloat16),
            params["wconv"][k],
            preferred_element_type=jnp.float32)
    conv = jnp.maximum(acc + params["bconv"], 0.0)
    h = jnp.max(conv, axis=1)                                  # (n, e_pad)
    hw = jnp.dot(h.astype(jnp.bfloat16), params["whw"],
                 preferred_element_type=jnp.float32) + params["bhw"]
    proj = jnp.maximum(hw[:, :e_pad], 0.0)
    gate = jax.nn.sigmoid(hw[:, e_pad:])
    out = gate * proj + (1.0 - gate) * h
    return out[:, :e].reshape(sent_len, batch, e)


if __name__ == "__main__":
    key = jax.random.PRNGKey(0)
    k_param, k_data = jax.random.split(key)

    vocab_size = 96
    word_embed_size = 32
    sent_len, batch, max_word_len = 8, 2, 12   # N_words = 16

    params = init_params(k_param, vocab_size, word_embed_size, pad_idx=0)
    char_ids = jax.random.randint(k_data, (sent_len, batch, max_word_len),
                                  0, vocab_size, dtype=jnp.int32)

    out = model_embeddings_forward(char_ids, params, word_embed_size=word_embed_size)
    out = jax.block_until_ready(out)

    ref = _reference_forward(char_ids, params, word_embed_size)
    assert out.shape == (sent_len, batch, word_embed_size)
    err = float(jnp.max(jnp.abs(out - ref)))
    assert err < 1e-3, f"mismatch vs reference: max abs err {err}"

    print("KERNEL_OK")
</pallas_src>

<mosaic_0001>
module attributes {stable_mosaic.version = 11 : i64} {
  func.func @_char_cnn_highway_kernel(%arg0: i32, %arg1: memref<16x12xi32, #tpu.memory_space<vmem>>, %arg2: memref<96x64xbf16, #tpu.memory_space<vmem>>, %arg3: memref<5x64x128xbf16, #tpu.memory_space<vmem>>, %arg4: memref<1x128xf32, #tpu.memory_space<vmem>>, %arg5: memref<128x256xbf16, #tpu.memory_space<vmem>>, %arg6: memref<1x256xf32, #tpu.memory_space<vmem>>, %arg7: memref<16x128xf32, #tpu.memory_space<vmem>>) attributes {dimension_semantics = [#tpu.dimension_semantics<parallel>], iteration_bounds = array<i64: 1>, scalar_prefetch = 0 : i64, scratch_operands = 0 : i64, tpu.core_type = #tpu.core_type<tc>, window_params = [{transform_indices = @transform_0, window_bounds = array<i64: 16, 12>}, {pipeline_mode = #tpu.pipeline_mode<synchronous>, transform_indices = @transform_1, window_bounds = array<i64: 96, 64>}, {pipeline_mode = #tpu.pipeline_mode<synchronous>, transform_indices = @transform_2, window_bounds = array<i64: 5, 64, 128>}, {pipeline_mode = #tpu.pipeline_mode<synchronous>, transform_indices = @transform_3, window_bounds = array<i64: 1, 128>}, {pipeline_mode = #tpu.pipeline_mode<synchronous>, transform_indices = @transform_4, window_bounds = array<i64: 128, 256>}, {pipeline_mode = #tpu.pipeline_mode<synchronous>, transform_indices = @transform_5, window_bounds = array<i64: 1, 256>}, {transform_indices = @transform_6, window_bounds = array<i64: 16, 128>}]} {
    %c0 = arith.constant 0 : index
    %c0_0 = arith.constant 0 : index
    %0 = vector.load %arg1[%c0, %c0_0] : memref<16x12xi32, #tpu.memory_space<vmem>>, vector<16x12xi32>
    %1 = tpu.iota {dimensions = array<i32: 2>} : vector<16x12x96xi32>
    %2 = vector.shape_cast %0 : vector<16x12xi32> to vector<16x12x1xi32>
    %3 = vector.broadcast %2 : vector<16x12x1xi32> to vector<16x12x96xi32>
    %4 = arith.cmpi eq, %3, %1 : vector<16x12x96xi32>
    %cst = arith.constant 1.000000e+00 : f32
    %cst_1 = arith.constant 0.000000e+00 : f32
    %5 = vector.broadcast %cst : f32 to vector<16x12x96xf32>
    %6 = vector.broadcast %cst_1 : f32 to vector<16x12x96xf32>
    %7 = arith.select %4, %5, %6 : vector<16x12x96xi1>, vector<16x12x96xf32>
    %8 = arith.truncf %7 : vector<16x12x96xf32> to vector<16x12x96xbf16>
    %9 = vector.shape_cast %8 : vector<16x12x96xbf16> to vector<192x96xbf16>
    %c0_2 = arith.constant 0 : index
    %c0_3 = arith.constant 0 : index
    %10 = vector.load %arg2[%c0_2, %c0_3] : memref<96x64xbf16, #tpu.memory_space<vmem>>, vector<96x64xbf16>
    %cst_4 = arith.constant dense<0.000000e+00> : vector<192x64xf32>
    %11 = tpu.matmul %9, %10, %cst_4 {dimension_numbers = #tpu.dot_dimension_numbers<[1], [0], [0], [1], [0, 0, 1, 1], [], []>} : vector<192x96xbf16>, vector<96x64xbf16>, vector<192x64xf32> -> vector<192x64xf32>
    %12 = vector.shape_cast %11 : vector<192x64xf32> to vector<16x12x64xf32>
    %cst_5 = arith.constant 0.000000e+00 : f32
    %13 = vector.broadcast %cst_5 : f32 to vector<16x1x64xf32>
    %14 = tpu.concatenate %13, %12, %13 in 1 : vector<16x1x64xf32>, vector<16x12x64xf32>, vector<16x1x64xf32> -> vector<16x14x64xf32>
    %cst_6 = arith.constant 0.000000e+00 : f32
    %15 = vector.broadcast %cst_6 : f32 to vector<160x128xf32>
    %16 = vector.extract_strided_slice %14 {offsets = [0, 0, 0], sizes = [16, 10, 64], strides = [1, 1, 1]} : vector<16x14x64xf32> to vector<16x10x64xf32>
    %17 = vector.shape_cast %16 : vector<16x10x64xf32> to vector<160x64xf32>
    %18 = arith.truncf %17 : vector<160x64xf32> to vector<160x64xbf16>
    %c0_7 = arith.constant 0 : index
    %c0_8 = arith.constant 0 : index
    %c0_9 = arith.constant 0 : index
    %19 = vector.load %arg3[%c0_7, %c0_8, %c0_9] : memref<5x64x128xbf16, #tpu.memory_space<vmem>>, vector<1x64x128xbf16>
    %20 = vector.shape_cast %19 : vector<1x64x128xbf16> to vector<64x128xbf16>
    %cst_10 = arith.constant dense<0.000000e+00> : vector<160x128xf32>
    %21 = tpu.matmul %18, %20, %cst_10 {dimension_numbers = #tpu.dot_dimension_numbers<[1], [0], [0], [1], [0, 0, 1, 1], [], []>} : vector<160x64xbf16>, vector<64x128xbf16>, vector<160x128xf32> -> vector<160x128xf32>
    %22 = arith.addf %15, %21 : vector<160x128xf32>
    %23 = vector.extract_strided_slice %14 {offsets = [0, 1, 0], sizes = [16, 10, 64], strides = [1, 1, 1]} : vector<16x14x64xf32> to vector<16x10x64xf32>
    %24 = vector.shape_cast %23 : vector<16x10x64xf32> to vector<160x64xf32>
    %25 = arith.truncf %24 : vector<160x64xf32> to vector<160x64xbf16>
    %c1 = arith.constant 1 : index
    %c0_11 = arith.constant 0 : index
    %c0_12 = arith.constant 0 : index
    %26 = vector.load %arg3[%c1, %c0_11, %c0_12] : memref<5x64x128xbf16, #tpu.memory_space<vmem>>, vector<1x64x128xbf16>
    %27 = vector.shape_cast %26 : vector<1x64x128xbf16> to vector<64x128xbf16>
    %cst_13 = arith.constant dense<0.000000e+00> : vector<160x128xf32>
    %28 = tpu.matmul %25, %27, %cst_13 {dimension_numbers = #tpu.dot_dimension_numbers<[1], [0], [0], [1], [0, 0, 1, 1], [], []>} : vector<160x64xbf16>, vector<64x128xbf16>, vector<160x128xf32> -> vector<160x128xf32>
    %29 = arith.addf %22, %28 : vector<160x128xf32>
    %30 = vector.extract_strided_slice %14 {offsets = [0, 2, 0], sizes = [16, 10, 64], strides = [1, 1, 1]} : vector<16x14x64xf32> to vector<16x10x64xf32>
    %31 = vector.shape_cast %30 : vector<16x10x64xf32> to vector<160x64xf32>
    %32 = arith.truncf %31 : vector<160x64xf32> to vector<160x64xbf16>
    %c2 = arith.constant 2 : index
    %c0_14 = arith.constant 0 : index
    %c0_15 = arith.constant 0 : index
    %33 = vector.load %arg3[%c2, %c0_14, %c0_15] : memref<5x64x128xbf16, #tpu.memory_space<vmem>>, vector<1x64x128xbf16>
    %34 = vector.shape_cast %33 : vector<1x64x128xbf16> to vector<64x128xbf16>
    %cst_16 = arith.constant dense<0.000000e+00> : vector<160x128xf32>
    %35 = tpu.matmul %32, %34, %cst_16 {dimension_numbers = #tpu.dot_dimension_numbers<[1], [0], [0], [1], [0, 0, 1, 1], [], []>} : vector<160x64xbf16>, vector<64x128xbf16>, vector<160x128xf32> -> vector<160x128xf32>
    %36 = arith.addf %29, %35 : vector<160x128xf32>
    %37 = vector.extract_strided_slice %14 {offsets = [0, 3, 0], sizes = [16, 10, 64], strides = [1, 1, 1]} : vector<16x14x64xf32> to vector<16x10x64xf32>
    %38 = vector.shape_cast %37 : vector<16x10x64xf32> to vector<160x64xf32>
    %39 = arith.truncf %38 : vector<160x64xf32> to vector<160x64xbf16>
    %c3 = arith.constant 3 : index
    %c0_17 = arith.constant 0 : index
    %c0_18 = arith.constant 0 : index
    %40 = vector.load %arg3[%c3, %c0_17, %c0_18] : memref<5x64x128xbf16, #tpu.memory_space<vmem>>, vector<1x64x128xbf16>
    %41 = vector.shape_cast %40 : vector<1x64x128xbf16> to vector<64x128xbf16>
    %cst_19 = arith.constant dense<0.000000e+00> : vector<160x128xf32>
    %42 = tpu.matmul %39, %41, %cst_19 {dimension_numbers = #tpu.dot_dimension_numbers<[1], [0], [0], [1], [0, 0, 1, 1], [], []>} : vector<160x64xbf16>, vector<64x128xbf16>, vector<160x128xf32> -> vector<160x128xf32>
    %43 = arith.addf %36, %42 : vector<160x128xf32>
    %44 = vector.extract_strided_slice %14 {offsets = [0, 4, 0], sizes = [16, 10, 64], strides = [1, 1, 1]} : vector<16x14x64xf32> to vector<16x10x64xf32>
    %45 = vector.shape_cast %44 : vector<16x10x64xf32> to vector<160x64xf32>
    %46 = arith.truncf %45 : vector<160x64xf32> to vector<160x64xbf16>
    %c4 = arith.constant 4 : index
    %c0_20 = arith.constant 0 : index
    %c0_21 = arith.constant 0 : index
    %47 = vector.load %arg3[%c4, %c0_20, %c0_21] : memref<5x64x128xbf16, #tpu.memory_space<vmem>>, vector<1x64x128xbf16>
    %48 = vector.shape_cast %47 : vector<1x64x128xbf16> to vector<64x128xbf16>
    %cst_22 = arith.constant dense<0.000000e+00> : vector<160x128xf32>
    %49 = tpu.matmul %46, %48, %cst_22 {dimension_numbers = #tpu.dot_dimension_numbers<[1], [0], [0], [1], [0, 0, 1, 1], [], []>} : vector<160x64xbf16>, vector<64x128xbf16>, vector<160x128xf32> -> vector<160x128xf32>
    %50 = arith.addf %43, %49 : vector<160x128xf32>
    %c0_23 = arith.constant 0 : index
    %c0_24 = arith.constant 0 : index
    %51 = vector.load %arg4[%c0_23, %c0_24] : memref<1x128xf32, #tpu.memory_space<vmem>>, vector<1x128xf32>
    %52 = vector.broadcast %51 : vector<1x128xf32> to vector<160x128xf32>
    %53 = arith.addf %50, %52 : vector<160x128xf32>
    %cst_25 = arith.constant 0.000000e+00 : f32
    %54 = vector.broadcast %cst_25 : f32 to vector<160x128xf32>
    %55 = arith.maximumf %53, %54 : vector<160x128xf32>
    %56 = vector.shape_cast %55 : vector<160x128xf32> to vector<16x10x128xf32>
    %cst_26 = arith.constant dense<0xFF800000> : vector<16x128xf32>
    %57 = vector.multi_reduction <maximumf>, %56, %cst_26 [1] : vector<16x10x128xf32> to vector<16x128xf32>
    %58 = arith.truncf %57 : vector<16x128xf32> to vector<16x128xbf16>
    %c0_27 = arith.constant 0 : index
    %c0_28 = arith.constant 0 : index
    %59 = vector.load %arg5[%c0_27, %c0_28] : memref<128x256xbf16, #tpu.memory_space<vmem>>, vector<128x256xbf16>
    %cst_29 = arith.constant dense<0.000000e+00> : vector<16x256xf32>
    %60 = tpu.matmul %58, %59, %cst_29 {dimension_numbers = #tpu.dot_dimension_numbers<[1], [0], [0], [1], [0, 0, 1, 1], [], []>} : vector<16x128xbf16>, vector<128x256xbf16>, vector<16x256xf32> -> vector<16x256xf32>
    %c0_30 = arith.constant 0 : index
    %c0_31 = arith.constant 0 : index
    %61 = vector.load %arg6[%c0_30, %c0_31] : memref<1x256xf32, #tpu.memory_space<vmem>>, vector<1x256xf32>
    %62 = vector.broadcast %61 : vector<1x256xf32> to vector<16x256xf32>
    %63 = arith.addf %60, %62 : vector<16x256xf32>
    %64 = vector.extract_strided_slice %63 {offsets = [0, 0], sizes = [16, 128], strides = [1, 1]} : vector<16x256xf32> to vector<16x128xf32>
    %cst_32 = arith.constant 0.000000e+00 : f32
    %65 = vector.broadcast %cst_32 : f32 to vector<16x128xf32>
    %66 = arith.maximumf %64, %65 : vector<16x128xf32>
    %67 = vector.extract_strided_slice %63 {offsets = [0, 128], sizes = [16, 128], strides = [1, 1]} : vector<16x256xf32> to vector<16x128xf32>
    %68 = arith.negf %67 : vector<16x128xf32>
    %69 = math.exp %68 : vector<16x128xf32>
    %cst_33 = arith.constant 1.000000e+00 : f32
    %70 = vector.broadcast %cst_33 : f32 to vector<16x128xf32>
    %71 = arith.addf %70, %69 : vector<16x128xf32>
    %72 = arith.divf %70, %71 : vector<16x128xf32>
    %73 = arith.mulf %72, %66 : vector<16x128xf32>
    %cst_34 = arith.constant 1.000000e+00 : f32
    %74 = vector.broadcast %cst_34 : f32 to vector<16x128xf32>
    %75 = arith.subf %74, %72 : vector<16x128xf32>
    %76 = arith.mulf %75, %57 : vector<16x128xf32>
    %77 = arith.addf %73, %76 : vector<16x128xf32>
    %c0_35 = arith.constant 0 : index
    %c0_36 = arith.constant 0 : index
    %78 = vector.load %arg7[%c0_35, %c0_36] : memref<16x128xf32, #tpu.memory_space<vmem>>, vector<16x128xf32>
    tpu.vector_store %arg7[%c0_35, %c0_36], %77 {strides = array<i32>} : memref<16x128xf32, #tpu.memory_space<vmem>>, vector<16x128xf32>,
    return
  }
  func.func @transform_0(%arg0: i32) -> (i32, i32) {
    %c0_i32 = arith.constant 0 : i32
    %c0_i32_0 = arith.constant 0 : i32
    return %arg0, %c0_i32 : i32, i32
  }
  func.func @transform_1(%arg0: i32) -> (i32, i32) {
    %c0_i32 = arith.constant 0 : i32
    %c0_i32_0 = arith.constant 0 : i32
    %c0_i32_1 = arith.constant 0 : i32
    return %c0_i32, %c0_i32_0 : i32, i32
  }
  func.func @transform_2(%arg0: i32) -> (i32, i32, i32) {
    %c0_i32 = arith.constant 0 : i32
    %c0_i32_0 = arith.constant 0 : i32
    %c0_i32_1 = arith.constant 0 : i32
    %c0_i32_2 = arith.constant 0 : i32
    return %c0_i32, %c0_i32_0, %c0_i32_1 : i32, i32, i32
  }
  func.func @transform_3(%arg0: i32) -> (i32, i32) {
    %c0_i32 = arith.constant 0 : i32
    %c0_i32_0 = arith.constant 0 : i32
    %c0_i32_1 = arith.constant 0 : i32
    return %c0_i32, %c0_i32_0 : i32, i32
  }
  func.func @transform_4(%arg0: i32) -> (i32, i32) {
    %c0_i32 = arith.constant 0 : i32
    %c0_i32_0 = arith.constant 0 : i32
    %c0_i32_1 = arith.constant 0 : i32
    return %c0_i32, %c0_i32_0 : i32, i32
  }
  func.func @transform_5(%arg0: i32) -> (i32, i32) {
    %c0_i32 = arith.constant 0 : i32
    %c0_i32_0 = arith.constant 0 : i32
    %c0_i32_1 = arith.constant 0 : i32
    return %c0_i32, %c0_i32_0 : i32, i32
  }
  func.func @transform_6(%arg0: i32) -> (i32, i32) {
    %c0_i32 = arith.constant 0 : i32
    %c0_i32_0 = arith.constant 0 : i32
    return %arg0, %c0_i32 : i32, i32
  }
}

</mosaic_0001>

<llo_original>
// kernel: tpu_custom_call.1
$region0: #{tpu_custom_call.1}
  #allocation0 [shape = 'u32[]', space=smem, size = 0x4, offset = 0x4, fixed_abs, tag = 'smem constant byte address 0x4 - core index']
  #allocation1 [shape = 'u32[144,128]{1,0:T(1,128)}', space=vmem, size = 0x12000, scoped, tag = 'internal scratch']
  %s0 = inlined_call_operand.vmem [shape: s32[16,12], index: 0, kind: input, shape index: {}]
  %s1 = inlined_call_operand.vmem [shape: bf16[96,64], index: 1, kind: input, shape index: {}]
  %s2 = inlined_call_operand.hbm [shape: bf16[5,64,128], index: 2, kind: input, shape index: {}]
  %s3 = inlined_call_operand.vmem [shape: f32[1,128], index: 3, kind: input, shape index: {}]
  %s4 = inlined_call_operand.hbm [shape: bf16[128,256], index: 4, kind: input, shape index: {}]
  %s5 = inlined_call_operand.vmem [shape: f32[1,256], index: 5, kind: input, shape index: {}]
  %s6 = inlined_call_operand.hbm [shape: f32[16,128], index: 6, kind: output, shape index: {}]
  %s7 = sld [smem:[#allocation0]]
  $region42: #{tpu_custom_call.1} parent=0
    _
  %s9 = ssub.s32 1, %s7
  %s10 = scalar_select 0, %s9, %s7
  $region1: #{tpu_custom_call.1} parent=0
    #allocation2 [shape = 'u8[81920]{0}', space=vmem, size = 0x14000, scoped, tag = 'input window, operand 2, single buffered']
    #allocation3 [shape = 's32[1]{0}', space=sflag, size = 0x4, scoped, tag = 'scoped memory for tpu_custom_call.1']
    #allocation4 [shape = 's32[1]{0}', space=sflag, size = 0x4, scoped, tag = 'scoped memory for tpu_custom_call.1']
    #allocation5 [shape = 'u8[65536]{0}', space=vmem, size = 0x10000, scoped, tag = 'input window, operand 4, single buffered']
    #allocation6 [shape = 's32[1]{0}', space=sflag, size = 0x4, scoped, tag = 'scoped memory for tpu_custom_call.1']
    #allocation7 [shape = 'u8[8192]{0}', space=vmem, size = 0x2000, scoped, tag = 'output window, operand 0, single buffered']
    %11 = vsyncpa [#allocation3], 0
    %12 = vsyncpa [#allocation6], 0
    %13 = vsyncpa [#allocation4], 0
    // Predicated region
    $region2: #{tpu_custom_call.1} parent=1 // pred_check
      _
    $region3: #{tpu_custom_call.1} parent=1 // pred_check_branch
      %15 = sbr.rel (0) target = $region5
    $region4: #{tpu_custom_call.1} parent=1 // pred_region
      _
    $region5: #{tpu_custom_call.1} parent=1 // pred_fallthru
      _
    // Predicated region
    $region6: #{tpu_custom_call.1} parent=1 // pred_check
      _
    $region7: #{tpu_custom_call.1} parent=1 // pred_check_branch
      %17 = sbr.rel (0) target = $region9
    $region8: #{tpu_custom_call.1} parent=1 // pred_region
      _
    $region9: #{tpu_custom_call.1} parent=1 // pred_fallthru
      _
    // Predicated region
    $region10: #{tpu_custom_call.1} parent=1 // pred_check
      _
    $region11: #{tpu_custom_call.1} parent=1 // pred_check_branch
      %19 = sbr.rel (0) target = $region13
    $region12: #{tpu_custom_call.1} parent=1 // pred_region
      %s21 = ssub.s32 2560, 2560
      %22 = vsyncadd [#allocation3], %s21
      %s23 = sshll.u32 [#allocation2], 4
      %s24 = int_to_ptr.vmem [resolvable:$true] %s23
      %29 = dma.hbm_to_vmem [thread:$0]  %s2, 2560, %s24, [#allocation3], 64, 64, 4
    $region13: #{tpu_custom_call.1} parent=1 // pred_fallthru
      _
    // Predicated region
    $region14: #{tpu_custom_call.1} parent=1 // pred_check
      _
    $region15: #{tpu_custom_call.1} parent=1 // pred_check_branch
      %31 = sbr.rel (0) target = $region17
    $region16: #{tpu_custom_call.1} parent=1 // pred_region
      _
    $region17: #{tpu_custom_call.1} parent=1 // pred_fallthru
      _
    // Predicated region
    $region18: #{tpu_custom_call.1} parent=1 // pred_check
      _
    $region19: #{tpu_custom_call.1} parent=1 // pred_check_branch
      %33 = sbr.rel (0) target = $region21
    $region20: #{tpu_custom_call.1} parent=1 // pred_region
      %s35 = ssub.s32 2048, 2048
      %36 = vsyncadd [#allocation6], %s35
      %s37 = sshll.u32 [#allocation5], 4
      %s38 = int_to_ptr.vmem [resolvable:$true] %s37
      %43 = dma.hbm_to_vmem [thread:$0]  %s4, 2048, %s38, [#allocation6], 128, 128, 8
    $region21: #{tpu_custom_call.1} parent=1 // pred_fallthru
      _
    // Predicated region
    $region22: #{tpu_custom_call.1} parent=1 // pred_check
      _
    $region23: #{tpu_custom_call.1} parent=1 // pred_check_branch
      %45 = sbr.rel (0) target = $region25
    $region24: #{tpu_custom_call.1} parent=1 // pred_region
      _
    $region25: #{tpu_custom_call.1} parent=1 // pred_fallthru
      _
    // Predicated region
    $region26: #{tpu_custom_call.1} parent=1 // pred_check
      _
    $region27: #{tpu_custom_call.1} parent=1 // pred_check_branch
      %47 = sbr.rel (0) target = $region29
    $region28: #{tpu_custom_call.1} parent=1 // pred_region
      %48 = dma.done [#allocation3], 2560
    $region29: #{tpu_custom_call.1} parent=1 // pred_fallthru
      _
    // Predicated region
    $region30: #{tpu_custom_call.1} parent=1 // pred_check
      _
    $region31: #{tpu_custom_call.1} parent=1 // pred_check_branch
      %50 = sbr.rel (0) target = $region33
    $region32: #{tpu_custom_call.1} parent=1 // pred_region
      %51 = dma.done [#allocation6], 2048
    $region33: #{tpu_custom_call.1} parent=1 // pred_fallthru
      _
    %v53 = vld [vmem:[%s0] sm:$0xff]
    %v54 = vld [vmem:[%s0 + $0x8] sm:$0xff]
    %v55 = vlaneseq
    %v56 = vand.u32 %v55, 127
    %v57 = vlaneseq
    %v58 = vshrl.u32 %v57, 7
    %v59 = vsub.s32 0, %v58
    %v60 = vrot.slane %v53, %v59
    %62 = vbcast.lane.b32.xlu0 %v60, 256
    %v63 = vpop.permute.xlu0 %62
    %s65 = sor.u32 256, 8
    %66 = vbcast.lane.b32.xlu0 %v60, %s65
    %v67 = vpop.permute.xlu0 %66
    %v68 = vlaneseq
    %v69 = vshrl.u32 %v68, 7
    %v70 = vsub.s32 1, %v69
    %v71 = vrot.slane %v53, %v70
    %73 = vbcast.lane.b32.xlu0 %v71, 256
    %v74 = vpop.permute.xlu0 %73
    %s76 = sor.u32 256, 8
    %77 = vbcast.lane.b32.xlu0 %v71, %s76
    %v78 = vpop.permute.xlu0 %77
    %v79 = vlaneseq
    %v80 = vshrl.u32 %v79, 7
    %v81 = vsub.s32 2, %v80
    %v82 = vrot.slane %v53, %v81
    %84 = vbcast.lane.b32.xlu0 %v82, 256
    %v85 = vpop.permute.xlu0 %84
    %s87 = sor.u32 256, 8
    %88 = vbcast.lane.b32.xlu0 %v82, %s87
    %v89 = vpop.permute.xlu0 %88
    %v90 = vlaneseq
    %v91 = vshrl.u32 %v90, 7
    %v92 = vsub.s32 3, %v91
    %v93 = vrot.slane %v53, %v92
    %95 = vbcast.lane.b32.xlu0 %v93, 256
    %v96 = vpop.permute.xlu0 %95
    %s98 = sor.u32 256, 8
    %99 = vbcast.lane.b32.xlu0 %v93, %s98
    %v100 = vpop.permute.xlu0 %99
    %v101 = vlaneseq
    %v102 = vshrl.u32 %v101, 7
    %v103 = vsub.s32 4, %v102
    %v104 = vrot.slane %v53, %v103
    %106 = vbcast.lane.b32.xlu0 %v104, 256
    %v107 = vpop.permute.xlu0 %106
    %s109 = sor.u32 256, 8
    %110 = vbcast.lane.b32.xlu0 %v104, %s109
    %v111 = vpop.permute.xlu0 %110
    %v112 = vlaneseq
    %v113 = vshrl.u32 %v112, 7
    %v114 = vsub.s32 5, %v113
    %v115 = vrot.slane %v53, %v114
    %117 = vbcast.lane.b32.xlu0 %v115, 256
    %v118 = vpop.permute.xlu0 %117
    %s120 = sor.u32 256, 8
    %121 = vbcast.lane.b32.xlu0 %v115, %s120
    %v122 = vpop.permute.xlu0 %121
    %v123 = vlaneseq
    %v124 = vshrl.u32 %v123, 7
    %v125 = vsub.s32 6, %v124
    %v126 = vrot.slane %v53, %v125
    %128 = vbcast.lane.b32.xlu0 %v126, 256
    %v129 = vpop.permute.xlu0 %128
    %s131 = sor.u32 256, 8
    %132 = vbcast.lane.b32.xlu0 %v126, %s131
    %v133 = vpop.permute.xlu0 %132
    %v134 = vlaneseq
    %v135 = vshrl.u32 %v134, 7
    %v136 = vsub.s32 7, %v135
    %v137 = vrot.slane %v53, %v136
    %139 = vbcast.lane.b32.xlu0 %v137, 256
    %v140 = vpop.permute.xlu0 %139
    %s142 = sor.u32 256, 8
    %143 = vbcast.lane.b32.xlu0 %v137, %s142
    %v144 = vpop.permute.xlu0 %143
    %v145 = vlaneseq
    %v146 = vshrl.u32 %v145, 7
    %v147 = vsub.s32 0, %v146
    %v148 = vrot.slane %v54, %v147
    %150 = vbcast.lane.b32.xlu0 %v148, 256
    %v151 = vpop.permute.xlu0 %150
    %s153 = sor.u32 256, 8
    %154 = vbcast.lane.b32.xlu0 %v148, %s153
    %v155 = vpop.permute.xlu0 %154
    %v156 = vlaneseq
    %v157 = vshrl.u32 %v156, 7
    %v158 = vsub.s32 1, %v157
    %v159 = vrot.slane %v54, %v158
    %161 = vbcast.lane.b32.xlu0 %v159, 256
    %v162 = vpop.permute.xlu0 %161
    %s164 = sor.u32 256, 8
    %165 = vbcast.lane.b32.xlu0 %v159, %s164
    %v166 = vpop.permute.xlu0 %165
    %v167 = vlaneseq
    %v168 = vshrl.u32 %v167, 7
    %v169 = vsub.s32 2, %v168
    %v170 = vrot.slane %v54, %v169
    %172 = vbcast.lane.b32.xlu0 %v170, 256
    %v173 = vpop.permute.xlu0 %172
    %s175 = sor.u32 256, 8
    %176 = vbcast.lane.b32.xlu0 %v170, %s175
    %v177 = vpop.permute.xlu0 %176
    %v178 = vlaneseq
    %v179 = vshrl.u32 %v178, 7
    %v180 = vsub.s32 3, %v179
    %v181 = vrot.slane %v54, %v180
    %183 = vbcast.lane.b32.xlu0 %v181, 256
    %v184 = vpop.permute.xlu0 %183
    %s186 = sor.u32 256, 8
    %187 = vbcast.lane.b32.xlu0 %v181, %s186
    %v188 = vpop.permute.xlu0 %187
    %v189 = vlaneseq
    %v190 = vshrl.u32 %v189, 7
    %v191 = vsub.s32 4, %v190
    %v192 = vrot.slane %v54, %v191
    %194 = vbcast.lane.b32.xlu0 %v192, 256
    %v195 = vpop.permute.xlu0 %194
    %s197 = sor.u32 256, 8
    %198 = vbcast.lane.b32.xlu0 %v192, %s197
    %v199 = vpop.permute.xlu0 %198
    %v200 = vlaneseq
    %v201 = vshrl.u32 %v200, 7
    %v202 = vsub.s32 5, %v201
    %v203 = vrot.slane %v54, %v202
    %205 = vbcast.lane.b32.xlu0 %v203, 256
    %v206 = vpop.permute.xlu0 %205
    %s208 = sor.u32 256, 8
    %209 = vbcast.lane.b32.xlu0 %v203, %s208
    %v210 = vpop.permute.xlu0 %209
    %v211 = vlaneseq
    %v212 = vshrl.u32 %v211, 7
    %v213 = vsub.s32 6, %v212
    %v214 = vrot.slane %v54, %v213
    %216 = vbcast.lane.b32.xlu0 %v214, 256
    %v217 = vpop.permute.xlu0 %216
    %s219 = sor.u32 256, 8
    %220 = vbcast.lane.b32.xlu0 %v214, %s219
    %v221 = vpop.permute.xlu0 %220
    %v222 = vlaneseq
    %v223 = vshrl.u32 %v222, 7
    %v224 = vsub.s32 7, %v223
    %v225 = vrot.slane %v54, %v224
    %227 = vbcast.lane.b32.xlu0 %v225, 256
    %v228 = vpop.permute.xlu0 %227
    %s230 = sor.u32 256, 8
    %231 = vbcast.lane.b32.xlu0 %v225, %s230
    %v232 = vpop.permute.xlu0 %231
    %vm233 = vcmp.eq.s32.totalorder %v63, %v56
    %vm234 = vcmp.eq.s32.totalorder %v67, %v56
    %vm235 = vcmp.eq.s32.totalorder %v74, %v56
    %vm236 = vcmp.eq.s32.totalorder %v78, %v56
    %vm237 = vcmp.eq.s32.totalorder %v85, %v56
    %vm238 = vcmp.eq.s32.totalorder %v89, %v56
    %vm239 = vcmp.eq.s32.totalorder %v96, %v56
    %vm240 = vcmp.eq.s32.totalorder %v100, %v56
    %vm241 = vcmp.eq.s32.totalorder %v107, %v56
    %vm242 = vcmp.eq.s32.totalorder %v111, %v56
    %vm243 = vcmp.eq.s32.totalorder %v118, %v56
    %vm244 = vcmp.eq.s32.totalorder %v122, %v56
    %vm245 = vcmp.eq.s32.totalorder %v129, %v56
    %vm246 = vcmp.eq.s32.totalorder %v133, %v56
    %vm247 = vcmp.eq.s32.totalorder %v140, %v56
    %vm248 = vcmp.eq.s32.totalorder %v144, %v56
    %vm249 = vcmp.eq.s32.totalorder %v151, %v56
    %vm250 = vcmp.eq.s32.totalorder %v155, %v56
    %vm251 = vcmp.eq.s32.totalorder %v162, %v56
    %vm252 = vcmp.eq.s32.totalorder %v166, %v56
    %vm253 = vcmp.eq.s32.totalorder %v173, %v56
    %vm254 = vcmp.eq.s32.totalorder %v177, %v56
    %vm255 = vcmp.eq.s32.totalorder %v184, %v56
    %vm256 = vcmp.eq.s32.totalorder %v188, %v56
    %vm257 = vcmp.eq.s32.totalorder %v195, %v56
    %vm258 = vcmp.eq.s32.totalorder %v199, %v56
    %vm259 = vcmp.eq.s32.totalorder %v206, %v56
    %vm260 = vcmp.eq.s32.totalorder %v210, %v56
    %vm261 = vcmp.eq.s32.totalorder %v217, %v56
    %vm262 = vcmp.eq.s32.totalorder %v221, %v56
    %vm263 = vcmp.eq.s32.totalorder %v228, %v56
    %vm264 = vcmp.eq.s32.totalorder %v232, %v56
    %v265 = vsel %vm233, 1.0, 0.0
    %v266 = vsel %vm234, 1.0, 0.0
    %v267 = vsel %vm235, 1.0, 0.0
    %v268 = vsel %vm236, 1.0, 0.0
    %v269 = vsel %vm237, 1.0, 0.0
    %v270 = vsel %vm238, 1.0, 0.0
    %v271 = vsel %vm239, 1.0, 0.0
    %v272 = vsel %vm240, 1.0, 0.0
    %v273 = vsel %vm241, 1.0, 0.0
    %v274 = vsel %vm242, 1.0, 0.0
    %v275 = vsel %vm243, 1.0, 0.0
    %v276 = vsel %vm244, 1.0, 0.0
    %v277 = vsel %vm245, 1.0, 0.0
    %v278 = vsel %vm246, 1.0, 0.0
    %v279 = vsel %vm247, 1.0, 0.0
    %v280 = vsel %vm248, 1.0, 0.0
    %v281 = vsel %vm249, 1.0, 0.0
    %v282 = vsel %vm250, 1.0, 0.0
    %v283 = vsel %vm251, 1.0, 0.0
    %v284 = vsel %vm252, 1.0, 0.0
    %v285 = vsel %vm253, 1.0, 0.0
    %v286 = vsel %vm254, 1.0, 0.0
    %v287 = vsel %vm255, 1.0, 0.0
    %v288 = vsel %vm256, 1.0, 0.0
    %v289 = vsel %vm257, 1.0, 0.0
    %v290 = vsel %vm258, 1.0, 0.0
    %v291 = vsel %vm259, 1.0, 0.0
    %v292 = vsel %vm260, 1.0, 0.0
    %v293 = vsel %vm261, 1.0, 0.0
    %v294 = vsel %vm262, 1.0, 0.0
    %v295 = vsel %vm263, 1.0, 0.0
    %v296 = vsel %vm264, 1.0, 0.0
    %v297 = vpack.c.bf16 %v266, %v265
    %v298 = vpack.c.bf16 %v268, %v267
    %v299 = vpack.c.bf16 %v270, %v269
    %v300 = vpack.c.bf16 %v272, %v271
    %v301 = vpack.c.bf16 %v274, %v273
    %v302 = vpack.c.bf16 %v276, %v275
    %v303 = vpack.c.bf16 %v278, %v277
    %v304 = vpack.c.bf16 %v280, %v279
    %v305 = vpack.c.bf16 %v282, %v281
    %v306 = vpack.c.bf16 %v284, %v283
    %v307 = vpack.c.bf16 %v286, %v285
    %v308 = vpack.c.bf16 %v288, %v287
    %v309 = vpack.c.bf16 %v290, %v289
    %v310 = vpack.c.bf16 %v292, %v291
    %v311 = vpack.c.bf16 %v294, %v293
    %v312 = vpack.c.bf16 %v296, %v295
    %v329 = vcombine.high %v297, %v297
    %v331 = vunpack.c.l.s4 1983009808
    %v332 = vunpack.c.0.s8 %v331
    %v333 = vlaneseq
    %v334 = vshrl.u32 %v333, 7
    %v335 = vsub.s32 %v332, %v334
    %v336 = vrot.slane %v297, %v335
    %v338 = vunpack.c.l.s4 1983009808
    %v339 = vunpack.c.0.s8 %v338
    %v340 = vlaneseq
    %v341 = vshrl.u32 %v340, 7
    %v342 = vsub.s32 %v339, %v341
    %v343 = vrot.slane %v329, %v342
    %v344 = vcombine.high %v336, %v336
    %v345 = vcombine.high %v298, %v298
    %v347 = vunpack.c.l.s4 1983009808
    %v348 = vunpack.c.0.s8 %v347
    %v349 = vlaneseq
    %v350 = vshrl.u32 %v349, 7
    %v351 = vsub.s32 %v348, %v350
    %v352 = vrot.slane %v298, %v351
    %v354 = vunpack.c.l.s4 1983009808
    %v355 = vunpack.c.0.s8 %v354
    %v356 = vlaneseq
    %v357 = vshrl.u32 %v356, 7
    %v358 = vsub.s32 %v355, %v357
    %v359 = vrot.slane %v345, %v358
    %v360 = vcombine.high %v352, %v352
    %v361 = vcombine.high %v299, %v299
    %v363 = vunpack.c.l.s4 1983009808
    %v364 = vunpack.c.0.s8 %v363
    %v365 = vlaneseq
    %v366 = vshrl.u32 %v365, 7
    %v367 = vsub.s32 %v364, %v366
    %v368 = vrot.slane %v299, %v367
    %v370 = vunpack.c.l.s4 1983009808
    %v371 = vunpack.c.0.s8 %v370
    %v372 = vlaneseq
    %v373 = vshrl.u32 %v372, 7
    %v374 = vsub.s32 %v371, %v373
    %v375 = vrot.slane %v361, %v374
    %v376 = vcombine.high %v368, %v368
    %v377 = vcombine.high %v300, %v300
    %v379 = vunpack.c.l.s4 1983009808
    %v380 = vunpack.c.0.s8 %v379
    %v381 = vlaneseq
    %v382 = vshrl.u32 %v381, 7
    %v383 = vsub.s32 %v380, %v382
    %v384 = vrot.slane %v300, %v383
    %v386 = vunpack.c.l.s4 1983009808
    %v387 = vunpack.c.0.s8 %v386
    %v388 = vlaneseq
    %v389 = vshrl.u32 %v388, 7
    %v390 = vsub.s32 %v387, %v389
    %v391 = vrot.slane %v377, %v390
    %v392 = vcombine.high %v384, %v384
    %v393 = vcombine.high %v301, %v301
    %v395 = vunpack.c.l.s4 1983009808
    %v396 = vunpack.c.0.s8 %v395
    %v397 = vlaneseq
    %v398 = vshrl.u32 %v397, 7
    %v399 = vsub.s32 %v396, %v398
    %v400 = vrot.slane %v301, %v399
    %v402 = vunpack.c.l.s4 1983009808
    %v403 = vunpack.c.0.s8 %v402
    %v404 = vlaneseq
    %v405 = vshrl.u32 %v404, 7
    %v406 = vsub.s32 %v403, %v405
    %v407 = vrot.slane %v393, %v406
    %v408 = vcombine.high %v400, %v400
    %v409 = vcombine.high %v302, %v302
    %v411 = vunpack.c.l.s4 1983009808
    %v412 = vunpack.c.0.s8 %v411
    %v413 = vlaneseq
    %v414 = vshrl.u32 %v413, 7
    %v415 = vsub.s32 %v412, %v414
    %v416 = vrot.slane %v302, %v415
    %v418 = vunpack.c.l.s4 1983009808
    %v419 = vunpack.c.0.s8 %v418
    %v420 = vlaneseq
    %v421 = vshrl.u32 %v420, 7
    %v422 = vsub.s32 %v419, %v421
    %v423 = vrot.slane %v409, %v422
    %v424 = vcombine.high %v416, %v416
    %v425 = vcombine.high %v303, %v303
    %v427 = vunpack.c.l.s4 1983009808
    %v428 = vunpack.c.0.s8 %v427
    %v429 = vlaneseq
    %v430 = vshrl.u32 %v429, 7
    %v431 = vsub.s32 %v428, %v430
    %v432 = vrot.slane %v303, %v431
    %v434 = vunpack.c.l.s4 1983009808
    %v435 = vunpack.c.0.s8 %v434
    %v436 = vlaneseq
    %v437 = vshrl.u32 %v436, 7
    %v438 = vsub.s32 %v435, %v437
    %v439 = vrot.slane %v425, %v438
    %v440 = vcombine.high %v432, %v432
    %v441 = vcombine.high %v304, %v304
    %v443 = vunpack.c.l.s4 1983009808
    %v444 = vunpack.c.0.s8 %v443
    %v445 = vlaneseq
    %v446 = vshrl.u32 %v445, 7
    %v447 = vsub.s32 %v444, %v446
    %v448 = vrot.slane %v304, %v447
    %v450 = vunpack.c.l.s4 1983009808
    %v451 = vunpack.c.0.s8 %v450
    %v452 = vlaneseq
    %v453 = vshrl.u32 %v452, 7
    %v454 = vsub.s32 %v451, %v453
    %v455 = vrot.slane %v441, %v454
    %v456 = vcombine.high %v448, %v448
    %v457 = vcombine.high %v305, %v305
    %v459 = vunpack.c.l.s4 1983009808
    %v460 = vunpack.c.0.s8 %v459
    %v461 = vlaneseq
    %v462 = vshrl.u32 %v461, 7
    %v463 = vsub.s32 %v460, %v462
    %v464 = vrot.slane %v305, %v463
    %v466 = vunpack.c.l.s4 1983009808
    %v467 = vunpack.c.0.s8 %v466
    %v468 = vlaneseq
    %v469 = vshrl.u32 %v468, 7
    %v470 = vsub.s32 %v467, %v469
    %v471 = vrot.slane %v457, %v470
    %v472 = vcombine.high %v464, %v464
    %v473 = vcombine.high %v306, %v306
    %v475 = vunpack.c.l.s4 1983009808
    %v476 = vunpack.c.0.s8 %v475
    %v477 = vlaneseq
    %v478 = vshrl.u32 %v477, 7
    %v479 = vsub.s32 %v476, %v478
    %v480 = vrot.slane %v306, %v479
    %v482 = vunpack.c.l.s4 1983009808
    %v483 = vunpack.c.0.s8 %v482
    %v484 = vlaneseq
    %v485 = vshrl.u32 %v484, 7
    %v486 = vsub.s32 %v483, %v485
    %v487 = vrot.slane %v473, %v486
    %v488 = vcombine.high %v480, %v480
    %v489 = vcombine.high %v307, %v307
    %v491 = vunpack.c.l.s4 1983009808
    %v492 = vunpack.c.0.s8 %v491
    %v493 = vlaneseq
    %v494 = vshrl.u32 %v493, 7
    %v495 = vsub.s32 %v492, %v494
    %v496 = vrot.slane %v307, %v495
    %v498 = vunpack.c.l.s4 1983009808
    %v499 = vunpack.c.0.s8 %v498
    %v500 = vlaneseq
    %v501 = vshrl.u32 %v500, 7
    %v502 = vsub.s32 %v499, %v501
    %v503 = vrot.slane %v489, %v502
    %v504 = vcombine.high %v496, %v496
    %v505 = vcombine.high %v308, %v308
    %v507 = vunpack.c.l.s4 1983009808
    %v508 = vunpack.c.0.s8 %v507
    %v509 = vlaneseq
    %v510 = vshrl.u32 %v509, 7
    %v511 = vsub.s32 %v508, %v510
    %v512 = vrot.slane %v308, %v511
    %v514 = vunpack.c.l.s4 1983009808
    %v515 = vunpack.c.0.s8 %v514
    %v516 = vlaneseq
    %v517 = vshrl.u32 %v516, 7
    %v518 = vsub.s32 %v515, %v517
    %v519 = vrot.slane %v505, %v518
    %v520 = vcombine.high %v512, %v512
    %v521 = vcombine.high %v309, %v309
    %v523 = vunpack.c.l.s4 1983009808
    %v524 = vunpack.c.0.s8 %v523
    %v525 = vlaneseq
    %v526 = vshrl.u32 %v525, 7
    %v527 = vsub.s32 %v524, %v526
    %v528 = vrot.slane %v309, %v527
    %v530 = vunpack.c.l.s4 1983009808
    %v531 = vunpack.c.0.s8 %v530
    %v532 = vlaneseq
    %v533 = vshrl.u32 %v532, 7
    %v534 = vsub.s32 %v531, %v533
    %v535 = vrot.slane %v521, %v534
    %v536 = vcombine.high %v528, %v528
    %v537 = vcombine.high %v310, %v310
    %v539 = vunpack.c.l.s4 1983009808
    %v540 = vunpack.c.0.s8 %v539
    %v541 = vlaneseq
    %v542 = vshrl.u32 %v541, 7
    %v543 = vsub.s32 %v540, %v542
    %v544 = vrot.slane %v310, %v543
    %v546 = vunpack.c.l.s4 1983009808
    %v547 = vunpack.c.0.s8 %v546
    %v548 = vlaneseq
    %v549 = vshrl.u32 %v548, 7
    %v550 = vsub.s32 %v547, %v549
    %v551 = vrot.slane %v537, %v550
    %v552 = vcombine.high %v544, %v544
    %v553 = vcombine.high %v311, %v311
    %v555 = vunpack.c.l.s4 1983009808
    %v556 = vunpack.c.0.s8 %v555
    %v557 = vlaneseq
    %v558 = vshrl.u32 %v557, 7
    %v559 = vsub.s32 %v556, %v558
    %v560 = vrot.slane %v311, %v559
    %v562 = vunpack.c.l.s4 1983009808
    %v563 = vunpack.c.0.s8 %v562
    %v564 = vlaneseq
    %v565 = vshrl.u32 %v564, 7
    %v566 = vsub.s32 %v563, %v565
    %v567 = vrot.slane %v553, %v566
    %v568 = vcombine.high %v560, %v560
    %v569 = vcombine.high %v312, %v312
    %v571 = vunpack.c.l.s4 1983009808
    %v572 = vunpack.c.0.s8 %v571
    %v573 = vlaneseq
    %v574 = vshrl.u32 %v573, 7
    %v575 = vsub.s32 %v572, %v574
    %v576 = vrot.slane %v312, %v575
    %v578 = vunpack.c.l.s4 1983009808
    %v579 = vunpack.c.0.s8 %v578
    %v580 = vlaneseq
    %v581 = vshrl.u32 %v580, 7
    %v582 = vsub.s32 %v579, %v581
    %v583 = vrot.slane %v569, %v582
    %v584 = vcombine.high %v576, %v576
    %v585 = vld [vmem:[%s1] sm:$0xf]
    %v586 = vld [vmem:[%s1 + $0x4] sm:$0xf]
    %v587 = vld [vmem:[%s1 + $0x8] sm:$0xf]
    %v588 = vld [vmem:[%s1 + $0xc] sm:$0xf]
    %v589 = vld [vmem:[%s1 + $0x10] sm:$0xf]
    %v590 = vld [vmem:[%s1 + $0x14] sm:$0xf]
    %v591 = vld [vmem:[%s1 + $0x18] sm:$0xf]
    %v592 = vld [vmem:[%s1 + $0x1c] sm:$0xf]
    %v593 = vld [vmem:[%s1 + $0x20] sm:$0xf]
    %v594 = vld [vmem:[%s1 + $0x24] sm:$0xf]
    %v595 = vld [vmem:[%s1 + $0x28] sm:$0xf]
    %v596 = vld [vmem:[%s1 + $0x2c] sm:$0xf]
    %v597 = vcombine.low %v336, %v344
    %v598 = vcombine.low %v343, %v352
    %v600 = vunpack.c.l.s4 1983009808
    %v601 = vunpack.c.0.s8 %v600
    %v602 = vlaneseq
    %v603 = vshrl.u32 %v602, 7
    %v604 = vsub.s32 %v601, %v603
    %v605 = vrot.slane %v597, %v604
    %v607 = vunpack.c.l.s4 1983009808
    %v608 = vunpack.c.0.s8 %v607
    %v609 = vlaneseq
    %v610 = vshrl.u32 %v609, 7
    %v611 = vsub.s32 %v608, %v610
    %v612 = vrot.slane %v598, %v611
    %v613 = vcombine.low %v605, %v612
    %v614 = vcombine.low %v360, %v359
    %v615 = vcombine.low %v368, %v376
    %v617 = vunpack.c.l.s4 1983009808
    %v618 = vunpack.c.0.s8 %v617
    %v619 = vlaneseq
    %v620 = vshrl.u32 %v619, 7
    %v621 = vsub.s32 %v618, %v620
    %v622 = vrot.slane %v614, %v621
    %v624 = vunpack.c.l.s4 1983009808
    %v625 = vunpack.c.0.s8 %v624
    %v626 = vlaneseq
    %v627 = vshrl.u32 %v626, 7
    %v628 = vsub.s32 %v625, %v627
    %v629 = vrot.slane %v615, %v628
    %v630 = vcombine.low %v622, %v629
    %v631 = vcombine.low %v375, %v384
    %v632 = vcombine.low %v392, %v391
    %v634 = vunpack.c.l.s4 1983009808
    %v635 = vunpack.c.0.s8 %v634
    %v636 = vlaneseq
    %v637 = vshrl.u32 %v636, 7
    %v638 = vsub.s32 %v635, %v637
    %v639 = vrot.slane %v631, %v638
    %v641 = vunpack.c.l.s4 1983009808
    %v642 = vunpack.c.0.s8 %v641
    %v643 = vlaneseq
    %v644 = vshrl.u32 %v643, 7
    %v645 = vsub.s32 %v642, %v644
    %v646 = vrot.slane %v632, %v645
    %v647 = vcombine.low %v639, %v646
    %v648 = vcombine.low %v400, %v408
    %v649 = vcombine.low %v407, %v416
    %v651 = vunpack.c.l.s4 1983009808
    %v652 = vunpack.c.0.s8 %v651
    %v653 = vlaneseq
    %v654 = vshrl.u32 %v653, 7
    %v655 = vsub.s32 %v652, %v654
    %v656 = vrot.slane %v648, %v655
    %v658 = vunpack.c.l.s4 1983009808
    %v659 = vunpack.c.0.s8 %v658
    %v660 = vlaneseq
    %v661 = vshrl.u32 %v660, 7
    %v662 = vsub.s32 %v659, %v661
    %v663 = vrot.slane %v649, %v662
    %v664 = vcombine.low %v656, %v663
    %v665 = vcombine.low %v424, %v423
    %v666 = vcombine.low %v432, %v440
    %v668 = vunpack.c.l.s4 1983009808
    %v669 = vunpack.c.0.s8 %v668
    %v670 = vlaneseq
    %v671 = vshrl.u32 %v670, 7
    %v672 = vsub.s32 %v669, %v671
    %v673 = vrot.slane %v665, %v672
    %v675 = vunpack.c.l.s4 1983009808
    %v676 = vunpack.c.0.s8 %v675
    %v677 = vlaneseq
    %v678 = vshrl.u32 %v677, 7
    %v679 = vsub.s32 %v676, %v678
    %v680 = vrot.slane %v666, %v679
    %v681 = vcombine.low %v673, %v680
    %v682 = vcombine.low %v439, %v448
    %v683 = vcombine.low %v456, %v455
    %v685 = vunpack.c.l.s4 1983009808
    %v686 = vunpack.c.0.s8 %v685
    %v687 = vlaneseq
    %v688 = vshrl.u32 %v687, 7
    %v689 = vsub.s32 %v686, %v688
    %v690 = vrot.slane %v682, %v689
    %v692 = vunpack.c.l.s4 1983009808
    %v693 = vunpack.c.0.s8 %v692
    %v694 = vlaneseq
    %v695 = vshrl.u32 %v694, 7
    %v696 = vsub.s32 %v693, %v695
    %v697 = vrot.slane %v683, %v696
    %v698 = vcombine.low %v690, %v697
    %v699 = vcombine.low %v464, %v472
    %v700 = vcombine.low %v471, %v480
    %v702 = vunpack.c.l.s4 1983009808
    %v703 = vunpack.c.0.s8 %v702
    %v704 = vlaneseq
    %v705 = vshrl.u32 %v704, 7
    %v706 = vsub.s32 %v703, %v705
    %v707 = vrot.slane %v699, %v706
    %v709 = vunpack.c.l.s4 1983009808
    %v710 = vunpack.c.0.s8 %v709
    %v711 = vlaneseq
    %v712 = vshrl.u32 %v711, 7
    %v713 = vsub.s32 %v710, %v712
    %v714 = vrot.slane %v700, %v713
    %v715 = vcombine.low %v707, %v714
    %v716 = vcombine.low %v488, %v487
    %v717 = vcombine.low %v496, %v504
    %v719 = vunpack.c.l.s4 1983009808
    %v720 = vunpack.c.0.s8 %v719
    %v721 = vlaneseq
    %v722 = vshrl.u32 %v721, 7
    %v723 = vsub.s32 %v720, %v722
    %v724 = vrot.slane %v716, %v723
    %v726 = vunpack.c.l.s4 1983009808
    %v727 = vunpack.c.0.s8 %v726
    %v728 = vlaneseq
    %v729 = vshrl.u32 %v728, 7
    %v730 = vsub.s32 %v727, %v729
    %v731 = vrot.slane %v717, %v730
    %v732 = vcombine.low %v724, %v731
    %v733 = vcombine.low %v503, %v512
    %v734 = vcombine.low %v520, %v519
    %v736 = vunpack.c.l.s4 1983009808
    %v737 = vunpack.c.0.s8 %v736
    %v738 = vlaneseq
    %v739 = vshrl.u32 %v738, 7
    %v740 = vsub.s32 %v737, %v739
    %v741 = vrot.slane %v733, %v740
    %v743 = vunpack.c.l.s4 1983009808
    %v744 = vunpack.c.0.s8 %v743
    %v745 = vlaneseq
    %v746 = vshrl.u32 %v745, 7
    %v747 = vsub.s32 %v744, %v746
    %v748 = vrot.slane %v734, %v747
    %v749 = vcombine.low %v741, %v748
    %v750 = vcombine.low %v528, %v536
    %v751 = vcombine.low %v535, %v544
    %v753 = vunpack.c.l.s4 1983009808
    %v754 = vunpack.c.0.s8 %v753
    %v755 = vlaneseq
    %v756 = vshrl.u32 %v755, 7
    %v757 = vsub.s32 %v754, %v756
    %v758 = vrot.slane %v750, %v757
    %v760 = vunpack.c.l.s4 1983009808
    %v761 = vunpack.c.0.s8 %v760
    %v762 = vlaneseq
    %v763 = vshrl.u32 %v762, 7
    %v764 = vsub.s32 %v761, %v763
    %v765 = vrot.slane %v751, %v764
    %v766 = vcombine.low %v758, %v765
    %v767 = vcombine.low %v552, %v551
    %v768 = vcombine.low %v560, %v568
    %v770 = vunpack.c.l.s4 1983009808
    %v771 = vunpack.c.0.s8 %v770
    %v772 = vlaneseq
    %v773 = vshrl.u32 %v772, 7
    %v774 = vsub.s32 %v771, %v773
    %v775 = vrot.slane %v767, %v774
    %v777 = vunpack.c.l.s4 1983009808
    %v778 = vunpack.c.0.s8 %v777
    %v779 = vlaneseq
    %v780 = vshrl.u32 %v779, 7
    %v781 = vsub.s32 %v778, %v780
    %v782 = vrot.slane %v768, %v781
    %v783 = vcombine.low %v775, %v782
    %v784 = vcombine.low %v567, %v576
    %v785 = vcombine.low %v584, %v583
    %v787 = vunpack.c.l.s4 1983009808
    %v788 = vunpack.c.0.s8 %v787
    %v789 = vlaneseq
    %v790 = vshrl.u32 %v789, 7
    %v791 = vsub.s32 %v788, %v790
    %v792 = vrot.slane %v784, %v791
    %v794 = vunpack.c.l.s4 1983009808
    %v795 = vunpack.c.0.s8 %v794
    %v796 = vlaneseq
    %v797 = vshrl.u32 %v796, 7
    %v798 = vsub.s32 %v795, %v797
    %v799 = vrot.slane %v785, %v798
    %v800 = vcombine.low %v792, %v799
    %v813 = vunpack.c.l.b16 %v585
    %v814 = vunpack.c.l.b16 %v586
    %v815 = vunpack.c.l.b16 %v587
    %v816 = vunpack.c.l.b16 %v588
    %v817 = vunpack.c.l.b16 %v589
    %v818 = vunpack.c.l.b16 %v590
    %v819 = vunpack.c.l.b16 %v591
    %v820 = vunpack.c.l.b16 %v592
    %v821 = vunpack.c.l.b16 %v593
    %v822 = vunpack.c.l.b16 %v594
    %v823 = vunpack.c.l.b16 %v595
    %v824 = vunpack.c.l.b16 %v596
    %v825 = vpack.c.b16 %v814, %v813
    %v826 = vpack.c.b16 %v816, %v815
    %v827 = vpack.c.b16 %v818, %v817
    %v828 = vpack.c.b16 %v820, %v819
    %v829 = vpack.c.b16 %v822, %v821
    %v830 = vpack.c.b16 %v824, %v823
    %vm837 = vcmask 785408
    %v839 = vsel %vm837, %v613, 0
    %v842 = vsel %vm837, %v630, 0
    %v845 = vsel %vm837, %v647, 0
    %v848 = vsel %vm837, %v664, 0
    %v851 = vsel %vm837, %v681, 0
    %v854 = vsel %vm837, %v698, 0
    %v857 = vsel %vm837, %v715, 0
    %v860 = vsel %vm837, %v732, 0
    %v863 = vsel %vm837, %v749, 0
    %v866 = vsel %vm837, %v766, 0
    %v869 = vsel %vm837, %v783, 0
    %v872 = vsel %vm837, %v800, 0
    %874 = vmatprep.subr.bf16.mxu0 0
    %875 = vmatpush1.bf16.msra.mxu0 %v825
    %876 = vmatprep.subr.bf16.mxu0 0
    %877 = vmatpush1.bf16.msra.mxu0 %v826
    %878 = vmatprep.subr.bf16.mxu0 0
    %879 = vmatpush1.bf16.msra.mxu0 %v827
    %880 = vmatprep.subr.bf16.mxu0 0
    %881 = vmatpush1.bf16.msra.mxu0 %v828
    %882 = vmatprep.subr.bf16.mxu0 0
    %883 = vmatpush1.bf16.msra.mxu0 %v829
    %884 = vmatprep.subr.bf16.mxu0 0
    %885 = vmatpush1.bf16.msra.mxu0 %v830
    %886 = vmatprep.subr.bf16.mxu0 0
    %887 = vmatpush1.bf16.msra.mxu0 0
    %888 = vmatprep.subr.bf16.mxu0 0
    %889 = vmatpush1.bf16.msra.mxu0 0
    %890 = vmatprep.subr.bf16.mxu0 0
    %891 = vmatpush1.bf16.msra.mxu0 0
    %892 = vmatprep.subr.bf16.mxu0 0
    %893 = vmatpush1.bf16.msra.mxu0 0
    %894 = vmatprep.subr.bf16.mxu0 0
    %895 = vmatpush1.bf16.msra.mxu0 0
    %896 = vmatprep.subr.bf16.mxu0 0
    %897 = vmatpush1.bf16.msra.mxu0 0
    %898 = vmatprep.subr.bf16.mxu0 0
    %899 = vmatpush1.bf16.msra.mxu0 0
    %900 = vmatprep.subr.bf16.mxu0 0
    %901 = vmatpush1.bf16.msra.mxu0 0
    %902 = vmatprep.subr.bf16.mxu0 0
    %903 = vmatpush1.bf16.msra.mxu0 0
    %904 = vmatprep.subr.bf16.mxu0 0
    %905 = vmatpush1.bf16.msra.mxu0 0
    %906 = vmatprep.mubr.bf16.mxu0 0
    %907 = vmatmul.mubr.bf16.gmra.mrb[0].mxu0 %v839
    %v908 = vpop.f32.mrb[0].mxu0
    %v909 = vadd.f32 0.0, %v908
    %v910 = vpop.f32.mrb[0].mxu0
    %v911 = vpop.f32.mrb[0].mxu0
    %v912 = vadd.f32 0.0, %v911
    %v913 = vpop.f32.mrb[0].mxu0
    %914 = vmatprep.mubr.bf16.mxu0 0
    %915 = vmatmul.mubr.bf16.gmra.mrb[0].mxu0 %v842
    %v916 = vpop.f32.mrb[0].mxu0
    %v917 = vadd.f32 0.0, %v916
    %v918 = vpop.f32.mrb[0].mxu0
    %v919 = vpop.f32.mrb[0].mxu0
    %v920 = vadd.f32 0.0, %v919
    %v921 = vpop.f32.mrb[0].mxu0
    %922 = vmatprep.mubr.bf16.mxu0 0
    %923 = vmatmul.mubr.bf16.gmra.mrb[0].mxu0 %v845
    %v924 = vpop.f32.mrb[0].mxu0
    %v925 = vadd.f32 0.0, %v924
    %v926 = vpop.f32.mrb[0].mxu0
    %v927 = vpop.f32.mrb[0].mxu0
    %v928 = vadd.f32 0.0, %v927
    %v929 = vpop.f32.mrb[0].mxu0
    %930 = vmatprep.mubr.bf16.mxu0 0
    %931 = vmatmul.mubr.bf16.gmra.mrb[0].mxu0 %v848
    %v932 = vpop.f32.mrb[0].mxu0
    %v933 = vadd.f32 0.0, %v932
    %v934 = vpop.f32.mrb[0].mxu0
    %v935 = vpop.f32.mrb[0].mxu0
    %v936 = vadd.f32 0.0, %v935
    %v937 = vpop.f32.mrb[0].mxu0
    %938 = vmatprep.mubr.bf16.mxu0 0
    %939 = vmatmul.mubr.bf16.gmra.mrb[0].mxu0 %v851
    %v940 = vpop.f32.mrb[0].mxu0
    %v941 = vadd.f32 0.0, %v940
    %v942 = vpop.f32.mrb[0].mxu0
    %v943 = vpop.f32.mrb[0].mxu0
    %v944 = vadd.f32 0.0, %v943
    %v945 = vpop.f32.mrb[0].mxu0
    %946 = vmatprep.mubr.bf16.mxu0 0
    %947 = vmatmul.mubr.bf16.gmra.mrb[0].mxu0 %v854
    %v948 = vpop.f32.mrb[0].mxu0
    %v949 = vadd.f32 0.0, %v948
    %v950 = vpop.f32.mrb[0].mxu0
    %v951 = vpop.f32.mrb[0].mxu0
    %v952 = vadd.f32 0.0, %v951
    %v953 = vpop.f32.mrb[0].mxu0
    %954 = vmatprep.mubr.bf16.mxu0 0
    %955 = vmatmul.mubr.bf16.gmra.mrb[0].mxu0 %v857
    %v956 = vpop.f32.mrb[0].mxu0
    %v957 = vadd.f32 0.0, %v956
    %v958 = vpop.f32.mrb[0].mxu0
    %v959 = vpop.f32.mrb[0].mxu0
    %v960 = vadd.f32 0.0, %v959
    %v961 = vpop.f32.mrb[0].mxu0
    %962 = vmatprep.mubr.bf16.mxu0 0
    %963 = vmatmul.mubr.bf16.gmra.mrb[0].mxu0 %v860
    %v964 = vpop.f32.mrb[0].mxu0
    %v965 = vadd.f32 0.0, %v964
    %v966 = vpop.f32.mrb[0].mxu0
    %v967 = vpop.f32.mrb[0].mxu0
    %v968 = vadd.f32 0.0, %v967
    %v969 = vpop.f32.mrb[0].mxu0
    %970 = vmatprep.mubr.bf16.mxu0 0
    %971 = vmatmul.mubr.bf16.gmra.mrb[0].mxu0 %v863
    %v972 = vpop.f32.mrb[0].mxu0
    %v973 = vadd.f32 0.0, %v972
    %v974 = vpop.f32.mrb[0].mxu0
    %v975 = vpop.f32.mrb[0].mxu0
    %v976 = vadd.f32 0.0, %v975
    %v977 = vpop.f32.mrb[0].mxu0
    %978 = vmatprep.mubr.bf16.mxu0 0
    %979 = vmatmul.mubr.bf16.gmra.mrb[0].mxu0 %v866
    %v980 = vpop.f32.mrb[0].mxu0
    %v981 = vadd.f32 0.0, %v980
    %v982 = vpop.f32.mrb[0].mxu0
    %v983 = vpop.f32.mrb[0].mxu0
    %v984 = vadd.f32 0.0, %v983
    %v985 = vpop.f32.mrb[0].mxu0
    %986 = vmatprep.mubr.bf16.mxu0 0
    %987 = vmatmul.mubr.bf16.gmra.mrb[0].mxu0 %v869
    %v988 = vpop.f32.mrb[0].mxu0
    %v989 = vadd.f32 0.0, %v988
    %v990 = vpop.f32.mrb[0].mxu0
    %v991 = vpop.f32.mrb[0].mxu0
    %v992 = vadd.f32 0.0, %v991
    %v993 = vpop.f32.mrb[0].mxu0
    %994 = vmatprep.mubr.bf16.mxu0 0
    %995 = vmatmul.mubr.bf16.gmra.mrb[0].mxu0 %v872
    %v996 = vpop.f32.mrb[0].mxu0
    %v997 = vadd.f32 0.0, %v996
    %v998 = vpop.f32.mrb[0].mxu0
    %v999 = vpop.f32.mrb[0].mxu0
    %v1000 = vadd.f32 0.0, %v999
    %v1001 = vpop.f32.mrb[0].mxu0
    %1002 = vdwg.mxu0
    %v1027 = vcombine.high %v909, %v909
    %v1028 = vcombine.high %v912, %v912
    %v1029 = vcombine.high %v917, %v917
    %v1030 = vcombine.high %v920, %v920
    %v1031 = vcombine.high %v925, %v925
    %v1032 = vcombine.high %v928, %v928
    %v1033 = vcombine.high %v933, %v933
    %v1034 = vcombine.high %v936, %v936
    %v1035 = vcombine.high %v941, %v941
    %v1036 = vcombine.high %v944, %v944
    %v1037 = vcombine.high %v949, %v949
    %v1038 = vcombine.high %v952, %v952
    %v1039 = vcombine.high %v957, %v957
    %v1040 = vcombine.high %v960, %v960
    %v1041 = vcombine.high %v965, %v965
    %v1042 = vcombine.high %v968, %v968
    %v1043 = vcombine.high %v973, %v973
    %v1044 = vcombine.high %v976, %v976
    %v1045 = vcombine.high %v981, %v981
    %v1046 = vcombine.high %v984, %v984
    %v1047 = vcombine.high %v989, %v989
    %v1048 = vcombine.high %v992, %v992
    %v1049 = vcombine.high %v997, %v997
    %v1050 = vcombine.high %v1000, %v1000
    %v1051 = vcombine.low %v909, %v1027
    %v1052 = vcombine.low %v1028, %v917
    %v1053 = vcombine.low %v920, %v1030
    %v1054 = vcombine.low %v1031, %v928
    %v1055 = vcombine.low %v933, %v1033
    %v1056 = vcombine.low %v1034, %v941
    %v1057 = vcombine.low %v944, %v1036
    %v1058 = vcombine.low %v1037, %v952
    %v1059 = vcombine.low %v957, %v1039
    %v1060 = vcombine.low %v1040, %v965
    %v1061 = vcombine.low %v968, %v1042
    %v1062 = vcombine.low %v1043, %v976
    %v1063 = vcombine.low %v981, %v1045
    %v1064 = vcombine.low %v1046, %v989
    %v1065 = vcombine.low %v992, %v1048
    %v1066 = vcombine.low %v1049, %v1000
    %vm1067 = vcmask 1040384
    %v1068 = vrot.slane %v1051, 7
    %v1069 = vrot.slane %v912, 7
    %v1070 = vsel %vm1067, %v1068, %v1069
    %v1071 = vrot.slane %v1052, 7
    %v1072 = vrot.slane %v1029, 7
    %v1073 = vsel %vm1067, %v1071, %v1072
    %v1074 = vrot.slane %v1053, 7
    %v1075 = vrot.slane %v925, 7
    %v1076 = vsel %vm1067, %v1074, %v1075
    %v1077 = vrot.slane %v1054, 7
    %v1078 = vrot.slane %v1032, 7
    %v1079 = vsel %vm1067, %v1077, %v1078
    %v1080 = vrot.slane %v1055, 7
    %v1081 = vrot.slane %v936, 7
    %v1082 = vsel %vm1067, %v1080, %v1081
    %v1083 = vrot.slane %v1056, 7
    %v1084 = vrot.slane %v1035, 7
    %v1085 = vsel %vm1067, %v1083, %v1084
    %v1086 = vrot.slane %v1057, 7
    %v1087 = vrot.slane %v949, 7
    %v1088 = vsel %vm1067, %v1086, %v1087
    %v1089 = vrot.slane %v1058, 7
    %v1090 = vrot.slane %v1038, 7
    %v1091 = vsel %vm1067, %v1089, %v1090
    %v1092 = vrot.slane %v1059, 7
    %v1093 = vrot.slane %v960, 7
    %v1094 = vsel %vm1067, %v1092, %v1093
    %v1095 = vrot.slane %v1060, 7
    %v1096 = vrot.slane %v1041, 7
    %v1097 = vsel %vm1067, %v1095, %v1096
    %v1098 = vrot.slane %v1061, 7
    %v1099 = vrot.slane %v973, 7
    %v1100 = vsel %vm1067, %v1098, %v1099
    %v1101 = vrot.slane %v1062, 7
    %v1102 = vrot.slane %v1044, 7
    %v1103 = vsel %vm1067, %v1101, %v1102
    %v1104 = vrot.slane %v1063, 7
    %v1105 = vrot.slane %v984, 7
    %v1106 = vsel %vm1067, %v1104, %v1105
    %v1107 = vrot.slane %v1064, 7
    %v1108 = vrot.slane %v1047, 7
    %v1109 = vsel %vm1067, %v1107, %v1108
    %v1110 = vrot.slane %v1065, 7
    %v1111 = vrot.slane %v997, 7
    %v1112 = vsel %vm1067, %v1110, %v1111
    %v1113 = vrot.slane %v1066, 7
    %v1114 = vrot.slane %v1050, 7
    %v1115 = vsel %vm1067, %v1113, %v1114
    %v1148 = vsel %vm1067, 0.0, %v1068
    %v1149 = vsel %vm1067, 0.0, %v1071
    %v1150 = vsel %vm1067, 0.0, %v1074
    %v1151 = vsel %vm1067, 0.0, %v1077
    %v1152 = vsel %vm1067, 0.0, %v1080
    %v1153 = vsel %vm1067, 0.0, %v1083
    %v1154 = vsel %vm1067, 0.0, %v1086
    %v1155 = vsel %vm1067, 0.0, %v1089
    %v1156 = vsel %vm1067, 0.0, %v1092
    %v1157 = vsel %vm1067, 0.0, %v1095
    %v1158 = vsel %vm1067, 0.0, %v1098
    %v1159 = vsel %vm1067, 0.0, %v1101
    %v1160 = vsel %vm1067, 0.0, %v1104
    %v1161 = vsel %vm1067, 0.0, %v1107
    %v1162 = vsel %vm1067, 0.0, %v1110
    %v1163 = vsel %vm1067, 0.0, %v1113
    %vm1164 = vcmask 1044480
    %v1165 = vsel %vm1164, %v1070, 0.0
    %v1166 = vsel %vm1164, %v1073, 0.0
    %v1167 = vsel %vm1164, %v1076, 0.0
    %v1168 = vsel %vm1164, %v1079, 0.0
    %v1169 = vsel %vm1164, %v1082, 0.0
    %v1170 = vsel %vm1164, %v1085, 0.0
    %v1171 = vsel %vm1164, %v1088, 0.0
    %v1172 = vsel %vm1164, %v1091, 0.0
    %v1173 = vsel %vm1164, %v1094, 0.0
    %v1174 = vsel %vm1164, %v1097, 0.0
    %v1175 = vsel %vm1164, %v1100, 0.0
    %v1176 = vsel %vm1164, %v1103, 0.0
    %v1177 = vsel %vm1164, %v1106, 0.0
    %v1178 = vsel %vm1164, %v1109, 0.0
    %v1179 = vsel %vm1164, %v1112, 0.0
    %v1180 = vsel %vm1164, %v1115, 0.0
    %v1213 = vcombine.high %v1148, %v1148
    %v1215 = vunpack.c.l.s4 1983009808
    %v1216 = vunpack.c.0.s8 %v1215
    %v1217 = vlaneseq
    %v1218 = vshrl.u32 %v1217, 7
    %v1219 = vsub.s32 %v1216, %v1218
    %v1220 = vrot.slane %v1148, %v1219
    %v1222 = vunpack.c.l.s4 1983009808
    %v1223 = vunpack.c.0.s8 %v1222
    %v1224 = vlaneseq
    %v1225 = vshrl.u32 %v1224, 7
    %v1226 = vsub.s32 %v1223, %v1225
    %v1227 = vrot.slane %v1213, %v1226
    %v1228 = vcombine.high %v1220, %v1220
    %v1229 = vcombine.high %v1227, %v1227
    %v1231 = vunpack.c.l.s4 1983009808
    %v1232 = vunpack.c.0.s8 %v1231
    %v1233 = vlaneseq
    %v1234 = vshrl.u32 %v1233, 7
    %v1235 = vsub.s32 %v1232, %v1234
    %v1236 = vrot.slane %v1165, %v1235
    %v1237 = vcombine.high %v1149, %v1149
    %v1239 = vunpack.c.l.s4 1983009808
    %v1240 = vunpack.c.0.s8 %v1239
    %v1241 = vlaneseq
    %v1242 = vshrl.u32 %v1241, 7
    %v1243 = vsub.s32 %v1240, %v1242
    %v1244 = vrot.slane %v1149, %v1243
    %v1246 = vunpack.c.l.s4 1983009808
    %v1247 = vunpack.c.0.s8 %v1246
    %v1248 = vlaneseq
    %v1249 = vshrl.u32 %v1248, 7
    %v1250 = vsub.s32 %v1247, %v1249
    %v1251 = vrot.slane %v1237, %v1250
    %v1252 = vcombine.high %v1244, %v1244
    %v1253 = vcombine.high %v1251, %v1251
    %v1255 = vunpack.c.l.s4 1983009808
    %v1256 = vunpack.c.0.s8 %v1255
    %v1257 = vlaneseq
    %v1258 = vshrl.u32 %v1257, 7
    %v1259 = vsub.s32 %v1256, %v1258
    %v1260 = vrot.slane %v1166, %v1259
    %v1261 = vcombine.high %v1150, %v1150
    %v1263 = vunpack.c.l.s4 1983009808
    %v1264 = vunpack.c.0.s8 %v1263
    %v1265 = vlaneseq
    %v1266 = vshrl.u32 %v1265, 7
    %v1267 = vsub.s32 %v1264, %v1266
    %v1268 = vrot.slane %v1150, %v1267
    %v1270 = vunpack.c.l.s4 1983009808
    %v1271 = vunpack.c.0.s8 %v1270
    %v1272 = vlaneseq
    %v1273 = vshrl.u32 %v1272, 7
    %v1274 = vsub.s32 %v1271, %v1273
    %v1275 = vrot.slane %v1261, %v1274
    %v1276 = vcombine.high %v1268, %v1268
    %v1277 = vcombine.high %v1275, %v1275
    %v1279 = vunpack.c.l.s4 1983009808
    %v1280 = vunpack.c.0.s8 %v1279
    %v1281 = vlaneseq
    %v1282 = vshrl.u32 %v1281, 7
    %v1283 = vsub.s32 %v1280, %v1282
    %v1284 = vrot.slane %v1167, %v1283
    %v1285 = vcombine.high %v1151, %v1151
    %v1287 = vunpack.c.l.s4 1983009808
    %v1288 = vunpack.c.0.s8 %v1287
    %v1289 = vlaneseq
    %v1290 = vshrl.u32 %v1289, 7
    %v1291 = vsub.s32 %v1288, %v1290
    %v1292 = vrot.slane %v1151, %v1291
    %v1294 = vunpack.c.l.s4 1983009808
    %v1295 = vunpack.c.0.s8 %v1294
    %v1296 = vlaneseq
    %v1297 = vshrl.u32 %v1296, 7
    %v1298 = vsub.s32 %v1295, %v1297
    %v1299 = vrot.slane %v1285, %v1298
    %v1300 = vcombine.high %v1292, %v1292
    %v1301 = vcombine.high %v1299, %v1299
    %v1303 = vunpack.c.l.s4 1983009808
    %v1304 = vunpack.c.0.s8 %v1303
    %v1305 = vlaneseq
    %v1306 = vshrl.u32 %v1305, 7
    %v1307 = vsub.s32 %v1304, %v1306
    %v1308 = vrot.slane %v1168, %v1307
    %v1309 = vcombine.high %v1152, %v1152
    %v1311 = vunpack.c.l.s4 1983009808
    %v1312 = vunpack.c.0.s8 %v1311
    %v1313 = vlaneseq
    %v1314 = vshrl.u32 %v1313, 7
    %v1315 = vsub.s32 %v1312, %v1314
    %v1316 = vrot.slane %v1152, %v1315
    %v1318 = vunpack.c.l.s4 1983009808
    %v1319 = vunpack.c.0.s8 %v1318
    %v1320 = vlaneseq
    %v1321 = vshrl.u32 %v1320, 7
    %v1322 = vsub.s32 %v1319, %v1321
    %v1323 = vrot.slane %v1309, %v1322
    %v1324 = vcombine.high %v1316, %v1316
    %v1325 = vcombine.high %v1323, %v1323
    %v1327 = vunpack.c.l.s4 1983009808
    %v1328 = vunpack.c.0.s8 %v1327
    %v1329 = vlaneseq
    %v1330 = vshrl.u32 %v1329, 7
    %v1331 = vsub.s32 %v1328, %v1330
    %v1332 = vrot.slane %v1169, %v1331
    %v1333 = vcombine.high %v1153, %v1153
    %v1335 = vunpack.c.l.s4 1983009808
    %v1336 = vunpack.c.0.s8 %v1335
    %v1337 = vlaneseq
    %v1338 = vshrl.u32 %v1337, 7
    %v1339 = vsub.s32 %v1336, %v1338
    %v1340 = vrot.slane %v1153, %v1339
    %v1342 = vunpack.c.l.s4 1983009808
    %v1343 = vunpack.c.0.s8 %v1342
    %v1344 = vlaneseq
    %v1345 = vshrl.u32 %v1344, 7
    %v1346 = vsub.s32 %v1343, %v1345
    %v1347 = vrot.slane %v1333, %v1346
    %v1348 = vcombine.high %v1340, %v1340
    %v1349 = vcombine.high %v1347, %v1347
    %v1351 = vunpack.c.l.s4 1983009808
    %v1352 = vunpack.c.0.s8 %v1351
    %v1353 = vlaneseq
    %v1354 = vshrl.u32 %v1353, 7
    %v1355 = vsub.s32 %v1352, %v1354
    %v1356 = vrot.slane %v1170, %v1355
    %v1357 = vcombine.high %v1154, %v1154
    %v1359 = vunpack.c.l.s4 1983009808
    %v1360 = vunpack.c.0.s8 %v1359
    %v1361 = vlaneseq
    %v1362 = vshrl.u32 %v1361, 7
    %v1363 = vsub.s32 %v1360, %v1362
    %v1364 = vrot.slane %v1154, %v1363
    %v1366 = vunpack.c.l.s4 1983009808
    %v1367 = vunpack.c.0.s8 %v1366
    %v1368 = vlaneseq
    %v1369 = vshrl.u32 %v1368, 7
    %v1370 = vsub.s32 %v1367, %v1369
    %v1371 = vrot.slane %v1357, %v1370
    %v1372 = vcombine.high %v1364, %v1364
    %v1373 = vcombine.high %v1371, %v1371
    %v1375 = vunpack.c.l.s4 1983009808
    %v1376 = vunpack.c.0.s8 %v1375
    %v1377 = vlaneseq
    %v1378 = vshrl.u32 %v1377, 7
    %v1379 = vsub.s32 %v1376, %v1378
    %v1380 = vrot.slane %v1171, %v1379
    %v1381 = vcombine.high %v1155, %v1155
    %v1383 = vunpack.c.l.s4 1983009808
    %v1384 = vunpack.c.0.s8 %v1383
    %v1385 = vlaneseq
    %v1386 = vshrl.u32 %v1385, 7
    %v1387 = vsub.s32 %v1384, %v1386
    %v1388 = vrot.slane %v1155, %v1387
    %v1390 = vunpack.c.l.s4 1983009808
    %v1391 = vunpack.c.0.s8 %v1390
    %v1392 = vlaneseq
    %v1393 = vshrl.u32 %v1392, 7
    %v1394 = vsub.s32 %v1391, %v1393
    %v1395 = vrot.slane %v1381, %v1394
    %v1396 = vcombine.high %v1388, %v1388
    %v1397 = vcombine.high %v1395, %v1395
    %v1399 = vunpack.c.l.s4 1983009808
    %v1400 = vunpack.c.0.s8 %v1399
    %v1401 = vlaneseq
    %v1402 = vshrl.u32 %v1401, 7
    %v1403 = vsub.s32 %v1400, %v1402
    %v1404 = vrot.slane %v1172, %v1403
    %v1405 = vcombine.high %v1156, %v1156
    %v1407 = vunpack.c.l.s4 1983009808
    %v1408 = vunpack.c.0.s8 %v1407
    %v1409 = vlaneseq
    %v1410 = vshrl.u32 %v1409, 7
    %v1411 = vsub.s32 %v1408, %v1410
    %v1412 = vrot.slane %v1156, %v1411
    %v1414 = vunpack.c.l.s4 1983009808
    %v1415 = vunpack.c.0.s8 %v1414
    %v1416 = vlaneseq
    %v1417 = vshrl.u32 %v1416, 7
    %v1418 = vsub.s32 %v1415, %v1417
    %v1419 = vrot.slane %v1405, %v1418
    %v1420 = vcombine.high %v1412, %v1412
    %v1421 = vcombine.high %v1419, %v1419
    %v1423 = vunpack.c.l.s4 1983009808
    %v1424 = vunpack.c.0.s8 %v1423
    %v1425 = vlaneseq
    %v1426 = vshrl.u32 %v1425, 7
    %v1427 = vsub.s32 %v1424, %v1426
    %v1428 = vrot.slane %v1173, %v1427
    %v1429 = vcombine.high %v1157, %v1157
    %v1431 = vunpack.c.l.s4 1983009808
    %v1432 = vunpack.c.0.s8 %v1431
    %v1433 = vlaneseq
    %v1434 = vshrl.u32 %v1433, 7
    %v1435 = vsub.s32 %v1432, %v1434
    %v1436 = vrot.slane %v1157, %v1435
    %v1438 = vunpack.c.l.s4 1983009808
    %v1439 = vunpack.c.0.s8 %v1438
    %v1440 = vlaneseq
    %v1441 = vshrl.u32 %v1440, 7
    %v1442 = vsub.s32 %v1439, %v1441
    %v1443 = vrot.slane %v1429, %v1442
    %v1444 = vcombine.high %v1436, %v1436
    %v1445 = vcombine.high %v1443, %v1443
    %v1447 = vunpack.c.l.s4 1983009808
    %v1448 = vunpack.c.0.s8 %v1447
    %v1449 = vlaneseq
    %v1450 = vshrl.u32 %v1449, 7
    %v1451 = vsub.s32 %v1448, %v1450
    %v1452 = vrot.slane %v1174, %v1451
    %v1453 = vcombine.high %v1158, %v1158
    %v1455 = vunpack.c.l.s4 1983009808
    %v1456 = vunpack.c.0.s8 %v1455
    %v1457 = vlaneseq
    %v1458 = vshrl.u32 %v1457, 7
    %v1459 = vsub.s32 %v1456, %v1458
    %v1460 = vrot.slane %v1158, %v1459
    %v1462 = vunpack.c.l.s4 1983009808
    %v1463 = vunpack.c.0.s8 %v1462
    %v1464 = vlaneseq
    %v1465 = vshrl.u32 %v1464, 7
    %v1466 = vsub.s32 %v1463, %v1465
    %v1467 = vrot.slane %v1453, %v1466
    %v1468 = vcombine.high %v1460, %v1460
    %v1469 = vcombine.high %v1467, %v1467
    %v1471 = vunpack.c.l.s4 1983009808
    %v1472 = vunpack.c.0.s8 %v1471
    %v1473 = vlaneseq
    %v1474 = vshrl.u32 %v1473, 7
    %v1475 = vsub.s32 %v1472, %v1474
    %v1476 = vrot.slane %v1175, %v1475
    %v1477 = vcombine.high %v1159, %v1159
    %v1479 = vunpack.c.l.s4 1983009808
    %v1480 = vunpack.c.0.s8 %v1479
    %v1481 = vlaneseq
    %v1482 = vshrl.u32 %v1481, 7
    %v1483 = vsub.s32 %v1480, %v1482
    %v1484 = vrot.slane %v1159, %v1483
    %v1486 = vunpack.c.l.s4 1983009808
    %v1487 = vunpack.c.0.s8 %v1486
    %v1488 = vlaneseq
    %v1489 = vshrl.u32 %v1488, 7
    %v1490 = vsub.s32 %v1487, %v1489
    %v1491 = vrot.slane %v1477, %v1490
    %v1492 = vcombine.high %v1484, %v1484
    %v1493 = vcombine.high %v1491, %v1491
    %v1495 = vunpack.c.l.s4 1983009808
    %v1496 = vunpack.c.0.s8 %v1495
    %v1497 = vlaneseq
    %v1498 = vshrl.u32 %v1497, 7
    %v1499 = vsub.s32 %v1496, %v1498
    %v1500 = vrot.slane %v1176, %v1499
    %v1501 = vcombine.high %v1160, %v1160
    %v1503 = vunpack.c.l.s4 1983009808
    %v1504 = vunpack.c.0.s8 %v1503
    %v1505 = vlaneseq
    %v1506 = vshrl.u32 %v1505, 7
    %v1507 = vsub.s32 %v1504, %v1506
    %v1508 = vrot.slane %v1160, %v1507
    %v1510 = vunpack.c.l.s4 1983009808
    %v1511 = vunpack.c.0.s8 %v1510
    %v1512 = vlaneseq
    %v1513 = vshrl.u32 %v1512, 7
    %v1514 = vsub.s32 %v1511, %v1513
    %v1515 = vrot.slane %v1501, %v1514
    %v1516 = vcombine.high %v1508, %v1508
    %v1517 = vcombine.high %v1515, %v1515
    %v1519 = vunpack.c.l.s4 1983009808
    %v1520 = vunpack.c.0.s8 %v1519
    %v1521 = vlaneseq
    %v1522 = vshrl.u32 %v1521, 7
    %v1523 = vsub.s32 %v1520, %v1522
    %v1524 = vrot.slane %v1177, %v1523
    %v1525 = vcombine.high %v1161, %v1161
    %v1527 = vunpack.c.l.s4 1983009808
    %v1528 = vunpack.c.0.s8 %v1527
    %v1529 = vlaneseq
    %v1530 = vshrl.u32 %v1529, 7
    %v1531 = vsub.s32 %v1528, %v1530
    %v1532 = vrot.slane %v1161, %v1531
    %v1534 = vunpack.c.l.s4 1983009808
    %v1535 = vunpack.c.0.s8 %v1534
    %v1536 = vlaneseq
    %v1537 = vshrl.u32 %v1536, 7
    %v1538 = vsub.s32 %v1535, %v1537
    %v1539 = vrot.slane %v1525, %v1538
    %v1540 = vcombine.high %v1532, %v1532
    %v1541 = vcombine.high %v1539, %v1539
    %v1543 = vunpack.c.l.s4 1983009808
    %v1544 = vunpack.c.0.s8 %v1543
    %v1545 = vlaneseq
    %v1546 = vshrl.u32 %v1545, 7
    %v1547 = vsub.s32 %v1544, %v1546
    %v1548 = vrot.slane %v1178, %v1547
    %v1549 = vcombine.high %v1162, %v1162
    %v1551 = vunpack.c.l.s4 1983009808
    %v1552 = vunpack.c.0.s8 %v1551
    %v1553 = vlaneseq
    %v1554 = vshrl.u32 %v1553, 7
    %v1555 = vsub.s32 %v1552, %v1554
    %v1556 = vrot.slane %v1162, %v1555
    %v1558 = vunpack.c.l.s4 1983009808
    %v1559 = vunpack.c.0.s8 %v1558
    %v1560 = vlaneseq
    %v1561 = vshrl.u32 %v1560, 7
    %v1562 = vsub.s32 %v1559, %v1561
    %v1563 = vrot.slane %v1549, %v1562
    %v1564 = vcombine.high %v1556, %v1556
    %v1565 = vcombine.high %v1563, %v1563
    %v1567 = vunpack.c.l.s4 1983009808
    %v1568 = vunpack.c.0.s8 %v1567
    %v1569 = vlaneseq
    %v1570 = vshrl.u32 %v1569, 7
    %v1571 = vsub.s32 %v1568, %v1570
    %v1572 = vrot.slane %v1179, %v1571
    %v1573 = vcombine.high %v1163, %v1163
    %v1575 = vunpack.c.l.s4 1983009808
    %v1576 = vunpack.c.0.s8 %v1575
    %v1577 = vlaneseq
    %v1578 = vshrl.u32 %v1577, 7
    %v1579 = vsub.s32 %v1576, %v1578
    %v1580 = vrot.slane %v1163, %v1579
    %v1582 = vunpack.c.l.s4 1983009808
    %v1583 = vunpack.c.0.s8 %v1582
    %v1584 = vlaneseq
    %v1585 = vshrl.u32 %v1584, 7
    %v1586 = vsub.s32 %v1583, %v1585
    %v1587 = vrot.slane %v1573, %v1586
    %v1588 = vcombine.high %v1580, %v1580
    %v1589 = vcombine.high %v1587, %v1587
    %v1591 = vunpack.c.l.s4 1983009808
    %v1592 = vunpack.c.0.s8 %v1591
    %v1593 = vlaneseq
    %v1594 = vshrl.u32 %v1593, 7
    %v1595 = vsub.s32 %v1592, %v1594
    %v1596 = vrot.slane %v1180, %v1595
    %v1597 = vcombine.low %v1220, %v1228
    %v1598 = vcombine.low %v1227, %v1229
    %v1600 = vunpack.c.l.s4 1983009808
    %v1601 = vunpack.c.0.s8 %v1600
    %v1602 = vlaneseq
    %v1603 = vshrl.u32 %v1602, 7
    %v1604 = vsub.s32 %v1601, %v1603
    %v1605 = vrot.slane %v1597, %v1604
    %v1607 = vunpack.c.l.s4 1983009808
    %v1608 = vunpack.c.0.s8 %v1607
    %v1609 = vlaneseq
    %v1610 = vshrl.u32 %v1609, 7
    %v1611 = vsub.s32 %v1608, %v1610
    %v1612 = vrot.slane %v1598, %v1611
    %v1613 = vcombine.low %v1605, %v1612
    %v1614 = vcombine.low %v1236, %v1244
    %v1615 = vcombine.low %v1252, %v1251
    %v1617 = vunpack.c.l.s4 1983009808
    %v1618 = vunpack.c.0.s8 %v1617
    %v1619 = vlaneseq
    %v1620 = vshrl.u32 %v1619, 7
    %v1621 = vsub.s32 %v1618, %v1620
    %v1622 = vrot.slane %v1614, %v1621
    %v1624 = vunpack.c.l.s4 1983009808
    %v1625 = vunpack.c.0.s8 %v1624
    %v1626 = vlaneseq
    %v1627 = vshrl.u32 %v1626, 7
    %v1628 = vsub.s32 %v1625, %v1627
    %v1629 = vrot.slane %v1615, %v1628
    %v1630 = vcombine.low %v1622, %v1629
    %v1631 = vcombine.low %v1253, %v1260
    %v1632 = vcombine.low %v1268, %v1276
    %v1634 = vunpack.c.l.s4 1983009808
    %v1635 = vunpack.c.0.s8 %v1634
    %v1636 = vlaneseq
    %v1637 = vshrl.u32 %v1636, 7
    %v1638 = vsub.s32 %v1635, %v1637
    %v1639 = vrot.slane %v1631, %v1638
    %v1641 = vunpack.c.l.s4 1983009808
    %v1642 = vunpack.c.0.s8 %v1641
    %v1643 = vlaneseq
    %v1644 = vshrl.u32 %v1643, 7
    %v1645 = vsub.s32 %v1642, %v1644
    %v1646 = vrot.slane %v1632, %v1645
    %v1647 = vcombine.low %v1639, %v1646
    %v1648 = vcombine.low %v1275, %v1277
    %v1649 = vcombine.low %v1284, %v1292
    %v1651 = vunpack.c.l.s4 1983009808
    %v1652 = vunpack.c.0.s8 %v1651
    %v1653 = vlaneseq
    %v1654 = vshrl.u32 %v1653, 7
    %v1655 = vsub.s32 %v1652, %v1654
    %v1656 = vrot.slane %v1648, %v1655
    %v1658 = vunpack.c.l.s4 1983009808
    %v1659 = vunpack.c.0.s8 %v1658
    %v1660 = vlaneseq
    %v1661 = vshrl.u32 %v1660, 7
    %v1662 = vsub.s32 %v1659, %v1661
    %v1663 = vrot.slane %v1649, %v1662
    %v1664 = vcombine.low %v1656, %v1663
    %v1665 = vcombine.low %v1300, %v1299
    %v1666 = vcombine.low %v1301, %v1308
    %v1668 = vunpack.c.l.s4 1983009808
    %v1669 = vunpack.c.0.s8 %v1668
    %v1670 = vlaneseq
    %v1671 = vshrl.u32 %v1670, 7
    %v1672 = vsub.s32 %v1669, %v1671
    %v1673 = vrot.slane %v1665, %v1672
    %v1675 = vunpack.c.l.s4 1983009808
    %v1676 = vunpack.c.0.s8 %v1675
    %v1677 = vlaneseq
    %v1678 = vshrl.u32 %v1677, 7
    %v1679 = vsub.s32 %v1676, %v1678
    %v1680 = vrot.slane %v1666, %v1679
    %v1681 = vcombine.low %v1673, %v1680
    %v1682 = vcombine.low %v1316, %v1324
    %v1683 = vcombine.low %v1323, %v1325
    %v1685 = vunpack.c.l.s4 1983009808
    %v1686 = vunpack.c.0.s8 %v1685
    %v1687 = vlaneseq
    %v1688 = vshrl.u32 %v1687, 7
    %v1689 = vsub.s32 %v1686, %v1688
    %v1690 = vrot.slane %v1682, %v1689
    %v1692 = vunpack.c.l.s4 1983009808
    %v1693 = vunpack.c.0.s8 %v1692
    %v1694 = vlaneseq
    %v1695 = vshrl.u32 %v1694, 7
    %v1696 = vsub.s32 %v1693, %v1695
    %v1697 = vrot.slane %v1683, %v1696
    %v1698 = vcombine.low %v1690, %v1697
    %v1699 = vcombine.low %v1332, %v1340
    %v1700 = vcombine.low %v1348, %v1347
    %v1702 = vunpack.c.l.s4 1983009808
    %v1703 = vunpack.c.0.s8 %v1702
    %v1704 = vlaneseq
    %v1705 = vshrl.u32 %v1704, 7
    %v1706 = vsub.s32 %v1703, %v1705
    %v1707 = vrot.slane %v1699, %v1706
    %v1709 = vunpack.c.l.s4 1983009808
    %v1710 = vunpack.c.0.s8 %v1709
    %v1711 = vlaneseq
    %v1712 = vshrl.u32 %v1711, 7
    %v1713 = vsub.s32 %v1710, %v1712
    %v1714 = vrot.slane %v1700, %v1713
    %v1715 = vcombine.low %v1707, %v1714
    %v1716 = vcombine.low %v1349, %v1356
    %v1717 = vcombine.low %v1364, %v1372
    %v1719 = vunpack.c.l.s4 1983009808
    %v1720 = vunpack.c.0.s8 %v1719
    %v1721 = vlaneseq
    %v1722 = vshrl.u32 %v1721, 7
    %v1723 = vsub.s32 %v1720, %v1722
    %v1724 = vrot.slane %v1716, %v1723
    %v1726 = vunpack.c.l.s4 1983009808
    %v1727 = vunpack.c.0.s8 %v1726
    %v1728 = vlaneseq
    %v1729 = vshrl.u32 %v1728, 7
    %v1730 = vsub.s32 %v1727, %v1729
    %v1731 = vrot.slane %v1717, %v1730
    %v1732 = vcombine.low %v1724, %v1731
    %v1733 = vcombine.low %v1371, %v1373
    %v1734 = vcombine.low %v1380, %v1388
    %v1736 = vunpack.c.l.s4 1983009808
    %v1737 = vunpack.c.0.s8 %v1736
    %v1738 = vlaneseq
    %v1739 = vshrl.u32 %v1738, 7
    %v1740 = vsub.s32 %v1737, %v1739
    %v1741 = vrot.slane %v1733, %v1740
    %v1743 = vunpack.c.l.s4 1983009808
    %v1744 = vunpack.c.0.s8 %v1743
    %v1745 = vlaneseq
    %v1746 = vshrl.u32 %v1745, 7
    %v1747 = vsub.s32 %v1744, %v1746
    %v1748 = vrot.slane %v1734, %v1747
    %v1749 = vcombine.low %v1741, %v1748
    %v1750 = vcombine.low %v1396, %v1395
    %v1751 = vcombine.low %v1397, %v1404
    %v1753 = vunpack.c.l.s4 1983009808
    %v1754 = vunpack.c.0.s8 %v1753
    %v1755 = vlaneseq
    %v1756 = vshrl.u32 %v1755, 7
    %v1757 = vsub.s32 %v1754, %v1756
    %v1758 = vrot.slane %v1750, %v1757
    %v1760 = vunpack.c.l.s4 1983009808
    %v1761 = vunpack.c.0.s8 %v1760
    %v1762 = vlaneseq
    %v1763 = vshrl.u32 %v1762, 7
    %v1764 = vsub.s32 %v1761, %v1763
    %v1765 = vrot.slane %v1751, %v1764
    %v1766 = vcombine.low %v1758, %v1765
    %v1767 = vcombine.low %v1412, %v1420
    %v1768 = vcombine.low %v1419, %v1421
    %v1770 = vunpack.c.l.s4 1983009808
    %v1771 = vunpack.c.0.s8 %v1770
    %v1772 = vlaneseq
    %v1773 = vshrl.u32 %v1772, 7
    %v1774 = vsub.s32 %v1771, %v1773
    %v1775 = vrot.slane %v1767, %v1774
    %v1777 = vunpack.c.l.s4 1983009808
    %v1778 = vunpack.c.0.s8 %v1777
    %v1779 = vlaneseq
    %v1780 = vshrl.u32 %v1779, 7
    %v1781 = vsub.s32 %v1778, %v1780
    %v1782 = vrot.slane %v1768, %v1781
    %v1783 = vcombine.low %v1775, %v1782
    %v1784 = vcombine.low %v1428, %v1436
    %v1785 = vcombine.low %v1444, %v1443
    %v1787 = vunpack.c.l.s4 1983009808
    %v1788 = vunpack.c.0.s8 %v1787
    %v1789 = vlaneseq
    %v1790 = vshrl.u32 %v1789, 7
    %v1791 = vsub.s32 %v1788, %v1790
    %v1792 = vrot.slane %v1784, %v1791
    %v1794 = vunpack.c.l.s4 1983009808
    %v1795 = vunpack.c.0.s8 %v1794
    %v1796 = vlaneseq
    %v1797 = vshrl.u32 %v1796, 7
    %v1798 = vsub.s32 %v1795, %v1797
    %v1799 = vrot.slane %v1785, %v1798
    %v1800 = vcombine.low %v1792, %v1799
    %v1801 = vcombine.low %v1445, %v1452
    %v1802 = vcombine.low %v1460, %v1468
    %v1804 = vunpack.c.l.s4 1983009808
    %v1805 = vunpack.c.0.s8 %v1804
    %v1806 = vlaneseq
    %v1807 = vshrl.u32 %v1806, 7
    %v1808 = vsub.s32 %v1805, %v1807
    %v1809 = vrot.slane %v1801, %v1808
    %v1811 = vunpack.c.l.s4 1983009808
    %v1812 = vunpack.c.0.s8 %v1811
    %v1813 = vlaneseq
    %v1814 = vshrl.u32 %v1813, 7
    %v1815 = vsub.s32 %v1812, %v1814
    %v1816 = vrot.slane %v1802, %v1815
    %v1817 = vcombine.low %v1809, %v1816
    %v1818 = vcombine.low %v1467, %v1469
    %v1819 = vcombine.low %v1476, %v1484
    %v1821 = vunpack.c.l.s4 1983009808
    %v1822 = vunpack.c.0.s8 %v1821
    %v1823 = vlaneseq
    %v1824 = vshrl.u32 %v1823, 7
    %v1825 = vsub.s32 %v1822, %v1824
    %v1826 = vrot.slane %v1818, %v1825
    %v1828 = vunpack.c.l.s4 1983009808
    %v1829 = vunpack.c.0.s8 %v1828
    %v1830 = vlaneseq
    %v1831 = vshrl.u32 %v1830, 7
    %v1832 = vsub.s32 %v1829, %v1831
    %v1833 = vrot.slane %v1819, %v1832
    %v1834 = vcombine.low %v1826, %v1833
    %v1835 = vcombine.low %v1492, %v1491
    %v1836 = vcombine.low %v1493, %v1500
    %v1838 = vunpack.c.l.s4 1983009808
    %v1839 = vunpack.c.0.s8 %v1838
    %v1840 = vlaneseq
    %v1841 = vshrl.u32 %v1840, 7
    %v1842 = vsub.s32 %v1839, %v1841
    %v1843 = vrot.slane %v1835, %v1842
    %v1845 = vunpack.c.l.s4 1983009808
    %v1846 = vunpack.c.0.s8 %v1845
    %v1847 = vlaneseq
    %v1848 = vshrl.u32 %v1847, 7
    %v1849 = vsub.s32 %v1846, %v1848
    %v1850 = vrot.slane %v1836, %v1849
    %v1851 = vcombine.low %v1843, %v1850
    %v1852 = vcombine.low %v1508, %v1516
    %v1853 = vcombine.low %v1515, %v1517
    %v1855 = vunpack.c.l.s4 1983009808
    %v1856 = vunpack.c.0.s8 %v1855
    %v1857 = vlaneseq
    %v1858 = vshrl.u32 %v1857, 7
    %v1859 = vsub.s32 %v1856, %v1858
    %v1860 = vrot.slane %v1852, %v1859
    %v1862 = vunpack.c.l.s4 1983009808
    %v1863 = vunpack.c.0.s8 %v1862
    %v1864 = vlaneseq
    %v1865 = vshrl.u32 %v1864, 7
    %v1866 = vsub.s32 %v1863, %v1865
    %v1867 = vrot.slane %v1853, %v1866
    %v1868 = vcombine.low %v1860, %v1867
    %v1869 = vcombine.low %v1524, %v1532
    %v1870 = vcombine.low %v1540, %v1539
    %v1872 = vunpack.c.l.s4 1983009808
    %v1873 = vunpack.c.0.s8 %v1872
    %v1874 = vlaneseq
    %v1875 = vshrl.u32 %v1874, 7
    %v1876 = vsub.s32 %v1873, %v1875
    %v1877 = vrot.slane %v1869, %v1876
    %v1879 = vunpack.c.l.s4 1983009808
    %v1880 = vunpack.c.0.s8 %v1879
    %v1881 = vlaneseq
    %v1882 = vshrl.u32 %v1881, 7
    %v1883 = vsub.s32 %v1880, %v1882
    %v1884 = vrot.slane %v1870, %v1883
    %v1885 = vcombine.low %v1877, %v1884
    %v1886 = vcombine.low %v1541, %v1548
    %v1887 = vcombine.low %v1556, %v1564
    %v1889 = vunpack.c.l.s4 1983009808
    %v1890 = vunpack.c.0.s8 %v1889
    %v1891 = vlaneseq
    %v1892 = vshrl.u32 %v1891, 7
    %v1893 = vsub.s32 %v1890, %v1892
    %v1894 = vrot.slane %v1886, %v1893
    %v1896 = vunpack.c.l.s4 1983009808
    %v1897 = vunpack.c.0.s8 %v1896
    %v1898 = vlaneseq
    %v1899 = vshrl.u32 %v1898, 7
    %v1900 = vsub.s32 %v1897, %v1899
    %v1901 = vrot.slane %v1887, %v1900
    %v1902 = vcombine.low %v1894, %v1901
    %v1903 = vcombine.low %v1563, %v1565
    %v1904 = vcombine.low %v1572, %v1580
    %v1906 = vunpack.c.l.s4 1983009808
    %v1907 = vunpack.c.0.s8 %v1906
    %v1908 = vlaneseq
    %v1909 = vshrl.u32 %v1908, 7
    %v1910 = vsub.s32 %v1907, %v1909
    %v1911 = vrot.slane %v1903, %v1910
    %v1913 = vunpack.c.l.s4 1983009808
    %v1914 = vunpack.c.0.s8 %v1913
    %v1915 = vlaneseq
    %v1916 = vshrl.u32 %v1915, 7
    %v1917 = vsub.s32 %v1914, %v1916
    %v1918 = vrot.slane %v1904, %v1917
    %v1919 = vcombine.low %v1911, %v1918
    %v1920 = vcombine.low %v1588, %v1587
    %v1921 = vcombine.low %v1589, %v1596
    %v1923 = vunpack.c.l.s4 1983009808
    %v1924 = vunpack.c.0.s8 %v1923
    %v1925 = vlaneseq
    %v1926 = vshrl.u32 %v1925, 7
    %v1927 = vsub.s32 %v1924, %v1926
    %v1928 = vrot.slane %v1920, %v1927
    %v1930 = vunpack.c.l.s4 1983009808
    %v1931 = vunpack.c.0.s8 %v1930
    %v1932 = vlaneseq
    %v1933 = vshrl.u32 %v1932, 7
    %v1934 = vsub.s32 %v1931, %v1933
    %v1935 = vrot.slane %v1921, %v1934
    %v1936 = vcombine.low %v1928, %v1935
    %v1957 = vpack.c.bf16 %v1630, %v1613
    %v1958 = vpack.c.bf16 %v1664, %v1647
    %v1959 = vpack.c.bf16 %v1698, %v1681
    %v1960 = vpack.c.bf16 %v1732, %v1715
    %v1961 = vpack.c.bf16 %v1766, %v1749
    %v1962 = vpack.c.bf16 %v1800, %v1783
    %v1963 = vpack.c.bf16 %v1834, %v1817
    %v1964 = vpack.c.bf16 %v1868, %v1851
    %v1965 = vpack.c.bf16 %v1902, %v1885
    %v1966 = vpack.c.bf16 %v1936, %v1919
    %v1967 = vld [vmem:[#allocation2] sm:$0xf]
    %v1968 = vld [vmem:[#allocation2 + $0x4] sm:$0xf]
    %v1969 = vld [vmem:[#allocation2 + $0x8] sm:$0xf]
    %v1970 = vld [vmem:[#allocation2 + $0xc] sm:$0xf]
    %v1971 = vld [vmem:[#allocation2 + $0x10] sm:$0xf]
    %v1972 = vld [vmem:[#allocation2 + $0x14] sm:$0xf]
    %v1973 = vld [vmem:[#allocation2 + $0x18] sm:$0xf]
    %v1974 = vld [vmem:[#allocation2 + $0x1c] sm:$0xf]
    %v1975 = vcombine.high %v1236, %v1236
    %v1976 = vcombine.high %v1260, %v1260
    %v1977 = vcombine.high %v1284, %v1284
    %v1978 = vcombine.high %v1308, %v1308
    %v1979 = vcombine.high %v1332, %v1332
    %v1980 = vcombine.high %v1356, %v1356
    %v1981 = vcombine.high %v1380, %v1380
    %v1982 = vcombine.high %v1404, %v1404
    %v1983 = vcombine.high %v1428, %v1428
    %v1984 = vcombine.high %v1452, %v1452
    %v1985 = vcombine.high %v1476, %v1476
    %v1986 = vcombine.high %v1500, %v1500
    %v1987 = vcombine.high %v1524, %v1524
    %v1988 = vcombine.high %v1548, %v1548
    %v1989 = vcombine.high %v1572, %v1572
    %v1990 = vcombine.high %v1596, %v1596
    %vm1991 = vcmask 1042434
    %vm1992 = vmor %vm1067, %vm1991
    %vm1993 = vcmask 1044484
    %vm1994 = vmor %vm1992, %vm1993
    %vm1995 = vcmask 1046534
    %vm1996 = vmor %vm1994, %vm1995
    %v1997 = vrot.slane %v1220, 7
    %v1998 = vrot.slane %v1997, 2
    %v1999 = vrot.slane %v1228, 7
    %v2000 = vsel %vm1996, %v1998, %v1999
    %v2001 = vrot.slane %v1999, 2
    %v2002 = vrot.slane %v1227, 7
    %v2003 = vsel %vm1996, %v2001, %v2002
    %v2004 = vrot.slane %v2002, 2
    %v2005 = vrot.slane %v1229, 7
    %v2006 = vsel %vm1996, %v2004, %v2005
    %v2007 = vrot.slane %v2005, 2
    %v2008 = vrot.slane %v1236, 7
    %v2009 = vsel %vm1996, %v2007, %v2008
    %v2010 = vrot.slane %v2008, 2
    %v2011 = vrot.slane %v1975, 7
    %v2012 = vsel %vm1996, %v2010, %v2011
    %v2013 = vrot.slane %v1244, 7
    %v2014 = vrot.slane %v2013, 2
    %v2015 = vrot.slane %v1252, 7
    %v2016 = vsel %vm1996, %v2014, %v2015
    %v2017 = vrot.slane %v2015, 2
    %v2018 = vrot.slane %v1251, 7
    %v2019 = vsel %vm1996, %v2017, %v2018
    %v2020 = vrot.slane %v2018, 2
    %v2021 = vrot.slane %v1253, 7
    %v2022 = vsel %vm1996, %v2020, %v2021
    %v2023 = vrot.slane %v2021, 2
    %v2024 = vrot.slane %v1260, 7
    %v2025 = vsel %vm1996, %v2023, %v2024
    %v2026 = vrot.slane %v2024, 2
    %v2027 = vrot.slane %v1976, 7
    %v2028 = vsel %vm1996, %v2026, %v2027
    %v2029 = vrot.slane %v1268, 7
    %v2030 = vrot.slane %v2029, 2
    %v2031 = vrot.slane %v1276, 7
    %v2032 = vsel %vm1996, %v2030, %v2031
    %v2033 = vrot.slane %v2031, 2
    %v2034 = vrot.slane %v1275, 7
    %v2035 = vsel %vm1996, %v2033, %v2034
    %v2036 = vrot.slane %v2034, 2
    %v2037 = vrot.slane %v1277, 7
    %v2038 = vsel %vm1996, %v2036, %v2037
    %v2039 = vrot.slane %v2037, 2
    %v2040 = vrot.slane %v1284, 7
    %v2041 = vsel %vm1996, %v2039, %v2040
    %v2042 = vrot.slane %v2040, 2
    %v2043 = vrot.slane %v1977, 7
    %v2044 = vsel %vm1996, %v2042, %v2043
    %v2045 = vrot.slane %v1292, 7
    %v2046 = vrot.slane %v2045, 2
    %v2047 = vrot.slane %v1300, 7
    %v2048 = vsel %vm1996, %v2046, %v2047
    %v2049 = vrot.slane %v2047, 2
    %v2050 = vrot.slane %v1299, 7
    %v2051 = vsel %vm1996, %v2049, %v2050
    %v2052 = vrot.slane %v2050, 2
    %v2053 = vrot.slane %v1301, 7
    %v2054 = vsel %vm1996, %v2052, %v2053
    %v2055 = vrot.slane %v2053, 2
    %v2056 = vrot.slane %v1308, 7
    %v2057 = vsel %vm1996, %v2055, %v2056
    %v2058 = vrot.slane %v2056, 2
    %v2059 = vrot.slane %v1978, 7
    %v2060 = vsel %vm1996, %v2058, %v2059
    %v2061 = vrot.slane %v1316, 7
    %v2062 = vrot.slane %v2061, 2
    %v2063 = vrot.slane %v1324, 7
    %v2064 = vsel %vm1996, %v2062, %v2063
    %v2065 = vrot.slane %v2063, 2
    %v2066 = vrot.slane %v1323, 7
    %v2067 = vsel %vm1996, %v2065, %v2066
    %v2068 = vrot.slane %v2066, 2
    %v2069 = vrot.slane %v1325, 7
    %v2070 = vsel %vm1996, %v2068, %v2069
    %v2071 = vrot.slane %v2069, 2
    %v2072 = vrot.slane %v1332, 7
    %v2073 = vsel %vm1996, %v2071, %v2072
    %v2074 = vrot.slane %v2072, 2
    %v2075 = vrot.slane %v1979, 7
    %v2076 = vsel %vm1996, %v2074, %v2075
    %v2077 = vrot.slane %v1340, 7
    %v2078 = vrot.slane %v2077, 2
    %v2079 = vrot.slane %v1348, 7
    %v2080 = vsel %vm1996, %v2078, %v2079
    %v2081 = vrot.slane %v2079, 2
    %v2082 = vrot.slane %v1347, 7
    %v2083 = vsel %vm1996, %v2081, %v2082
    %v2084 = vrot.slane %v2082, 2
    %v2085 = vrot.slane %v1349, 7
    %v2086 = vsel %vm1996, %v2084, %v2085
    %v2087 = vrot.slane %v2085, 2
    %v2088 = vrot.slane %v1356, 7
    %v2089 = vsel %vm1996, %v2087, %v2088
    %v2090 = vrot.slane %v2088, 2
    %v2091 = vrot.slane %v1980, 7
    %v2092 = vsel %vm1996, %v2090, %v2091
    %v2093 = vrot.slane %v1364, 7
    %v2094 = vrot.slane %v2093, 2
    %v2095 = vrot.slane %v1372, 7
    %v2096 = vsel %vm1996, %v2094, %v2095
    %v2097 = vrot.slane %v2095, 2
    %v2098 = vrot.slane %v1371, 7
    %v2099 = vsel %vm1996, %v2097, %v2098
    %v2100 = vrot.slane %v2098, 2
    %v2101 = vrot.slane %v1373, 7
    %v2102 = vsel %vm1996, %v2100, %v2101
    %v2103 = vrot.slane %v2101, 2
    %v2104 = vrot.slane %v1380, 7
    %v2105 = vsel %vm1996, %v2103, %v2104
    %v2106 = vrot.slane %v2104, 2
    %v2107 = vrot.slane %v1981, 7
    %v2108 = vsel %vm1996, %v2106, %v2107
    %v2109 = vrot.slane %v1388, 7
    %v2110 = vrot.slane %v2109, 2
    %v2111 = vrot.slane %v1396, 7
    %v2112 = vsel %vm1996, %v2110, %v2111
    %v2113 = vrot.slane %v2111, 2
    %v2114 = vrot.slane %v1395, 7
    %v2115 = vsel %vm1996, %v2113, %v2114
    %v2116 = vrot.slane %v2114, 2
    %v2117 = vrot.slane %v1397, 7
    %v2118 = vsel %vm1996, %v2116, %v2117
    %v2119 = vrot.slane %v2117, 2
    %v2120 = vrot.slane %v1404, 7
    %v2121 = vsel %vm1996, %v2119, %v2120
    %v2122 = vrot.slane %v2120, 2
    %v2123 = vrot.slane %v1982, 7
    %v2124 = vsel %vm1996, %v2122, %v2123
    %v2125 = vrot.slane %v1412, 7
    %v2126 = vrot.slane %v2125, 2
    %v2127 = vrot.slane %v1420, 7
    %v2128 = vsel %vm1996, %v2126, %v2127
    %v2129 = vrot.slane %v2127, 2
    %v2130 = vrot.slane %v1419, 7
    %v2131 = vsel %vm1996, %v2129, %v2130
    %v2132 = vrot.slane %v2130, 2
    %v2133 = vrot.slane %v1421, 7
    %v2134 = vsel %vm1996, %v2132, %v2133
    %v2135 = vrot.slane %v2133, 2
    %v2136 = vrot.slane %v1428, 7
    %v2137 = vsel %vm1996, %v2135, %v2136
    %v2138 = vrot.slane %v2136, 2
    %v2139 = vrot.slane %v1983, 7
    %v2140 = vsel %vm1996, %v2138, %v2139
    %v2141 = vrot.slane %v1436, 7
    %v2142 = vrot.slane %v2141, 2
    %v2143 = vrot.slane %v1444, 7
    %v2144 = vsel %vm1996, %v2142, %v2143
    %v2145 = vrot.slane %v2143, 2
    %v2146 = vrot.slane %v1443, 7
    %v2147 = vsel %vm1996, %v2145, %v2146
    %v2148 = vrot.slane %v2146, 2
    %v2149 = vrot.slane %v1445, 7
    %v2150 = vsel %vm1996, %v2148, %v2149
    %v2151 = vrot.slane %v2149, 2
    %v2152 = vrot.slane %v1452, 7
    %v2153 = vsel %vm1996, %v2151, %v2152
    %v2154 = vrot.slane %v2152, 2
    %v2155 = vrot.slane %v1984, 7
    %v2156 = vsel %vm1996, %v2154, %v2155
    %v2157 = vrot.slane %v1460, 7
    %v2158 = vrot.slane %v2157, 2
    %v2159 = vrot.slane %v1468, 7
    %v2160 = vsel %vm1996, %v2158, %v2159
    %v2161 = vrot.slane %v2159, 2
    %v2162 = vrot.slane %v1467, 7
    %v2163 = vsel %vm1996, %v2161, %v2162
    %v2164 = vrot.slane %v2162, 2
    %v2165 = vrot.slane %v1469, 7
    %v2166 = vsel %vm1996, %v2164, %v2165
    %v2167 = vrot.slane %v2165, 2
    %v2168 = vrot.slane %v1476, 7
    %v2169 = vsel %vm1996, %v2167, %v2168
    %v2170 = vrot.slane %v2168, 2
    %v2171 = vrot.slane %v1985, 7
    %v2172 = vsel %vm1996, %v2170, %v2171
    %v2173 = vrot.slane %v1484, 7
    %v2174 = vrot.slane %v2173, 2
    %v2175 = vrot.slane %v1492, 7
    %v2176 = vsel %vm1996, %v2174, %v2175
    %v2177 = vrot.slane %v2175, 2
    %v2178 = vrot.slane %v1491, 7
    %v2179 = vsel %vm1996, %v2177, %v2178
    %v2180 = vrot.slane %v2178, 2
    %v2181 = vrot.slane %v1493, 7
    %v2182 = vsel %vm1996, %v2180, %v2181
    %v2183 = vrot.slane %v2181, 2
    %v2184 = vrot.slane %v1500, 7
    %v2185 = vsel %vm1996, %v2183, %v2184
    %v2186 = vrot.slane %v2184, 2
    %v2187 = vrot.slane %v1986, 7
    %v2188 = vsel %vm1996, %v2186, %v2187
    %v2189 = vrot.slane %v1508, 7
    %v2190 = vrot.slane %v2189, 2
    %v2191 = vrot.slane %v1516, 7
    %v2192 = vsel %vm1996, %v2190, %v2191
    %v2193 = vrot.slane %v2191, 2
    %v2194 = vrot.slane %v1515, 7
    %v2195 = vsel %vm1996, %v2193, %v2194
    %v2196 = vrot.slane %v2194, 2
    %v2197 = vrot.slane %v1517, 7
    %v2198 = vsel %vm1996, %v2196, %v2197
    %v2199 = vrot.slane %v2197, 2
    %v2200 = vrot.slane %v1524, 7
    %v2201 = vsel %vm1996, %v2199, %v2200
    %v2202 = vrot.slane %v2200, 2
    %v2203 = vrot.slane %v1987, 7
    %v2204 = vsel %vm1996, %v2202, %v2203
    %v2205 = vrot.slane %v1532, 7
    %v2206 = vrot.slane %v2205, 2
    %v2207 = vrot.slane %v1540, 7
    %v2208 = vsel %vm1996, %v2206, %v2207
    %v2209 = vrot.slane %v2207, 2
    %v2210 = vrot.slane %v1539, 7
    %v2211 = vsel %vm1996, %v2209, %v2210
    %v2212 = vrot.slane %v2210, 2
    %v2213 = vrot.slane %v1541, 7
    %v2214 = vsel %vm1996, %v2212, %v2213
    %v2215 = vrot.slane %v2213, 2
    %v2216 = vrot.slane %v1548, 7
    %v2217 = vsel %vm1996, %v2215, %v2216
    %v2218 = vrot.slane %v2216, 2
    %v2219 = vrot.slane %v1988, 7
    %v2220 = vsel %vm1996, %v2218, %v2219
    %v2221 = vrot.slane %v1556, 7
    %v2222 = vrot.slane %v2221, 2
    %v2223 = vrot.slane %v1564, 7
    %v2224 = vsel %vm1996, %v2222, %v2223
    %v2225 = vrot.slane %v2223, 2
    %v2226 = vrot.slane %v1563, 7
    %v2227 = vsel %vm1996, %v2225, %v2226
    %v2228 = vrot.slane %v2226, 2
    %v2229 = vrot.slane %v1565, 7
    %v2230 = vsel %vm1996, %v2228, %v2229
    %v2231 = vrot.slane %v2229, 2
    %v2232 = vrot.slane %v1572, 7
    %v2233 = vsel %vm1996, %v2231, %v2232
    %v2234 = vrot.slane %v2232, 2
    %v2235 = vrot.slane %v1989, 7
    %v2236 = vsel %vm1996, %v2234, %v2235
    %v2237 = vrot.slane %v1580, 7
    %v2238 = vrot.slane %v2237, 2
    %v2239 = vrot.slane %v1588, 7
    %v2240 = vsel %vm1996, %v2238, %v2239
    %v2241 = vrot.slane %v2239, 2
    %v2242 = vrot.slane %v1587, 7
    %v2243 = vsel %vm1996, %v2241, %v2242
    %v2244 = vrot.slane %v2242, 2
    %v2245 = vrot.slane %v1589, 7
    %v2246 = vsel %vm1996, %v2244, %v2245
    %v2247 = vrot.slane %v2245, 2
    %v2248 = vrot.slane %v1596, 7
    %v2249 = vsel %vm1996, %v2247, %v2248
    %v2250 = vrot.slane %v2248, 2
    %v2251 = vrot.slane %v1990, 7
    %v2252 = vsel %vm1996, %v2250, %v2251
    %v2253 = vcombine.low %v2000, %v2003
    %v2254 = vcombine.low %v2006, %v2009
    %v2256 = vunpack.c.l.s4 1983009808
    %v2257 = vunpack.c.0.s8 %v2256
    %v2258 = vlaneseq
    %v2259 = vshrl.u32 %v2258, 7
    %v2260 = vsub.s32 %v2257, %v2259
    %v2261 = vrot.slane %v2253, %v2260
    %v2263 = vunpack.c.l.s4 1983009808
    %v2264 = vunpack.c.0.s8 %v2263
    %v2265 = vlaneseq
    %v2266 = vshrl.u32 %v2265, 7
    %v2267 = vsub.s32 %v2264, %v2266
    %v2268 = vrot.slane %v2254, %v2267
    %v2269 = vcombine.low %v2261, %v2268
    %v2270 = vcombine.low %v2012, %v2016
    %v2271 = vcombine.low %v2019, %v2022
    %v2273 = vunpack.c.l.s4 1983009808
    %v2274 = vunpack.c.0.s8 %v2273
    %v2275 = vlaneseq
    %v2276 = vshrl.u32 %v2275, 7
    %v2277 = vsub.s32 %v2274, %v2276
    %v2278 = vrot.slane %v2270, %v2277
    %v2280 = vunpack.c.l.s4 1983009808
    %v2281 = vunpack.c.0.s8 %v2280
    %v2282 = vlaneseq
    %v2283 = vshrl.u32 %v2282, 7
    %v2284 = vsub.s32 %v2281, %v2283
    %v2285 = vrot.slane %v2271, %v2284
    %v2286 = vcombine.low %v2278, %v2285
    %v2287 = vcombine.low %v2025, %v2028
    %v2288 = vcombine.low %v2032, %v2035
    %v2290 = vunpack.c.l.s4 1983009808
    %v2291 = vunpack.c.0.s8 %v2290
    %v2292 = vlaneseq
    %v2293 = vshrl.u32 %v2292, 7
    %v2294 = vsub.s32 %v2291, %v2293
    %v2295 = vrot.slane %v2287, %v2294
    %v2297 = vunpack.c.l.s4 1983009808
    %v2298 = vunpack.c.0.s8 %v2297
    %v2299 = vlaneseq
    %v2300 = vshrl.u32 %v2299, 7
    %v2301 = vsub.s32 %v2298, %v2300
    %v2302 = vrot.slane %v2288, %v2301
    %v2303 = vcombine.low %v2295, %v2302
    %v2304 = vcombine.low %v2038, %v2041
    %v2305 = vcombine.low %v2044, %v2048
    %v2307 = vunpack.c.l.s4 1983009808
    %v2308 = vunpack.c.0.s8 %v2307
    %v2309 = vlaneseq
    %v2310 = vshrl.u32 %v2309, 7
    %v2311 = vsub.s32 %v2308, %v2310
    %v2312 = vrot.slane %v2304, %v2311
    %v2314 = vunpack.c.l.s4 1983009808
    %v2315 = vunpack.c.0.s8 %v2314
    %v2316 = vlaneseq
    %v2317 = vshrl.u32 %v2316, 7
    %v2318 = vsub.s32 %v2315, %v2317
    %v2319 = vrot.slane %v2305, %v2318
    %v2320 = vcombine.low %v2312, %v2319
    %v2321 = vcombine.low %v2051, %v2054
    %v2322 = vcombine.low %v2057, %v2060
    %v2324 = vunpack.c.l.s4 1983009808
    %v2325 = vunpack.c.0.s8 %v2324
    %v2326 = vlaneseq
    %v2327 = vshrl.u32 %v2326, 7
    %v2328 = vsub.s32 %v2325, %v2327
    %v2329 = vrot.slane %v2321, %v2328
    %v2331 = vunpack.c.l.s4 1983009808
    %v2332 = vunpack.c.0.s8 %v2331
    %v2333 = vlaneseq
    %v2334 = vshrl.u32 %v2333, 7
    %v2335 = vsub.s32 %v2332, %v2334
    %v2336 = vrot.slane %v2322, %v2335
    %v2337 = vcombine.low %v2329, %v2336
    %v2338 = vcombine.low %v2064, %v2067
    %v2339 = vcombine.low %v2070, %v2073
    %v2341 = vunpack.c.l.s4 1983009808
    %v2342 = vunpack.c.0.s8 %v2341
    %v2343 = vlaneseq
    %v2344 = vshrl.u32 %v2343, 7
    %v2345 = vsub.s32 %v2342, %v2344
    %v2346 = vrot.slane %v2338, %v2345
    %v2348 = vunpack.c.l.s4 1983009808
    %v2349 = vunpack.c.0.s8 %v2348
    %v2350 = vlaneseq
    %v2351 = vshrl.u32 %v2350, 7
    %v2352 = vsub.s32 %v2349, %v2351
    %v2353 = vrot.slane %v2339, %v2352
    %v2354 = vcombine.low %v2346, %v2353
    %v2355 = vcombine.low %v2076, %v2080
    %v2356 = vcombine.low %v2083, %v2086
    %v2358 = vunpack.c.l.s4 1983009808
    %v2359 = vunpack.c.0.s8 %v2358
    %v2360 = vlaneseq
    %v2361 = vshrl.u32 %v2360, 7
    %v2362 = vsub.s32 %v2359, %v2361
    %v2363 = vrot.slane %v2355, %v2362
    %v2365 = vunpack.c.l.s4 1983009808
    %v2366 = vunpack.c.0.s8 %v2365
    %v2367 = vlaneseq
    %v2368 = vshrl.u32 %v2367, 7
    %v2369 = vsub.s32 %v2366, %v2368
    %v2370 = vrot.slane %v2356, %v2369
    %v2371 = vcombine.low %v2363, %v2370
    %v2372 = vcombine.low %v2089, %v2092
    %v2373 = vcombine.low %v2096, %v2099
    %v2375 = vunpack.c.l.s4 1983009808
    %v2376 = vunpack.c.0.s8 %v2375
    %v2377 = vlaneseq
    %v2378 = vshrl.u32 %v2377, 7
    %v2379 = vsub.s32 %v2376, %v2378
    %v2380 = vrot.slane %v2372, %v2379
    %v2382 = vunpack.c.l.s4 1983009808
    %v2383 = vunpack.c.0.s8 %v2382
    %v2384 = vlaneseq
    %v2385 = vshrl.u32 %v2384, 7
    %v2386 = vsub.s32 %v2383, %v2385
    %v2387 = vrot.slane %v2373, %v2386
    %v2388 = vcombine.low %v2380, %v2387
    %v2389 = vcombine.low %v2102, %v2105
    %v2390 = vcombine.low %v2108, %v2112
    %v2392 = vunpack.c.l.s4 1983009808
    %v2393 = vunpack.c.0.s8 %v2392
    %v2394 = vlaneseq
    %v2395 = vshrl.u32 %v2394, 7
    %v2396 = vsub.s32 %v2393, %v2395
    %v2397 = vrot.slane %v2389, %v2396
    %v2399 = vunpack.c.l.s4 1983009808
    %v2400 = vunpack.c.0.s8 %v2399
    %v2401 = vlaneseq
    %v2402 = vshrl.u32 %v2401, 7
    %v2403 = vsub.s32 %v2400, %v2402
    %v2404 = vrot.slane %v2390, %v2403
    %v2405 = vcombine.low %v2397, %v2404
    %v2406 = vcombine.low %v2115, %v2118
    %v2407 = vcombine.low %v2121, %v2124
    %v2409 = vunpack.c.l.s4 1983009808
    %v2410 = vunpack.c.0.s8 %v2409
    %v2411 = vlaneseq
    %v2412 = vshrl.u32 %v2411, 7
    %v2413 = vsub.s32 %v2410, %v2412
    %v2414 = vrot.slane %v2406, %v2413
    %v2416 = vunpack.c.l.s4 1983009808
    %v2417 = vunpack.c.0.s8 %v2416
    %v2418 = vlaneseq
    %v2419 = vshrl.u32 %v2418, 7
    %v2420 = vsub.s32 %v2417, %v2419
    %v2421 = vrot.slane %v2407, %v2420
    %v2422 = vcombine.low %v2414, %v2421
    %v2423 = vcombine.low %v2128, %v2131
    %v2424 = vcombine.low %v2134, %v2137
    %v2426 = vunpack.c.l.s4 1983009808
    %v2427 = vunpack.c.0.s8 %v2426
    %v2428 = vlaneseq
    %v2429 = vshrl.u32 %v2428, 7
    %v2430 = vsub.s32 %v2427, %v2429
    %v2431 = vrot.slane %v2423, %v2430
    %v2433 = vunpack.c.l.s4 1983009808
    %v2434 = vunpack.c.0.s8 %v2433
    %v2435 = vlaneseq
    %v2436 = vshrl.u32 %v2435, 7
    %v2437 = vsub.s32 %v2434, %v2436
    %v2438 = vrot.slane %v2424, %v2437
    %v2439 = vcombine.low %v2431, %v2438
    %v2440 = vcombine.low %v2140, %v2144
    %v2441 = vcombine.low %v2147, %v2150
    %v2443 = vunpack.c.l.s4 1983009808
    %v2444 = vunpack.c.0.s8 %v2443
    %v2445 = vlaneseq
    %v2446 = vshrl.u32 %v2445, 7
    %v2447 = vsub.s32 %v2444, %v2446
    %v2448 = vrot.slane %v2440, %v2447
    %v2450 = vunpack.c.l.s4 1983009808
    %v2451 = vunpack.c.0.s8 %v2450
    %v2452 = vlaneseq
    %v2453 = vshrl.u32 %v2452, 7
    %v2454 = vsub.s32 %v2451, %v2453
    %v2455 = vrot.slane %v2441, %v2454
    %v2456 = vcombine.low %v2448, %v2455
    %v2457 = vcombine.low %v2153, %v2156
    %v2458 = vcombine.low %v2160, %v2163
    %v2460 = vunpack.c.l.s4 1983009808
    %v2461 = vunpack.c.0.s8 %v2460
    %v2462 = vlaneseq
    %v2463 = vshrl.u32 %v2462, 7
    %v2464 = vsub.s32 %v2461, %v2463
    %v2465 = vrot.slane %v2457, %v2464
    %v2467 = vunpack.c.l.s4 1983009808
    %v2468 = vunpack.c.0.s8 %v2467
    %v2469 = vlaneseq
    %v2470 = vshrl.u32 %v2469, 7
    %v2471 = vsub.s32 %v2468, %v2470
    %v2472 = vrot.slane %v2458, %v2471
    %v2473 = vcombine.low %v2465, %v2472
    %v2474 = vcombine.low %v2166, %v2169
    %v2475 = vcombine.low %v2172, %v2176
    %v2477 = vunpack.c.l.s4 1983009808
    %v2478 = vunpack.c.0.s8 %v2477
    %v2479 = vlaneseq
    %v2480 = vshrl.u32 %v2479, 7
    %v2481 = vsub.s32 %v2478, %v2480
    %v2482 = vrot.slane %v2474, %v2481
    %v2484 = vunpack.c.l.s4 1983009808
    %v2485 = vunpack.c.0.s8 %v2484
    %v2486 = vlaneseq
    %v2487 = vshrl.u32 %v2486, 7
    %v2488 = vsub.s32 %v2485, %v2487
    %v2489 = vrot.slane %v2475, %v2488
    %v2490 = vcombine.low %v2482, %v2489
    %v2491 = vcombine.low %v2179, %v2182
    %v2492 = vcombine.low %v2185, %v2188
    %v2494 = vunpack.c.l.s4 1983009808
    %v2495 = vunpack.c.0.s8 %v2494
    %v2496 = vlaneseq
    %v2497 = vshrl.u32 %v2496, 7
    %v2498 = vsub.s32 %v2495, %v2497
    %v2499 = vrot.slane %v2491, %v2498
    %v2501 = vunpack.c.l.s4 1983009808
    %v2502 = vunpack.c.0.s8 %v2501
    %v2503 = vlaneseq
    %v2504 = vshrl.u32 %v2503, 7
    %v2505 = vsub.s32 %v2502, %v2504
    %v2506 = vrot.slane %v2492, %v2505
    %v2507 = vcombine.low %v2499, %v2506
    %v2508 = vcombine.low %v2192, %v2195
    %v2509 = vcombine.low %v2198, %v2201
    %v2511 = vunpack.c.l.s4 1983009808
    %v2512 = vunpack.c.0.s8 %v2511
    %v2513 = vlaneseq
    %v2514 = vshrl.u32 %v2513, 7
    %v2515 = vsub.s32 %v2512, %v2514
    %v2516 = vrot.slane %v2508, %v2515
    %v2518 = vunpack.c.l.s4 1983009808
    %v2519 = vunpack.c.0.s8 %v2518
    %v2520 = vlaneseq
    %v2521 = vshrl.u32 %v2520, 7
    %v2522 = vsub.s32 %v2519, %v2521
    %v2523 = vrot.slane %v2509, %v2522
    %v2524 = vcombine.low %v2516, %v2523
    %v2525 = vcombine.low %v2204, %v2208
    %v2526 = vcombine.low %v2211, %v2214
    %v2528 = vunpack.c.l.s4 1983009808
    %v2529 = vunpack.c.0.s8 %v2528
    %v2530 = vlaneseq
    %v2531 = vshrl.u32 %v2530, 7
    %v2532 = vsub.s32 %v2529, %v2531
    %v2533 = vrot.slane %v2525, %v2532
    %v2535 = vunpack.c.l.s4 1983009808
    %v2536 = vunpack.c.0.s8 %v2535
    %v2537 = vlaneseq
    %v2538 = vshrl.u32 %v2537, 7
    %v2539 = vsub.s32 %v2536, %v2538
    %v2540 = vrot.slane %v2526, %v2539
    %v2541 = vcombine.low %v2533, %v2540
    %v2542 = vcombine.low %v2217, %v2220
    %v2543 = vcombine.low %v2224, %v2227
    %v2545 = vunpack.c.l.s4 1983009808
    %v2546 = vunpack.c.0.s8 %v2545
    %v2547 = vlaneseq
    %v2548 = vshrl.u32 %v2547, 7
    %v2549 = vsub.s32 %v2546, %v2548
    %v2550 = vrot.slane %v2542, %v2549
    %v2552 = vunpack.c.l.s4 1983009808
    %v2553 = vunpack.c.0.s8 %v2552
    %v2554 = vlaneseq
    %v2555 = vshrl.u32 %v2554, 7
    %v2556 = vsub.s32 %v2553, %v2555
    %v2557 = vrot.slane %v2543, %v2556
    %v2558 = vcombine.low %v2550, %v2557
    %v2559 = vcombine.low %v2230, %v2233
    %v2560 = vcombine.low %v2236, %v2240
    %v2562 = vunpack.c.l.s4 1983009808
    %v2563 = vunpack.c.0.s8 %v2562
    %v2564 = vlaneseq
    %v2565 = vshrl.u32 %v2564, 7
    %v2566 = vsub.s32 %v2563, %v2565
    %v2567 = vrot.slane %v2559, %v2566
    %v2569 = vunpack.c.l.s4 1983009808
    %v2570 = vunpack.c.0.s8 %v2569
    %v2571 = vlaneseq
    %v2572 = vshrl.u32 %v2571, 7
    %v2573 = vsub.s32 %v2570, %v2572
    %v2574 = vrot.slane %v2560, %v2573
    %v2575 = vcombine.low %v2567, %v2574
    %v2576 = vcombine.low %v2243, %v2246
    %v2577 = vcombine.low %v2249, %v2252
    %v2579 = vunpack.c.l.s4 1983009808
    %v2580 = vunpack.c.0.s8 %v2579
    %v2581 = vlaneseq
    %v2582 = vshrl.u32 %v2581, 7
    %v2583 = vsub.s32 %v2580, %v2582
    %v2584 = vrot.slane %v2576, %v2583
    %v2586 = vunpack.c.l.s4 1983009808
    %v2587 = vunpack.c.0.s8 %v2586
    %v2588 = vlaneseq
    %v2589 = vshrl.u32 %v2588, 7
    %v2590 = vsub.s32 %v2587, %v2589
    %v2591 = vrot.slane %v2577, %v2590
    %v2592 = vcombine.low %v2584, %v2591
    %v2613 = vpack.c.bf16 %v2286, %v2269
    %v2614 = vpack.c.bf16 %v2320, %v2303
    %v2615 = vpack.c.bf16 %v2354, %v2337
    %v2616 = vpack.c.bf16 %v2388, %v2371
    %v2617 = vpack.c.bf16 %v2422, %v2405
    %v2618 = vpack.c.bf16 %v2456, %v2439
    %v2619 = vpack.c.bf16 %v2490, %v2473
    %v2620 = vpack.c.bf16 %v2524, %v2507
    %v2621 = vpack.c.bf16 %v2558, %v2541
    %v2622 = vpack.c.bf16 %v2592, %v2575
    %s2623 = scalar_lea.vmem [#allocation2], 32
    %v2624 = vld [vmem:[%s2623] sm:$0xf]
    %v2625 = vld [vmem:[%s2623 + $0x4] sm:$0xf]
    %v2626 = vld [vmem:[%s2623 + $0x8] sm:$0xf]
    %v2627 = vld [vmem:[%s2623 + $0xc] sm:$0xf]
    %v2628 = vld [vmem:[%s2623 + $0x10] sm:$0xf]
    %v2629 = vld [vmem:[%s2623 + $0x14] sm:$0xf]
    %v2630 = vld [vmem:[%s2623 + $0x18] sm:$0xf]
    %v2631 = vld [vmem:[%s2623 + $0x1c] sm:$0xf]
    %v2640 = vunpack.c.l.b16 %v2624
    %v2641 = vunpack.c.l.b16 %v2625
    %v2642 = vunpack.c.l.b16 %v2626
    %v2643 = vunpack.c.l.b16 %v2627
    %v2644 = vunpack.c.l.b16 %v2628
    %v2645 = vunpack.c.l.b16 %v2629
    %v2646 = vunpack.c.l.b16 %v2630
    %v2647 = vunpack.c.l.b16 %v2631
    %v2648 = vpack.c.b16 %v2641, %v2640
    %v2649 = vpack.c.b16 %v2643, %v2642
    %v2650 = vpack.c.b16 %v2645, %v2644
    %v2651 = vpack.c.b16 %v2647, %v2646
    %vm2656 = vcmask 523264
    %v2658 = vsel %vm2656, %v2613, 0
    %v2661 = vsel %vm2656, %v2614, 0
    %v2664 = vsel %vm2656, %v2615, 0
    %v2667 = vsel %vm2656, %v2616, 0
    %v2670 = vsel %vm2656, %v2617, 0
    %v2673 = vsel %vm2656, %v2618, 0
    %v2676 = vsel %vm2656, %v2619, 0
    %v2679 = vsel %vm2656, %v2620, 0
    %v2682 = vsel %vm2656, %v2621, 0
    %v2685 = vsel %vm2656, %v2622, 0
    %2687 = vmatprep.subr.bf16.mxu0 0
    %2688 = vmatpush1.bf16.msra.mxu0 %v2648
    %2689 = vmatprep.subr.bf16.mxu0 0
    %2690 = vmatpush1.bf16.msra.mxu0 %v2649
    %2691 = vmatprep.subr.bf16.mxu0 0
    %2692 = vmatpush1.bf16.msra.mxu0 %v2650
    %2693 = vmatprep.subr.bf16.mxu0 0
    %2694 = vmatpush1.bf16.msra.mxu0 %v2651
    %2695 = vmatprep.subr.bf16.mxu0 0
    %2696 = vmatpush1.bf16.msra.mxu0 0
    %2697 = vmatprep.subr.bf16.mxu0 0
    %2698 = vmatpush1.bf16.msra.mxu0 0
    %2699 = vmatprep.subr.bf16.mxu0 0
    %2700 = vmatpush1.bf16.msra.mxu0 0
    %2701 = vmatprep.subr.bf16.mxu0 0
    %2702 = vmatpush1.bf16.msra.mxu0 0
    %2703 = vmatprep.subr.bf16.mxu0 0
    %2704 = vmatpush1.bf16.msra.mxu0 0
    %2705 = vmatprep.subr.bf16.mxu0 0
    %2706 = vmatpush1.bf16.msra.mxu0 0
    %2707 = vmatprep.subr.bf16.mxu0 0
    %2708 = vmatpush1.bf16.msra.mxu0 0
    %2709 = vmatprep.subr.bf16.mxu0 0
    %2710 = vmatpush1.bf16.msra.mxu0 0
    %2711 = vmatprep.subr.bf16.mxu0 0
    %2712 = vmatpush1.bf16.msra.mxu0 0
    %2713 = vmatprep.subr.bf16.mxu0 0
    %2714 = vmatpush1.bf16.msra.mxu0 0
    %2715 = vmatprep.subr.bf16.mxu0 0
    %2716 = vmatpush1.bf16.msra.mxu0 0
    %2717 = vmatprep.subr.bf16.mxu0 0
    %2718 = vmatpush1.bf16.msra.mxu0 0
    %2719 = vmatprep.mubr.bf16.mxu0 0
    %2720 = vmatmul.mubr.bf16.gmra.mrb[0].mxu0 %v2658
    %v2721 = vpop.f32.mrb[0].mxu0
    %v2722 = vadd.f32 0.0, %v2721
    %v2723 = vpop.f32.mrb[0].mxu0
    %v2724 = vpop.f32.mrb[0].mxu0
    %v2725 = vadd.f32 0.0, %v2724
    %v2726 = vpop.f32.mrb[0].mxu0
    %2727 = vmatprep.mubr.bf16.mxu0 0
    %2728 = vmatmul.mubr.bf16.gmra.mrb[0].mxu0 %v2661
    %v2729 = vpop.f32.mrb[0].mxu0
    %v2730 = vadd.f32 0.0, %v2729
    %v2731 = vpop.f32.mrb[0].mxu0
    %v2732 = vpop.f32.mrb[0].mxu0
    %v2733 = vadd.f32 0.0, %v2732
    %v2734 = vpop.f32.mrb[0].mxu0
    %2735 = vmatprep.mubr.bf16.mxu0 0
    %2736 = vmatmul.mubr.bf16.gmra.mrb[0].mxu0 %v2664
    %v2737 = vpop.f32.mrb[0].mxu0
    %v2738 = vadd.f32 0.0, %v2737
    %v2739 = vpop.f32.mrb[0].mxu0
    %v2740 = vpop.f32.mrb[0].mxu0
    %v2741 = vadd.f32 0.0, %v2740
    %v2742 = vpop.f32.mrb[0].mxu0
    %2743 = vmatprep.mubr.bf16.mxu0 0
    %2744 = vmatmul.mubr.bf16.gmra.mrb[0].mxu0 %v2667
    %v2745 = vpop.f32.mrb[0].mxu0
    %v2746 = vadd.f32 0.0, %v2745
    %v2747 = vpop.f32.mrb[0].mxu0
    %v2748 = vpop.f32.mrb[0].mxu0
    %v2749 = vadd.f32 0.0, %v2748
    %v2750 = vpop.f32.mrb[0].mxu0
    %2751 = vmatprep.mubr.bf16.mxu0 0
    %2752 = vmatmul.mubr.bf16.gmra.mrb[0].mxu0 %v2670
    %v2753 = vpop.f32.mrb[0].mxu0
    %v2754 = vadd.f32 0.0, %v2753
    %v2755 = vpop.f32.mrb[0].mxu0
    %v2756 = vpop.f32.mrb[0].mxu0
    %v2757 = vadd.f32 0.0, %v2756
    %v2758 = vpop.f32.mrb[0].mxu0
    %2759 = vmatprep.mubr.bf16.mxu0 0
    %2760 = vmatmul.mubr.bf16.gmra.mrb[0].mxu0 %v2673
    %v2761 = vpop.f32.mrb[0].mxu0
    %v2762 = vadd.f32 0.0, %v2761
    %v2763 = vpop.f32.mrb[0].mxu0
    %v2764 = vpop.f32.mrb[0].mxu0
    %v2765 = vadd.f32 0.0, %v2764
    %v2766 = vpop.f32.mrb[0].mxu0
    %2767 = vmatprep.mubr.bf16.mxu0 0
    %2768 = vmatmul.mubr.bf16.gmra.mrb[0].mxu0 %v2676
    %v2769 = vpop.f32.mrb[0].mxu0
    %v2770 = vadd.f32 0.0, %v2769
    %v2771 = vpop.f32.mrb[0].mxu0
    %v2772 = vpop.f32.mrb[0].mxu0
    %v2773 = vadd.f32 0.0, %v2772
    %v2774 = vpop.f32.mrb[0].mxu0
    %2775 = vmatprep.mubr.bf16.mxu0 0
    %2776 = vmatmul.mubr.bf16.gmra.mrb[0].mxu0 %v2679
    %v2777 = vpop.f32.mrb[0].mxu0
    %v2778 = vadd.f32 0.0, %v2777
    %v2779 = vpop.f32.mrb[0].mxu0
    %v2780 = vpop.f32.mrb[0].mxu0
    %v2781 = vadd.f32 0.0, %v2780
    %v2782 = vpop.f32.mrb[0].mxu0
    %2783 = vmatprep.mubr.bf16.mxu0 0
    %2784 = vmatmul.mubr.bf16.gmra.mrb[0].mxu0 %v2682
    %v2785 = vpop.f32.mrb[0].mxu0
    %v2786 = vadd.f32 0.0, %v2785
    %v2787 = vpop.f32.mrb[0].mxu0
    %v2788 = vpop.f32.mrb[0].mxu0
    %v2789 = vadd.f32 0.0, %v2788
    %v2790 = vpop.f32.mrb[0].mxu0
    %2791 = vmatprep.mubr.bf16.mxu0 0
    %2792 = vmatmul.mubr.bf16.gmra.mrb[0].mxu0 %v2685
    %v2793 = vpop.f32.mrb[0].mxu0
    %v2794 = vadd.f32 0.0, %v2793
    %v2795 = vpop.f32.mrb[0].mxu0
    %v2796 = vpop.f32.mrb[0].mxu0
    %v2797 = vadd.f32 0.0, %v2796
    %v2798 = vpop.f32.mrb[0].mxu0
    %2799 = vdwg.mxu0
    %v2808 = vunpack.c.l.b16 %v1967
    %v2809 = vunpack.c.l.b16 %v1968
    %v2810 = vunpack.c.l.b16 %v1969
    %v2811 = vunpack.c.l.b16 %v1970
    %v2812 = vunpack.c.l.b16 %v1971
    %v2813 = vunpack.c.l.b16 %v1972
    %v2814 = vunpack.c.l.b16 %v1973
    %v2815 = vunpack.c.l.b16 %v1974
    %v2816 = vpack.c.b16 %v2809, %v2808
    %v2817 = vpack.c.b16 %v2811, %v2810
    %v2818 = vpack.c.b16 %v2813, %v2812
    %v2819 = vpack.c.b16 %v2815, %v2814
    %v2825 = vsel %vm2656, %v1957, 0
    %v2828 = vsel %vm2656, %v1958, 0
    %v2831 = vsel %vm2656, %v1959, 0
    %v2834 = vsel %vm2656, %v1960, 0
    %v2837 = vsel %vm2656, %v1961, 0
    %v2840 = vsel %vm2656, %v1962, 0
    %v2843 = vsel %vm2656, %v1963, 0
    %v2846 = vsel %vm2656, %v1964, 0
    %v2849 = vsel %vm2656, %v1965, 0
    %v2852 = vsel %vm2656, %v1966, 0
    %2854 = vmatprep.subr.bf16.mxu0 0
    %2855 = vmatpush1.bf16.msra.mxu0 %v2816
    %2856 = vmatprep.subr.bf16.mxu0 0
    %2857 = vmatpush1.bf16.msra.mxu0 %v2817
    %2858 = vmatprep.subr.bf16.mxu0 0
    %2859 = vmatpush1.bf16.msra.mxu0 %v2818
    %2860 = vmatprep.subr.bf16.mxu0 0
    %2861 = vmatpush1.bf16.msra.mxu0 %v2819
    %2862 = vmatprep.subr.bf16.mxu0 0
    %2863 = vmatpush1.bf16.msra.mxu0 0
    %2864 = vmatprep.subr.bf16.mxu0 0
    %2865 = vmatpush1.bf16.msra.mxu0 0
    %2866 = vmatprep.subr.bf16.mxu0 0
    %2867 = vmatpush1.bf16.msra.mxu0 0
    %2868 = vmatprep.subr.bf16.mxu0 0
    %2869 = vmatpush1.bf16.msra.mxu0 0
    %2870 = vmatprep.subr.bf16.mxu0 0
    %2871 = vmatpush1.bf16.msra.mxu0 0
    %2872 = vmatprep.subr.bf16.mxu0 0
    %2873 = vmatpush1.bf16.msra.mxu0 0
    %2874 = vmatprep.subr.bf16.mxu0 0
    %2875 = vmatpush1.bf16.msra.mxu0 0
    %2876 = vmatprep.subr.bf16.mxu0 0
    %2877 = vmatpush1.bf16.msra.mxu0 0
    %2878 = vmatprep.subr.bf16.mxu0 0
    %2879 = vmatpush1.bf16.msra.mxu0 0
    %2880 = vmatprep.subr.bf16.mxu0 0
    %2881 = vmatpush1.bf16.msra.mxu0 0
    %2882 = vmatprep.subr.bf16.mxu0 0
    %2883 = vmatpush1.bf16.msra.mxu0 0
    %2884 = vmatprep.subr.bf16.mxu0 0
    %2885 = vmatpush1.bf16.msra.mxu0 0
    %2886 = vmatprep.mubr.bf16.mxu0 0
    %2887 = vmatmul.mubr.bf16.gmra.mrb[0].mxu0 %v2825
    %v2888 = vpop.f32.mrb[0].mxu0
    %v2889 = vadd.f32 %v2722, %v2888
    %v2890 = vpop.f32.mrb[0].mxu0
    %v2891 = vpop.f32.mrb[0].mxu0
    %v2892 = vadd.f32 %v2725, %v2891
    %v2893 = vpop.f32.mrb[0].mxu0
    %2894 = vmatprep.mubr.bf16.mxu0 0
    %2895 = vmatmul.mubr.bf16.gmra.mrb[0].mxu0 %v2828
    %v2896 = vpop.f32.mrb[0].mxu0
    %v2897 = vadd.f32 %v2730, %v2896
    %v2898 = vpop.f32.mrb[0].mxu0
    %v2899 = vpop.f32.mrb[0].mxu0
    %v2900 = vadd.f32 %v2733, %v2899
    %v2901 = vpop.f32.mrb[0].mxu0
    %2902 = vmatprep.mubr.bf16.mxu0 0
    %2903 = vmatmul.mubr.bf16.gmra.mrb[0].mxu0 %v2831
    %v2904 = vpop.f32.mrb[0].mxu0
    %v2905 = vadd.f32 %v2738, %v2904
    %v2906 = vpop.f32.mrb[0].mxu0
    %v2907 = vpop.f32.mrb[0].mxu0
    %v2908 = vadd.f32 %v2741, %v2907
    %v2909 = vpop.f32.mrb[0].mxu0
    %2910 = vmatprep.mubr.bf16.mxu0 0
    %2911 = vmatmul.mubr.bf16.gmra.mrb[0].mxu0 %v2834
    %v2912 = vpop.f32.mrb[0].mxu0
    %v2913 = vadd.f32 %v2746, %v2912
    %v2914 = vpop.f32.mrb[0].mxu0
    %v2915 = vpop.f32.mrb[0].mxu0
    %v2916 = vadd.f32 %v2749, %v2915
    %v2917 = vpop.f32.mrb[0].mxu0
    %2918 = vmatprep.mubr.bf16.mxu0 0
    %2919 = vmatmul.mubr.bf16.gmra.mrb[0].mxu0 %v2837
    %v2920 = vpop.f32.mrb[0].mxu0
    %v2921 = vadd.f32 %v2754, %v2920
    %v2922 = vpop.f32.mrb[0].mxu0
    %v2923 = vpop.f32.mrb[0].mxu0
    %v2924 = vadd.f32 %v2757, %v2923
    %v2925 = vpop.f32.mrb[0].mxu0
    %2926 = vmatprep.mubr.bf16.mxu0 0
    %2927 = vmatmul.mubr.bf16.gmra.mrb[0].mxu0 %v2840
    %v2928 = vpop.f32.mrb[0].mxu0
    %v2929 = vadd.f32 %v2762, %v2928
    %v2930 = vpop.f32.mrb[0].mxu0
    %v2931 = vpop.f32.mrb[0].mxu0
    %v2932 = vadd.f32 %v2765, %v2931
    %v2933 = vpop.f32.mrb[0].mxu0
    %2934 = vmatprep.mubr.bf16.mxu0 0
    %2935 = vmatmul.mubr.bf16.gmra.mrb[0].mxu0 %v2843
    %v2936 = vpop.f32.mrb[0].mxu0
    %v2937 = vadd.f32 %v2770, %v2936
    %v2938 = vpop.f32.mrb[0].mxu0
    %v2939 = vpop.f32.mrb[0].mxu0
    %v2940 = vadd.f32 %v2773, %v2939
    %v2941 = vpop.f32.mrb[0].mxu0
    %2942 = vmatprep.mubr.bf16.mxu0 0
    %2943 = vmatmul.mubr.bf16.gmra.mrb[0].mxu0 %v2846
    %v2944 = vpop.f32.mrb[0].mxu0
    %v2945 = vadd.f32 %v2778, %v2944
    %v2946 = vpop.f32.mrb[0].mxu0
    %v2947 = vpop.f32.mrb[0].mxu0
    %v2948 = vadd.f32 %v2781, %v2947
    %v2949 = vpop.f32.mrb[0].mxu0
    %2950 = vmatprep.mubr.bf16.mxu0 0
    %2951 = vmatmul.mubr.bf16.gmra.mrb[0].mxu0 %v2849
    %v2952 = vpop.f32.mrb[0].mxu0
    %v2953 = vadd.f32 %v2786, %v2952
    %v2954 = vpop.f32.mrb[0].mxu0
    %v2955 = vpop.f32.mrb[0].mxu0
    %v2956 = vadd.f32 %v2789, %v2955
    %v2957 = vpop.f32.mrb[0].mxu0
    %2958 = vmatprep.mubr.bf16.mxu0 0
    %2959 = vmatmul.mubr.bf16.gmra.mrb[0].mxu0 %v2852
    %v2960 = vpop.f32.mrb[0].mxu0
    %v2961 = vadd.f32 %v2794, %v2960
    %v2962 = vpop.f32.mrb[0].mxu0
    %v2963 = vpop.f32.mrb[0].mxu0
    %v2964 = vadd.f32 %v2797, %v2963
    %v2965 = vpop.f32.mrb[0].mxu0
    %2966 = vdwg.mxu0
    %v2967 = vcombine.low %v1228, %v1227
    %v2968 = vcombine.low %v1229, %v1236
    %v2970 = vunpack.c.l.s4 1983009808
    %v2971 = vunpack.c.0.s8 %v2970
    %v2972 = vlaneseq
    %v2973 = vshrl.u32 %v2972, 7
    %v2974 = vsub.s32 %v2971, %v2973
    %v2975 = vrot.slane %v2967, %v2974
    %v2977 = vunpack.c.l.s4 1983009808
    %v2978 = vunpack.c.0.s8 %v2977
    %v2979 = vlaneseq
    %v2980 = vshrl.u32 %v2979, 7
    %v2981 = vsub.s32 %v2978, %v2980
    %v2982 = vrot.slane %v2968, %v2981
    %v2983 = vcombine.low %v2975, %v2982
    %v2984 = vcombine.low %v1975, %v1252
    %v2985 = vcombine.low %v1251, %v1253
    %v2987 = vunpack.c.l.s4 1983009808
    %v2988 = vunpack.c.0.s8 %v2987
    %v2989 = vlaneseq
    %v2990 = vshrl.u32 %v2989, 7
    %v2991 = vsub.s32 %v2988, %v2990
    %v2992 = vrot.slane %v2984, %v2991
    %v2994 = vunpack.c.l.s4 1983009808
    %v2995 = vunpack.c.0.s8 %v2994
    %v2996 = vlaneseq
    %v2997 = vshrl.u32 %v2996, 7
    %v2998 = vsub.s32 %v2995, %v2997
    %v2999 = vrot.slane %v2985, %v2998
    %v3000 = vcombine.low %v2992, %v2999
    %v3001 = vcombine.low %v1260, %v1976
    %v3002 = vcombine.low %v1276, %v1275
    %v3004 = vunpack.c.l.s4 1983009808
    %v3005 = vunpack.c.0.s8 %v3004
    %v3006 = vlaneseq
    %v3007 = vshrl.u32 %v3006, 7
    %v3008 = vsub.s32 %v3005, %v3007
    %v3009 = vrot.slane %v3001, %v3008
    %v3011 = vunpack.c.l.s4 1983009808
    %v3012 = vunpack.c.0.s8 %v3011
    %v3013 = vlaneseq
    %v3014 = vshrl.u32 %v3013, 7
    %v3015 = vsub.s32 %v3012, %v3014
    %v3016 = vrot.slane %v3002, %v3015
    %v3017 = vcombine.low %v3009, %v3016
    %v3018 = vcombine.low %v1277, %v1284
    %v3019 = vcombine.low %v1977, %v1300
    %v3021 = vunpack.c.l.s4 1983009808
    %v3022 = vunpack.c.0.s8 %v3021
    %v3023 = vlaneseq
    %v3024 = vshrl.u32 %v3023, 7
    %v3025 = vsub.s32 %v3022, %v3024
    %v3026 = vrot.slane %v3018, %v3025
    %v3028 = vunpack.c.l.s4 1983009808
    %v3029 = vunpack.c.0.s8 %v3028
    %v3030 = vlaneseq
    %v3031 = vshrl.u32 %v3030, 7
    %v3032 = vsub.s32 %v3029, %v3031
    %v3033 = vrot.slane %v3019, %v3032
    %v3034 = vcombine.low %v3026, %v3033
    %v3035 = vcombine.low %v1299, %v1301
    %v3036 = vcombine.low %v1308, %v1978
    %v3038 = vunpack.c.l.s4 1983009808
    %v3039 = vunpack.c.0.s8 %v3038
    %v3040 = vlaneseq
    %v3041 = vshrl.u32 %v3040, 7
    %v3042 = vsub.s32 %v3039, %v3041
    %v3043 = vrot.slane %v3035, %v3042
    %v3045 = vunpack.c.l.s4 1983009808
    %v3046 = vunpack.c.0.s8 %v3045
    %v3047 = vlaneseq
    %v3048 = vshrl.u32 %v3047, 7
    %v3049 = vsub.s32 %v3046, %v3048
    %v3050 = vrot.slane %v3036, %v3049
    %v3051 = vcombine.low %v3043, %v3050
    %v3052 = vcombine.low %v1324, %v1323
    %v3053 = vcombine.low %v1325, %v1332
    %v3055 = vunpack.c.l.s4 1983009808
    %v3056 = vunpack.c.0.s8 %v3055
    %v3057 = vlaneseq
    %v3058 = vshrl.u32 %v3057, 7
    %v3059 = vsub.s32 %v3056, %v3058
    %v3060 = vrot.slane %v3052, %v3059
    %v3062 = vunpack.c.l.s4 1983009808
    %v3063 = vunpack.c.0.s8 %v3062
    %v3064 = vlaneseq
    %v3065 = vshrl.u32 %v3064, 7
    %v3066 = vsub.s32 %v3063, %v3065
    %v3067 = vrot.slane %v3053, %v3066
    %v3068 = vcombine.low %v3060, %v3067
    %v3069 = vcombine.low %v1979, %v1348
    %v3070 = vcombine.low %v1347, %v1349
    %v3072 = vunpack.c.l.s4 1983009808
    %v3073 = vunpack.c.0.s8 %v3072
    %v3074 = vlaneseq
    %v3075 = vshrl.u32 %v3074, 7
    %v3076 = vsub.s32 %v3073, %v3075
    %v3077 = vrot.slane %v3069, %v3076
    %v3079 = vunpack.c.l.s4 1983009808
    %v3080 = vunpack.c.0.s8 %v3079
    %v3081 = vlaneseq
    %v3082 = vshrl.u32 %v3081, 7
    %v3083 = vsub.s32 %v3080, %v3082
    %v3084 = vrot.slane %v3070, %v3083
    %v3085 = vcombine.low %v3077, %v3084
    %v3086 = vcombine.low %v1356, %v1980
    %v3087 = vcombine.low %v1372, %v1371
    %v3089 = vunpack.c.l.s4 1983009808
    %v3090 = vunpack.c.0.s8 %v3089
    %v3091 = vlaneseq
    %v3092 = vshrl.u32 %v3091, 7
    %v3093 = vsub.s32 %v3090, %v3092
    %v3094 = vrot.slane %v3086, %v3093
    %v3096 = vunpack.c.l.s4 1983009808
    %v3097 = vunpack.c.0.s8 %v3096
    %v3098 = vlaneseq
    %v3099 = vshrl.u32 %v3098, 7
    %v3100 = vsub.s32 %v3097, %v3099
    %v3101 = vrot.slane %v3087, %v3100
    %v3102 = vcombine.low %v3094, %v3101
    %v3103 = vcombine.low %v1373, %v1380
    %v3104 = vcombine.low %v1981, %v1396
    %v3106 = vunpack.c.l.s4 1983009808
    %v3107 = vunpack.c.0.s8 %v3106
    %v3108 = vlaneseq
    %v3109 = vshrl.u32 %v3108, 7
    %v3110 = vsub.s32 %v3107, %v3109
    %v3111 = vrot.slane %v3103, %v3110
    %v3113 = vunpack.c.l.s4 1983009808
    %v3114 = vunpack.c.0.s8 %v3113
    %v3115 = vlaneseq
    %v3116 = vshrl.u32 %v3115, 7
    %v3117 = vsub.s32 %v3114, %v3116
    %v3118 = vrot.slane %v3104, %v3117
    %v3119 = vcombine.low %v3111, %v3118
    %v3120 = vcombine.low %v1395, %v1397
    %v3121 = vcombine.low %v1404, %v1982
    %v3123 = vunpack.c.l.s4 1983009808
    %v3124 = vunpack.c.0.s8 %v3123
    %v3125 = vlaneseq
    %v3126 = vshrl.u32 %v3125, 7
    %v3127 = vsub.s32 %v3124, %v3126
    %v3128 = vrot.slane %v3120, %v3127
    %v3130 = vunpack.c.l.s4 1983009808
    %v3131 = vunpack.c.0.s8 %v3130
    %v3132 = vlaneseq
    %v3133 = vshrl.u32 %v3132, 7
    %v3134 = vsub.s32 %v3131, %v3133
    %v3135 = vrot.slane %v3121, %v3134
    %v3136 = vcombine.low %v3128, %v3135
    %v3137 = vcombine.low %v1420, %v1419
    %v3138 = vcombine.low %v1421, %v1428
    %v3140 = vunpack.c.l.s4 1983009808
    %v3141 = vunpack.c.0.s8 %v3140
    %v3142 = vlaneseq
    %v3143 = vshrl.u32 %v3142, 7
    %v3144 = vsub.s32 %v3141, %v3143
    %v3145 = vrot.slane %v3137, %v3144
    %v3147 = vunpack.c.l.s4 1983009808
    %v3148 = vunpack.c.0.s8 %v3147
    %v3149 = vlaneseq
    %v3150 = vshrl.u32 %v3149, 7
    %v3151 = vsub.s32 %v3148, %v3150
    %v3152 = vrot.slane %v3138, %v3151
    %v3153 = vcombine.low %v3145, %v3152
    %v3154 = vcombine.low %v1983, %v1444
    %v3155 = vcombine.low %v1443, %v1445
    %v3157 = vunpack.c.l.s4 1983009808
    %v3158 = vunpack.c.0.s8 %v3157
    %v3159 = vlaneseq
    %v3160 = vshrl.u32 %v3159, 7
    %v3161 = vsub.s32 %v3158, %v3160
    %v3162 = vrot.slane %v3154, %v3161
    %v3164 = vunpack.c.l.s4 1983009808
    %v3165 = vunpack.c.0.s8 %v3164
    %v3166 = vlaneseq
    %v3167 = vshrl.u32 %v3166, 7
    %v3168 = vsub.s32 %v3165, %v3167
    %v3169 = vrot.slane %v3155, %v3168
    %v3170 = vcombine.low %v3162, %v3169
    %v3171 = vcombine.low %v1452, %v1984
    %v3172 = vcombine.low %v1468, %v1467
    %v3174 = vunpack.c.l.s4 1983009808
    %v3175 = vunpack.c.0.s8 %v3174
    %v3176 = vlaneseq
    %v3177 = vshrl.u32 %v3176, 7
    %v3178 = vsub.s32 %v3175, %v3177
    %v3179 = vrot.slane %v3171, %v3178
    %v3181 = vunpack.c.l.s4 1983009808
    %v3182 = vunpack.c.0.s8 %v3181
    %v3183 = vlaneseq
    %v3184 = vshrl.u32 %v3183, 7
    %v3185 = vsub.s32 %v3182, %v3184
    %v3186 = vrot.slane %v3172, %v3185
    %v3187 = vcombine.low %v3179, %v3186
    %v3188 = vcombine.low %v1469, %v1476
    %v3189 = vcombine.low %v1985, %v1492
    %v3191 = vunpack.c.l.s4 1983009808
    %v3192 = vunpack.c.0.s8 %v3191
    %v3193 = vlaneseq
    %v3194 = vshrl.u32 %v3193, 7
    %v3195 = vsub.s32 %v3192, %v3194
    %v3196 = vrot.slane %v3188, %v3195
    %v3198 = vunpack.c.l.s4 1983009808
    %v3199 = vunpack.c.0.s8 %v3198
    %v3200 = vlaneseq
    %v3201 = vshrl.u32 %v3200, 7
    %v3202 = vsub.s32 %v3199, %v3201
    %v3203 = vrot.slane %v3189, %v3202
    %v3204 = vcombine.low %v3196, %v3203
    %v3205 = vcombine.low %v1491, %v1493
    %v3206 = vcombine.low %v1500, %v1986
    %v3208 = vunpack.c.l.s4 1983009808
    %v3209 = vunpack.c.0.s8 %v3208
    %v3210 = vlaneseq
    %v3211 = vshrl.u32 %v3210, 7
    %v3212 = vsub.s32 %v3209, %v3211
    %v3213 = vrot.slane %v3205, %v3212
    %v3215 = vunpack.c.l.s4 1983009808
    %v3216 = vunpack.c.0.s8 %v3215
    %v3217 = vlaneseq
    %v3218 = vshrl.u32 %v3217, 7
    %v3219 = vsub.s32 %v3216, %v3218
    %v3220 = vrot.slane %v3206, %v3219
    %v3221 = vcombine.low %v3213, %v3220
    %v3222 = vcombine.low %v1516, %v1515
    %v3223 = vcombine.low %v1517, %v1524
    %v3225 = vunpack.c.l.s4 1983009808
    %v3226 = vunpack.c.0.s8 %v3225
    %v3227 = vlaneseq
    %v3228 = vshrl.u32 %v3227, 7
    %v3229 = vsub.s32 %v3226, %v3228
    %v3230 = vrot.slane %v3222, %v3229
    %v3232 = vunpack.c.l.s4 1983009808
    %v3233 = vunpack.c.0.s8 %v3232
    %v3234 = vlaneseq
    %v3235 = vshrl.u32 %v3234, 7
    %v3236 = vsub.s32 %v3233, %v3235
    %v3237 = vrot.slane %v3223, %v3236
    %v3238 = vcombine.low %v3230, %v3237
    %v3239 = vcombine.low %v1987, %v1540
    %v3240 = vcombine.low %v1539, %v1541
    %v3242 = vunpack.c.l.s4 1983009808
    %v3243 = vunpack.c.0.s8 %v3242
    %v3244 = vlaneseq
    %v3245 = vshrl.u32 %v3244, 7
    %v3246 = vsub.s32 %v3243, %v3245
    %v3247 = vrot.slane %v3239, %v3246
    %v3249 = vunpack.c.l.s4 1983009808
    %v3250 = vunpack.c.0.s8 %v3249
    %v3251 = vlaneseq
    %v3252 = vshrl.u32 %v3251, 7
    %v3253 = vsub.s32 %v3250, %v3252
    %v3254 = vrot.slane %v3240, %v3253
    %v3255 = vcombine.low %v3247, %v3254
    %v3256 = vcombine.low %v1548, %v1988
    %v3257 = vcombine.low %v1564, %v1563
    %v3259 = vunpack.c.l.s4 1983009808
    %v3260 = vunpack.c.0.s8 %v3259
    %v3261 = vlaneseq
    %v3262 = vshrl.u32 %v3261, 7
    %v3263 = vsub.s32 %v3260, %v3262
    %v3264 = vrot.slane %v3256, %v3263
    %v3266 = vunpack.c.l.s4 1983009808
    %v3267 = vunpack.c.0.s8 %v3266
    %v3268 = vlaneseq
    %v3269 = vshrl.u32 %v3268, 7
    %v3270 = vsub.s32 %v3267, %v3269
    %v3271 = vrot.slane %v3257, %v3270
    %v3272 = vcombine.low %v3264, %v3271
    %v3273 = vcombine.low %v1565, %v1572
    %v3274 = vcombine.low %v1989, %v1588
    %v3276 = vunpack.c.l.s4 1983009808
    %v3277 = vunpack.c.0.s8 %v3276
    %v3278 = vlaneseq
    %v3279 = vshrl.u32 %v3278, 7
    %v3280 = vsub.s32 %v3277, %v3279
    %v3281 = vrot.slane %v3273, %v3280
    %v3283 = vunpack.c.l.s4 1983009808
    %v3284 = vunpack.c.0.s8 %v3283
    %v3285 = vlaneseq
    %v3286 = vshrl.u32 %v3285, 7
    %v3287 = vsub.s32 %v3284, %v3286
    %v3288 = vrot.slane %v3274, %v3287
    %v3289 = vcombine.low %v3281, %v3288
    %v3290 = vcombine.low %v1587, %v1589
    %v3291 = vcombine.low %v1596, %v1990
    %v3293 = vunpack.c.l.s4 1983009808
    %v3294 = vunpack.c.0.s8 %v3293
    %v3295 = vlaneseq
    %v3296 = vshrl.u32 %v3295, 7
    %v3297 = vsub.s32 %v3294, %v3296
    %v3298 = vrot.slane %v3290, %v3297
    %v3300 = vunpack.c.l.s4 1983009808
    %v3301 = vunpack.c.0.s8 %v3300
    %v3302 = vlaneseq
    %v3303 = vshrl.u32 %v3302, 7
    %v3304 = vsub.s32 %v3301, %v3303
    %v3305 = vrot.slane %v3291, %v3304
    %v3306 = vcombine.low %v3298, %v3305
    %v3327 = vpack.c.bf16 %v3000, %v2983
    %v3328 = vpack.c.bf16 %v3034, %v3017
    %v3329 = vpack.c.bf16 %v3068, %v3051
    %v3330 = vpack.c.bf16 %v3102, %v3085
    %v3331 = vpack.c.bf16 %v3136, %v3119
    %v3332 = vpack.c.bf16 %v3170, %v3153
    %v3333 = vpack.c.bf16 %v3204, %v3187
    %v3334 = vpack.c.bf16 %v3238, %v3221
    %v3335 = vpack.c.bf16 %v3272, %v3255
    %v3336 = vpack.c.bf16 %v3306, %v3289
    %s3337 = scalar_lea.vmem [#allocation2], 64
    %v3338 = vld [vmem:[%s3337] sm:$0xf]
    %v3339 = vld [vmem:[%s3337 + $0x4] sm:$0xf]
    %v3340 = vld [vmem:[%s3337 + $0x8] sm:$0xf]
    %v3341 = vld [vmem:[%s3337 + $0xc] sm:$0xf]
    %v3342 = vld [vmem:[%s3337 + $0x10] sm:$0xf]
    %v3343 = vld [vmem:[%s3337 + $0x14] sm:$0xf]
    %v3344 = vld [vmem:[%s3337 + $0x18] sm:$0xf]
    %v3345 = vld [vmem:[%s3337 + $0x1c] sm:$0xf]
    %v3354 = vunpack.c.l.b16 %v3338
    %v3355 = vunpack.c.l.b16 %v3339
    %v3356 = vunpack.c.l.b16 %v3340
    %v3357 = vunpack.c.l.b16 %v3341
    %v3358 = vunpack.c.l.b16 %v3342
    %v3359 = vunpack.c.l.b16 %v3343
    %v3360 = vunpack.c.l.b16 %v3344
    %v3361 = vunpack.c.l.b16 %v3345
    %v3362 = vpack.c.b16 %v3355, %v3354
    %v3363 = vpack.c.b16 %v3357, %v3356
    %v3364 = vpack.c.b16 %v3359, %v3358
    %v3365 = vpack.c.b16 %v3361, %v3360
    %v3371 = vsel %vm2656, %v3327, 0
    %v3374 = vsel %vm2656, %v3328, 0
    %v3377 = vsel %vm2656, %v3329, 0
    %v3380 = vsel %vm2656, %v3330, 0
    %v3383 = vsel %vm2656, %v3331, 0
    %v3386 = vsel %vm2656, %v3332, 0
    %v3389 = vsel %vm2656, %v3333, 0
    %v3392 = vsel %vm2656, %v3334, 0
    %v3395 = vsel %vm2656, %v3335, 0
    %v3398 = vsel %vm2656, %v3336, 0
    %3400 = vmatprep.subr.bf16.mxu0 0
    %3401 = vmatpush1.bf16.msra.mxu0 %v3362
    %3402 = vmatprep.subr.bf16.mxu0 0
    %3403 = vmatpush1.bf16.msra.mxu0 %v3363
    %3404 = vmatprep.subr.bf16.mxu0 0
    %3405 = vmatpush1.bf16.msra.mxu0 %v3364
    %3406 = vmatprep.subr.bf16.mxu0 0
    %3407 = vmatpush1.bf16.msra.mxu0 %v3365
    %3408 = vmatprep.subr.bf16.mxu0 0
    %3409 = vmatpush1.bf16.msra.mxu0 0
    %3410 = vmatprep.subr.bf16.mxu0 0
    %3411 = vmatpush1.bf16.msra.mxu0 0
    %3412 = vmatprep.subr.bf16.mxu0 0
    %3413 = vmatpush1.bf16.msra.mxu0 0
    %3414 = vmatprep.subr.bf16.mxu0 0
    %3415 = vmatpush1.bf16.msra.mxu0 0
    %3416 = vmatprep.subr.bf16.mxu0 0
    %3417 = vmatpush1.bf16.msra.mxu0 0
    %3418 = vmatprep.subr.bf16.mxu0 0
    %3419 = vmatpush1.bf16.msra.mxu0 0
    %3420 = vmatprep.subr.bf16.mxu0 0
    %3421 = vmatpush1.bf16.msra.mxu0 0
    %3422 = vmatprep.subr.bf16.mxu0 0
    %3423 = vmatpush1.bf16.msra.mxu0 0
    %3424 = vmatprep.subr.bf16.mxu0 0
    %3425 = vmatpush1.bf16.msra.mxu0 0
    %3426 = vmatprep.subr.bf16.mxu0 0
    %3427 = vmatpush1.bf16.msra.mxu0 0
    %3428 = vmatprep.subr.bf16.mxu0 0
    %3429 = vmatpush1.bf16.msra.mxu0 0
    %3430 = vmatprep.subr.bf16.mxu0 0
    %3431 = vmatpush1.bf16.msra.mxu0 0
    %3432 = vmatprep.mubr.bf16.mxu0 0
    %3433 = vmatmul.mubr.bf16.gmra.mrb[0].mxu0 %v3371
    %v3434 = vpop.f32.mrb[0].mxu0
    %v3435 = vadd.f32 0.0, %v3434
    %v3436 = vpop.f32.mrb[0].mxu0
    %v3437 = vpop.f32.mrb[0].mxu0
    %v3438 = vadd.f32 0.0, %v3437
    %v3439 = vpop.f32.mrb[0].mxu0
    %3440 = vmatprep.mubr.bf16.mxu0 0
    %3441 = vmatmul.mubr.bf16.gmra.mrb[0].mxu0 %v3374
    %v3442 = vpop.f32.mrb[0].mxu0
    %v3443 = vadd.f32 0.0, %v3442
    %v3444 = vpop.f32.mrb[0].mxu0
    %v3445 = vpop.f32.mrb[0].mxu0
    %v3446 = vadd.f32 0.0, %v3445
    %v3447 = vpop.f32.mrb[0].mxu0
    %3448 = vmatprep.mubr.bf16.mxu0 0
    %3449 = vmatmul.mubr.bf16.gmra.mrb[0].mxu0 %v3377
    %v3450 = vpop.f32.mrb[0].mxu0
    %v3451 = vadd.f32 0.0, %v3450
    %v3452 = vpop.f32.mrb[0].mxu0
    %v3453 = vpop.f32.mrb[0].mxu0
    %v3454 = vadd.f32 0.0, %v3453
    %v3455 = vpop.f32.mrb[0].mxu0
    %3456 = vmatprep.mubr.bf16.mxu0 0
    %3457 = vmatmul.mubr.bf16.gmra.mrb[0].mxu0 %v3380
    %v3458 = vpop.f32.mrb[0].mxu0
    %v3459 = vadd.f32 0.0, %v3458
    %v3460 = vpop.f32.mrb[0].mxu0
    %v3461 = vpop.f32.mrb[0].mxu0
    %v3462 = vadd.f32 0.0, %v3461
    %v3463 = vpop.f32.mrb[0].mxu0
    %3464 = vmatprep.mubr.bf16.mxu0 0
    %3465 = vmatmul.mubr.bf16.gmra.mrb[0].mxu0 %v3383
    %v3466 = vpop.f32.mrb[0].mxu0
    %v3467 = vadd.f32 0.0, %v3466
    %v3468 = vpop.f32.mrb[0].mxu0
    %v3469 = vpop.f32.mrb[0].mxu0
    %v3470 = vadd.f32 0.0, %v3469
    %v3471 = vpop.f32.mrb[0].mxu0
    %3472 = vmatprep.mubr.bf16.mxu0 0
    %3473 = vmatmul.mubr.bf16.gmra.mrb[0].mxu0 %v3386
    %v3474 = vpop.f32.mrb[0].mxu0
    %v3475 = vadd.f32 0.0, %v3474
    %v3476 = vpop.f32.mrb[0].mxu0
    %v3477 = vpop.f32.mrb[0].mxu0
    %v3478 = vadd.f32 0.0, %v3477
    %v3479 = vpop.f32.mrb[0].mxu0
    %3480 = vmatprep.mubr.bf16.mxu0 0
    %3481 = vmatmul.mubr.bf16.gmra.mrb[0].mxu0 %v3389
    %v3482 = vpop.f32.mrb[0].mxu0
    %v3483 = vadd.f32 0.0, %v3482
    %v3484 = vpop.f32.mrb[0].mxu0
    %v3485 = vpop.f32.mrb[0].mxu0
    %v3486 = vadd.f32 0.0, %v3485
    %v3487 = vpop.f32.mrb[0].mxu0
    %3488 = vmatprep.mubr.bf16.mxu0 0
    %3489 = vmatmul.mubr.bf16.gmra.mrb[0].mxu0 %v3392
    %v3490 = vpop.f32.mrb[0].mxu0
    %v3491 = vadd.f32 0.0, %v3490
    %v3492 = vpop.f32.mrb[0].mxu0
    %v3493 = vpop.f32.mrb[0].mxu0
    %v3494 = vadd.f32 0.0, %v3493
    %v3495 = vpop.f32.mrb[0].mxu0
    %3496 = vmatprep.mubr.bf16.mxu0 0
    %3497 = vmatmul.mubr.bf16.gmra.mrb[0].mxu0 %v3395
    %v3498 = vpop.f32.mrb[0].mxu0
    %v3499 = vadd.f32 0.0, %v3498
    %v3500 = vpop.f32.mrb[0].mxu0
    %v3501 = vpop.f32.mrb[0].mxu0
    %v3502 = vadd.f32 0.0, %v3501
    %v3503 = vpop.f32.mrb[0].mxu0
    %3504 = vmatprep.mubr.bf16.mxu0 0
    %3505 = vmatmul.mubr.bf16.gmra.mrb[0].mxu0 %v3398
    %v3506 = vpop.f32.mrb[0].mxu0
    %v3507 = vadd.f32 0.0, %v3506
    %v3508 = vpop.f32.mrb[0].mxu0
    %v3509 = vpop.f32.mrb[0].mxu0
    %v3510 = vadd.f32 0.0, %v3509
    %v3511 = vpop.f32.mrb[0].mxu0
    %3512 = vdwg.mxu0
    %v3513 = vadd.f32 %v2889, %v3435
    %v3514 = vadd.f32 %v2892, %v3438
    %v3515 = vadd.f32 %v2897, %v3443
    %v3516 = vadd.f32 %v2900, %v3446
    %v3517 = vadd.f32 %v2905, %v3451
    %v3518 = vadd.f32 %v2908, %v3454
    %v3519 = vadd.f32 %v2913, %v3459
    %v3520 = vadd.f32 %v2916, %v3462
    %v3521 = vadd.f32 %v2921, %v3467
    %v3522 = vadd.f32 %v2924, %v3470
    %v3523 = vadd.f32 %v2929, %v3475
    %v3524 = vadd.f32 %v2932, %v3478
    %v3525 = vadd.f32 %v2937, %v3483
    %v3526 = vadd.f32 %v2940, %v3486
    %v3527 = vadd.f32 %v2945, %v3491
    %v3528 = vadd.f32 %v2948, %v3494
    %v3529 = vadd.f32 %v2953, %v3499
    %v3530 = vadd.f32 %v2956, %v3502
    %v3531 = vadd.f32 %v2961, %v3507
    %v3532 = vadd.f32 %v2964, %v3510
    %v3533 = vcombine.high %v1165, %v1165
    %v3535 = vunpack.c.l.s4 1983009808
    %v3536 = vunpack.c.0.s8 %v3535
    %v3537 = vlaneseq
    %v3538 = vshrl.u32 %v3537, 7
    %v3539 = vsub.s32 %v3536, %v3538
    %v3540 = vrot.slane %v3533, %v3539
    %v3541 = vcombine.high %v1166, %v1166
    %v3543 = vunpack.c.l.s4 1983009808
    %v3544 = vunpack.c.0.s8 %v3543
    %v3545 = vlaneseq
    %v3546 = vshrl.u32 %v3545, 7
    %v3547 = vsub.s32 %v3544, %v3546
    %v3548 = vrot.slane %v3541, %v3547
    %v3549 = vcombine.high %v1167, %v1167
    %v3551 = vunpack.c.l.s4 1983009808
    %v3552 = vunpack.c.0.s8 %v3551
    %v3553 = vlaneseq
    %v3554 = vshrl.u32 %v3553, 7
    %v3555 = vsub.s32 %v3552, %v3554
    %v3556 = vrot.slane %v3549, %v3555
    %v3557 = vcombine.high %v1168, %v1168
    %v3559 = vunpack.c.l.s4 1983009808
    %v3560 = vunpack.c.0.s8 %v3559
    %v3561 = vlaneseq
    %v3562 = vshrl.u32 %v3561, 7
    %v3563 = vsub.s32 %v3560, %v3562
    %v3564 = vrot.slane %v3557, %v3563
    %v3565 = vcombine.high %v1169, %v1169
    %v3567 = vunpack.c.l.s4 1983009808
    %v3568 = vunpack.c.0.s8 %v3567
    %v3569 = vlaneseq
    %v3570 = vshrl.u32 %v3569, 7
    %v3571 = vsub.s32 %v3568, %v3570
    %v3572 = vrot.slane %v3565, %v3571
    %v3573 = vcombine.high %v1170, %v1170
    %v3575 = vunpack.c.l.s4 1983009808
    %v3576 = vunpack.c.0.s8 %v3575
    %v3577 = vlaneseq
    %v3578 = vshrl.u32 %v3577, 7
    %v3579 = vsub.s32 %v3576, %v3578
    %v3580 = vrot.slane %v3573, %v3579
    %v3581 = vcombine.high %v1171, %v1171
    %v3583 = vunpack.c.l.s4 1983009808
    %v3584 = vunpack.c.0.s8 %v3583
    %v3585 = vlaneseq
    %v3586 = vshrl.u32 %v3585, 7
    %v3587 = vsub.s32 %v3584, %v3586
    %v3588 = vrot.slane %v3581, %v3587
    %v3589 = vcombine.high %v1172, %v1172
    %v3591 = vunpack.c.l.s4 1983009808
    %v3592 = vunpack.c.0.s8 %v3591
    %v3593 = vlaneseq
    %v3594 = vshrl.u32 %v3593, 7
    %v3595 = vsub.s32 %v3592, %v3594
    %v3596 = vrot.slane %v3589, %v3595
    %v3597 = vcombine.high %v1173, %v1173
    %v3599 = vunpack.c.l.s4 1983009808
    %v3600 = vunpack.c.0.s8 %v3599
    %v3601 = vlaneseq
    %v3602 = vshrl.u32 %v3601, 7
    %v3603 = vsub.s32 %v3600, %v3602
    %v3604 = vrot.slane %v3597, %v3603
    %v3605 = vcombine.high %v1174, %v1174
    %v3607 = vunpack.c.l.s4 1983009808
    %v3608 = vunpack.c.0.s8 %v3607
    %v3609 = vlaneseq
    %v3610 = vshrl.u32 %v3609, 7
    %v3611 = vsub.s32 %v3608, %v3610
    %v3612 = vrot.slane %v3605, %v3611
    %v3613 = vcombine.high %v1175, %v1175
    %v3615 = vunpack.c.l.s4 1983009808
    %v3616 = vunpack.c.0.s8 %v3615
    %v3617 = vlaneseq
    %v3618 = vshrl.u32 %v3617, 7
    %v3619 = vsub.s32 %v3616, %v3618
    %v3620 = vrot.slane %v3613, %v3619
    %v3621 = vcombine.high %v1176, %v1176
    %v3623 = vunpack.c.l.s4 1983009808
    %v3624 = vunpack.c.0.s8 %v3623
    %v3625 = vlaneseq
    %v3626 = vshrl.u32 %v3625, 7
    %v3627 = vsub.s32 %v3624, %v3626
    %v3628 = vrot.slane %v3621, %v3627
    %v3629 = vcombine.high %v1177, %v1177
    %v3631 = vunpack.c.l.s4 1983009808
    %v3632 = vunpack.c.0.s8 %v3631
    %v3633 = vlaneseq
    %v3634 = vshrl.u32 %v3633, 7
    %v3635 = vsub.s32 %v3632, %v3634
    %v3636 = vrot.slane %v3629, %v3635
    %v3637 = vcombine.high %v1178, %v1178
    %v3639 = vunpack.c.l.s4 1983009808
    %v3640 = vunpack.c.0.s8 %v3639
    %v3641 = vlaneseq
    %v3642 = vshrl.u32 %v3641, 7
    %v3643 = vsub.s32 %v3640, %v3642
    %v3644 = vrot.slane %v3637, %v3643
    %v3645 = vcombine.high %v1179, %v1179
    %v3647 = vunpack.c.l.s4 1983009808
    %v3648 = vunpack.c.0.s8 %v3647
    %v3649 = vlaneseq
    %v3650 = vshrl.u32 %v3649, 7
    %v3651 = vsub.s32 %v3648, %v3650
    %v3652 = vrot.slane %v3645, %v3651
    %v3653 = vcombine.high %v1180, %v1180
    %v3655 = vunpack.c.l.s4 1983009808
    %v3656 = vunpack.c.0.s8 %v3655
    %v3657 = vlaneseq
    %v3658 = vshrl.u32 %v3657, 7
    %v3659 = vsub.s32 %v3656, %v3658
    %v3660 = vrot.slane %v3653, %v3659
    %v3661 = vrot.slane %v2011, 2
    %v3662 = vrot.slane %v3540, 7
    %v3663 = vsel %vm1996, %v3661, %v3662
    %v3664 = vrot.slane %v2027, 2
    %v3665 = vrot.slane %v3548, 7
    %v3666 = vsel %vm1996, %v3664, %v3665
    %v3667 = vrot.slane %v2043, 2
    %v3668 = vrot.slane %v3556, 7
    %v3669 = vsel %vm1996, %v3667, %v3668
    %v3670 = vrot.slane %v2059, 2
    %v3671 = vrot.slane %v3564, 7
    %v3672 = vsel %vm1996, %v3670, %v3671
    %v3673 = vrot.slane %v2075, 2
    %v3674 = vrot.slane %v3572, 7
    %v3675 = vsel %vm1996, %v3673, %v3674
    %v3676 = vrot.slane %v2091, 2
    %v3677 = vrot.slane %v3580, 7
    %v3678 = vsel %vm1996, %v3676, %v3677
    %v3679 = vrot.slane %v2107, 2
    %v3680 = vrot.slane %v3588, 7
    %v3681 = vsel %vm1996, %v3679, %v3680
    %v3682 = vrot.slane %v2123, 2
    %v3683 = vrot.slane %v3596, 7
    %v3684 = vsel %vm1996, %v3682, %v3683
    %v3685 = vrot.slane %v2139, 2
    %v3686 = vrot.slane %v3604, 7
    %v3687 = vsel %vm1996, %v3685, %v3686
    %v3688 = vrot.slane %v2155, 2
    %v3689 = vrot.slane %v3612, 7
    %v3690 = vsel %vm1996, %v3688, %v3689
    %v3691 = vrot.slane %v2171, 2
    %v3692 = vrot.slane %v3620, 7
    %v3693 = vsel %vm1996, %v3691, %v3692
    %v3694 = vrot.slane %v2187, 2
    %v3695 = vrot.slane %v3628, 7
    %v3696 = vsel %vm1996, %v3694, %v3695
    %v3697 = vrot.slane %v2203, 2
    %v3698 = vrot.slane %v3636, 7
    %v3699 = vsel %vm1996, %v3697, %v3698
    %v3700 = vrot.slane %v2219, 2
    %v3701 = vrot.slane %v3644, 7
    %v3702 = vsel %vm1996, %v3700, %v3701
    %v3703 = vrot.slane %v2235, 2
    %v3704 = vrot.slane %v3652, 7
    %v3705 = vsel %vm1996, %v3703, %v3704
    %v3706 = vrot.slane %v2251, 2
    %v3707 = vrot.slane %v3660, 7
    %v3708 = vsel %vm1996, %v3706, %v3707
    %v3709 = vcombine.low %v2003, %v2006
    %v3710 = vcombine.low %v2009, %v2012
    %v3712 = vunpack.c.l.s4 1983009808
    %v3713 = vunpack.c.0.s8 %v3712
    %v3714 = vlaneseq
    %v3715 = vshrl.u32 %v3714, 7
    %v3716 = vsub.s32 %v3713, %v3715
    %v3717 = vrot.slane %v3709, %v3716
    %v3719 = vunpack.c.l.s4 1983009808
    %v3720 = vunpack.c.0.s8 %v3719
    %v3721 = vlaneseq
    %v3722 = vshrl.u32 %v3721, 7
    %v3723 = vsub.s32 %v3720, %v3722
    %v3724 = vrot.slane %v3710, %v3723
    %v3725 = vcombine.low %v3717, %v3724
    %v3726 = vcombine.low %v3663, %v2019
    %v3727 = vcombine.low %v2022, %v2025
    %v3729 = vunpack.c.l.s4 1983009808
    %v3730 = vunpack.c.0.s8 %v3729
    %v3731 = vlaneseq
    %v3732 = vshrl.u32 %v3731, 7
    %v3733 = vsub.s32 %v3730, %v3732
    %v3734 = vrot.slane %v3726, %v3733
    %v3736 = vunpack.c.l.s4 1983009808
    %v3737 = vunpack.c.0.s8 %v3736
    %v3738 = vlaneseq
    %v3739 = vshrl.u32 %v3738, 7
    %v3740 = vsub.s32 %v3737, %v3739
    %v3741 = vrot.slane %v3727, %v3740
    %v3742 = vcombine.low %v3734, %v3741
    %v3743 = vcombine.low %v2028, %v3666
    %v3744 = vcombine.low %v2035, %v2038
    %v3746 = vunpack.c.l.s4 1983009808
    %v3747 = vunpack.c.0.s8 %v3746
    %v3748 = vlaneseq
    %v3749 = vshrl.u32 %v3748, 7
    %v3750 = vsub.s32 %v3747, %v3749
    %v3751 = vrot.slane %v3743, %v3750
    %v3753 = vunpack.c.l.s4 1983009808
    %v3754 = vunpack.c.0.s8 %v3753
    %v3755 = vlaneseq
    %v3756 = vshrl.u32 %v3755, 7
    %v3757 = vsub.s32 %v3754, %v3756
    %v3758 = vrot.slane %v3744, %v3757
    %v3759 = vcombine.low %v3751, %v3758
    %v3760 = vcombine.low %v2041, %v2044
    %v3761 = vcombine.low %v3669, %v2051
    %v3763 = vunpack.c.l.s4 1983009808
    %v3764 = vunpack.c.0.s8 %v3763
    %v3765 = vlaneseq
    %v3766 = vshrl.u32 %v3765, 7
    %v3767 = vsub.s32 %v3764, %v3766
    %v3768 = vrot.slane %v3760, %v3767
    %v3770 = vunpack.c.l.s4 1983009808
    %v3771 = vunpack.c.0.s8 %v3770
    %v3772 = vlaneseq
    %v3773 = vshrl.u32 %v3772, 7
    %v3774 = vsub.s32 %v3771, %v3773
    %v3775 = vrot.slane %v3761, %v3774
    %v3776 = vcombine.low %v3768, %v3775
    %v3777 = vcombine.low %v2054, %v2057
    %v3778 = vcombine.low %v2060, %v3672
    %v3780 = vunpack.c.l.s4 1983009808
    %v3781 = vunpack.c.0.s8 %v3780
    %v3782 = vlaneseq
    %v3783 = vshrl.u32 %v3782, 7
    %v3784 = vsub.s32 %v3781, %v3783
    %v3785 = vrot.slane %v3777, %v3784
    %v3787 = vunpack.c.l.s4 1983009808
    %v3788 = vunpack.c.0.s8 %v3787
    %v3789 = vlaneseq
    %v3790 = vshrl.u32 %v3789, 7
    %v3791 = vsub.s32 %v3788, %v3790
    %v3792 = vrot.slane %v3778, %v3791
    %v3793 = vcombine.low %v3785, %v3792
    %v3794 = vcombine.low %v2067, %v2070
    %v3795 = vcombine.low %v2073, %v2076
    %v3797 = vunpack.c.l.s4 1983009808
    %v3798 = vunpack.c.0.s8 %v3797
    %v3799 = vlaneseq
    %v3800 = vshrl.u32 %v3799, 7
    %v3801 = vsub.s32 %v3798, %v3800
    %v3802 = vrot.slane %v3794, %v3801
    %v3804 = vunpack.c.l.s4 1983009808
    %v3805 = vunpack.c.0.s8 %v3804
    %v3806 = vlaneseq
    %v3807 = vshrl.u32 %v3806, 7
    %v3808 = vsub.s32 %v3805, %v3807
    %v3809 = vrot.slane %v3795, %v3808
    %v3810 = vcombine.low %v3802, %v3809
    %v3811 = vcombine.low %v3675, %v2083
    %v3812 = vcombine.low %v2086, %v2089
    %v3814 = vunpack.c.l.s4 1983009808
    %v3815 = vunpack.c.0.s8 %v3814
    %v3816 = vlaneseq
    %v3817 = vshrl.u32 %v3816, 7
    %v3818 = vsub.s32 %v3815, %v3817
    %v3819 = vrot.slane %v3811, %v3818
    %v3821 = vunpack.c.l.s4 1983009808
    %v3822 = vunpack.c.0.s8 %v3821
    %v3823 = vlaneseq
    %v3824 = vshrl.u32 %v3823, 7
    %v3825 = vsub.s32 %v3822, %v3824
    %v3826 = vrot.slane %v3812, %v3825
    %v3827 = vcombine.low %v3819, %v3826
    %v3828 = vcombine.low %v2092, %v3678
    %v3829 = vcombine.low %v2099, %v2102
    %v3831 = vunpack.c.l.s4 1983009808
    %v3832 = vunpack.c.0.s8 %v3831
    %v3833 = vlaneseq
    %v3834 = vshrl.u32 %v3833, 7
    %v3835 = vsub.s32 %v3832, %v3834
    %v3836 = vrot.slane %v3828, %v3835
    %v3838 = vunpack.c.l.s4 1983009808
    %v3839 = vunpack.c.0.s8 %v3838
    %v3840 = vlaneseq
    %v3841 = vshrl.u32 %v3840, 7
    %v3842 = vsub.s32 %v3839, %v3841
    %v3843 = vrot.slane %v3829, %v3842
    %v3844 = vcombine.low %v3836, %v3843
    %v3845 = vcombine.low %v2105, %v2108
    %v3846 = vcombine.low %v3681, %v2115
    %v3848 = vunpack.c.l.s4 1983009808
    %v3849 = vunpack.c.0.s8 %v3848
    %v3850 = vlaneseq
    %v3851 = vshrl.u32 %v3850, 7
    %v3852 = vsub.s32 %v3849, %v3851
    %v3853 = vrot.slane %v3845, %v3852
    %v3855 = vunpack.c.l.s4 1983009808
    %v3856 = vunpack.c.0.s8 %v3855
    %v3857 = vlaneseq
    %v3858 = vshrl.u32 %v3857, 7
    %v3859 = vsub.s32 %v3856, %v3858
    %v3860 = vrot.slane %v3846, %v3859
    %v3861 = vcombine.low %v3853, %v3860
    %v3862 = vcombine.low %v2118, %v2121
    %v3863 = vcombine.low %v2124, %v3684
    %v3865 = vunpack.c.l.s4 1983009808
    %v3866 = vunpack.c.0.s8 %v3865
    %v3867 = vlaneseq
    %v3868 = vshrl.u32 %v3867, 7
    %v3869 = vsub.s32 %v3866, %v3868
    %v3870 = vrot.slane %v3862, %v3869
    %v3872 = vunpack.c.l.s4 1983009808
    %v3873 = vunpack.c.0.s8 %v3872
    %v3874 = vlaneseq
    %v3875 = vshrl.u32 %v3874, 7
    %v3876 = vsub.s32 %v3873, %v3875
    %v3877 = vrot.slane %v3863, %v3876
    %v3878 = vcombine.low %v3870, %v3877
    %v3879 = vcombine.low %v2131, %v2134
    %v3880 = vcombine.low %v2137, %v2140
    %v3882 = vunpack.c.l.s4 1983009808
    %v3883 = vunpack.c.0.s8 %v3882
    %v3884 = vlaneseq
    %v3885 = vshrl.u32 %v3884, 7
    %v3886 = vsub.s32 %v3883, %v3885
    %v3887 = vrot.slane %v3879, %v3886
    %v3889 = vunpack.c.l.s4 1983009808
    %v3890 = vunpack.c.0.s8 %v3889
    %v3891 = vlaneseq
    %v3892 = vshrl.u32 %v3891, 7
    %v3893 = vsub.s32 %v3890, %v3892
    %v3894 = vrot.slane %v3880, %v3893
    %v3895 = vcombine.low %v3887, %v3894
    %v3896 = vcombine.low %v3687, %v2147
    %v3897 = vcombine.low %v2150, %v2153
    %v3899 = vunpack.c.l.s4 1983009808
    %v3900 = vunpack.c.0.s8 %v3899
    %v3901 = vlaneseq
    %v3902 = vshrl.u32 %v3901, 7
    %v3903 = vsub.s32 %v3900, %v3902
    %v3904 = vrot.slane %v3896, %v3903
    %v3906 = vunpack.c.l.s4 1983009808
    %v3907 = vunpack.c.0.s8 %v3906
    %v3908 = vlaneseq
    %v3909 = vshrl.u32 %v3908, 7
    %v3910 = vsub.s32 %v3907, %v3909
    %v3911 = vrot.slane %v3897, %v3910
    %v3912 = vcombine.low %v3904, %v3911
    %v3913 = vcombine.low %v2156, %v3690
    %v3914 = vcombine.low %v2163, %v2166
    %v3916 = vunpack.c.l.s4 1983009808
    %v3917 = vunpack.c.0.s8 %v3916
    %v3918 = vlaneseq
    %v3919 = vshrl.u32 %v3918, 7
    %v3920 = vsub.s32 %v3917, %v3919
    %v3921 = vrot.slane %v3913, %v3920
    %v3923 = vunpack.c.l.s4 1983009808
    %v3924 = vunpack.c.0.s8 %v3923
    %v3925 = vlaneseq
    %v3926 = vshrl.u32 %v3925, 7
    %v3927 = vsub.s32 %v3924, %v3926
    %v3928 = vrot.slane %v3914, %v3927
    %v3929 = vcombine.low %v3921, %v3928
    %v3930 = vcombine.low %v2169, %v2172
    %v3931 = vcombine.low %v3693, %v2179
    %v3933 = vunpack.c.l.s4 1983009808
    %v3934 = vunpack.c.0.s8 %v3933
    %v3935 = vlaneseq
    %v3936 = vshrl.u32 %v3935, 7
    %v3937 = vsub.s32 %v3934, %v3936
    %v3938 = vrot.slane %v3930, %v3937
    %v3940 = vunpack.c.l.s4 1983009808
    %v3941 = vunpack.c.0.s8 %v3940
    %v3942 = vlaneseq
    %v3943 = vshrl.u32 %v3942, 7
    %v3944 = vsub.s32 %v3941, %v3943
    %v3945 = vrot.slane %v3931, %v3944
    %v3946 = vcombine.low %v3938, %v3945
    %v3947 = vcombine.low %v2182, %v2185
    %v3948 = vcombine.low %v2188, %v3696
    %v3950 = vunpack.c.l.s4 1983009808
    %v3951 = vunpack.c.0.s8 %v3950
    %v3952 = vlaneseq
    %v3953 = vshrl.u32 %v3952, 7
    %v3954 = vsub.s32 %v3951, %v3953
    %v3955 = vrot.slane %v3947, %v3954
    %v3957 = vunpack.c.l.s4 1983009808
    %v3958 = vunpack.c.0.s8 %v3957
    %v3959 = vlaneseq
    %v3960 = vshrl.u32 %v3959, 7
    %v3961 = vsub.s32 %v3958, %v3960
    %v3962 = vrot.slane %v3948, %v3961
    %v3963 = vcombine.low %v3955, %v3962
    %v3964 = vcombine.low %v2195, %v2198
    %v3965 = vcombine.low %v2201, %v2204
    %v3967 = vunpack.c.l.s4 1983009808
    %v3968 = vunpack.c.0.s8 %v3967
    %v3969 = vlaneseq
    %v3970 = vshrl.u32 %v3969, 7
    %v3971 = vsub.s32 %v3968, %v3970
    %v3972 = vrot.slane %v3964, %v3971
    %v3974 = vunpack.c.l.s4 1983009808
    %v3975 = vunpack.c.0.s8 %v3974
    %v3976 = vlaneseq
    %v3977 = vshrl.u32 %v3976, 7
    %v3978 = vsub.s32 %v3975, %v3977
    %v3979 = vrot.slane %v3965, %v3978
    %v3980 = vcombine.low %v3972, %v3979
    %v3981 = vcombine.low %v3699, %v2211
    %v3982 = vcombine.low %v2214, %v2217
    %v3984 = vunpack.c.l.s4 1983009808
    %v3985 = vunpack.c.0.s8 %v3984
    %v3986 = vlaneseq
    %v3987 = vshrl.u32 %v3986, 7
    %v3988 = vsub.s32 %v3985, %v3987
    %v3989 = vrot.slane %v3981, %v3988
    %v3991 = vunpack.c.l.s4 1983009808
    %v3992 = vunpack.c.0.s8 %v3991
    %v3993 = vlaneseq
    %v3994 = vshrl.u32 %v3993, 7
    %v3995 = vsub.s32 %v3992, %v3994
    %v3996 = vrot.slane %v3982, %v3995
    %v3997 = vcombine.low %v3989, %v3996
    %v3998 = vcombine.low %v2220, %v3702
    %v3999 = vcombine.low %v2227, %v2230
    %v4001 = vunpack.c.l.s4 1983009808
    %v4002 = vunpack.c.0.s8 %v4001
    %v4003 = vlaneseq
    %v4004 = vshrl.u32 %v4003, 7
    %v4005 = vsub.s32 %v4002, %v4004
    %v4006 = vrot.slane %v3998, %v4005
    %v4008 = vunpack.c.l.s4 1983009808
    %v4009 = vunpack.c.0.s8 %v4008
    %v4010 = vlaneseq
    %v4011 = vshrl.u32 %v4010, 7
    %v4012 = vsub.s32 %v4009, %v4011
    %v4013 = vrot.slane %v3999, %v4012
    %v4014 = vcombine.low %v4006, %v4013
    %v4015 = vcombine.low %v2233, %v2236
    %v4016 = vcombine.low %v3705, %v2243
    %v4018 = vunpack.c.l.s4 1983009808
    %v4019 = vunpack.c.0.s8 %v4018
    %v4020 = vlaneseq
    %v4021 = vshrl.u32 %v4020, 7
    %v4022 = vsub.s32 %v4019, %v4021
    %v4023 = vrot.slane %v4015, %v4022
    %v4025 = vunpack.c.l.s4 1983009808
    %v4026 = vunpack.c.0.s8 %v4025
    %v4027 = vlaneseq
    %v4028 = vshrl.u32 %v4027, 7
    %v4029 = vsub.s32 %v4026, %v4028
    %v4030 = vrot.slane %v4016, %v4029
    %v4031 = vcombine.low %v4023, %v4030
    %v4032 = vcombine.low %v2246, %v2249
    %v4033 = vcombine.low %v2252, %v3708
    %v4035 = vunpack.c.l.s4 1983009808
    %v4036 = vunpack.c.0.s8 %v4035
    %v4037 = vlaneseq
    %v4038 = vshrl.u32 %v4037, 7
    %v4039 = vsub.s32 %v4036, %v4038
    %v4040 = vrot.slane %v4032, %v4039
    %v4042 = vunpack.c.l.s4 1983009808
    %v4043 = vunpack.c.0.s8 %v4042
    %v4044 = vlaneseq
    %v4045 = vshrl.u32 %v4044, 7
    %v4046 = vsub.s32 %v4043, %v4045
    %v4047 = vrot.slane %v4033, %v4046
    %v4048 = vcombine.low %v4040, %v4047
    %v4069 = vpack.c.bf16 %v3742, %v3725
    %v4070 = vpack.c.bf16 %v3776, %v3759
    %v4071 = vpack.c.bf16 %v3810, %v3793
    %v4072 = vpack.c.bf16 %v3844, %v3827
    %v4073 = vpack.c.bf16 %v3878, %v3861
    %v4074 = vpack.c.bf16 %v3912, %v3895
    %v4075 = vpack.c.bf16 %v3946, %v3929
    %v4076 = vpack.c.bf16 %v3980, %v3963
    %v4077 = vpack.c.bf16 %v4014, %v3997
    %v4078 = vpack.c.bf16 %v4048, %v4031
    %s4079 = scalar_lea.vmem [#allocation2], 96
    %v4080 = vld [vmem:[%s4079] sm:$0xf]
    %v4081 = vld [vmem:[%s4079 + $0x4] sm:$0xf]
    %v4082 = vld [vmem:[%s4079 + $0x8] sm:$0xf]
    %v4083 = vld [vmem:[%s4079 + $0xc] sm:$0xf]
    %v4084 = vld [vmem:[%s4079 + $0x10] sm:$0xf]
    %v4085 = vld [vmem:[%s4079 + $0x14] sm:$0xf]
    %v4086 = vld [vmem:[%s4079 + $0x18] sm:$0xf]
    %v4087 = vld [vmem:[%s4079 + $0x1c] sm:$0xf]
    %v4096 = vunpack.c.l.b16 %v4080
    %v4097 = vunpack.c.l.b16 %v4081
    %v4098 = vunpack.c.l.b16 %v4082
    %v4099 = vunpack.c.l.b16 %v4083
    %v4100 = vunpack.c.l.b16 %v4084
    %v4101 = vunpack.c.l.b16 %v4085
    %v4102 = vunpack.c.l.b16 %v4086
    %v4103 = vunpack.c.l.b16 %v4087
    %v4104 = vpack.c.b16 %v4097, %v4096
    %v4105 = vpack.c.b16 %v4099, %v4098
    %v4106 = vpack.c.b16 %v4101, %v4100
    %v4107 = vpack.c.b16 %v4103, %v4102
    %v4113 = vsel %vm2656, %v4069, 0
    %v4116 = vsel %vm2656, %v4070, 0
    %v4119 = vsel %vm2656, %v4071, 0
    %v4122 = vsel %vm2656, %v4072, 0
    %v4125 = vsel %vm2656, %v4073, 0
    %v4128 = vsel %vm2656, %v4074, 0
    %v4131 = vsel %vm2656, %v4075, 0
    %v4134 = vsel %vm2656, %v4076, 0
    %v4137 = vsel %vm2656, %v4077, 0
    %v4140 = vsel %vm2656, %v4078, 0
    %4142 = vmatprep.subr.bf16.mxu0 0
    %4143 = vmatpush1.bf16.msra.mxu0 %v4104
    %4144 = vmatprep.subr.bf16.mxu0 0
    %4145 = vmatpush1.bf16.msra.mxu0 %v4105
    %4146 = vmatprep.subr.bf16.mxu0 0
    %4147 = vmatpush1.bf16.msra.mxu0 %v4106
    %4148 = vmatprep.subr.bf16.mxu0 0
    %4149 = vmatpush1.bf16.msra.mxu0 %v4107
    %4150 = vmatprep.subr.bf16.mxu0 0
    %4151 = vmatpush1.bf16.msra.mxu0 0
    %4152 = vmatprep.subr.bf16.mxu0 0
    %4153 = vmatpush1.bf16.msra.mxu0 0
    %4154 = vmatprep.subr.bf16.mxu0 0
    %4155 = vmatpush1.bf16.msra.mxu0 0
    %4156 = vmatprep.subr.bf16.mxu0 0
    %4157 = vmatpush1.bf16.msra.mxu0 0
    %4158 = vmatprep.subr.bf16.mxu0 0
    %4159 = vmatpush1.bf16.msra.mxu0 0
    %4160 = vmatprep.subr.bf16.mxu0 0
    %4161 = vmatpush1.bf16.msra.mxu0 0
    %4162 = vmatprep.subr.bf16.mxu0 0
    %4163 = vmatpush1.bf16.msra.mxu0 0
    %4164 = vmatprep.subr.bf16.mxu0 0
    %4165 = vmatpush1.bf16.msra.mxu0 0
    %4166 = vmatprep.subr.bf16.mxu0 0
    %4167 = vmatpush1.bf16.msra.mxu0 0
    %4168 = vmatprep.subr.bf16.mxu0 0
    %4169 = vmatpush1.bf16.msra.mxu0 0
    %4170 = vmatprep.subr.bf16.mxu0 0
    %4171 = vmatpush1.bf16.msra.mxu0 0
    %4172 = vmatprep.subr.bf16.mxu0 0
    %4173 = vmatpush1.bf16.msra.mxu0 0
    %4174 = vmatprep.mubr.bf16.mxu0 0
    %4175 = vmatmul.mubr.bf16.gmra.mrb[0].mxu0 %v4113
    %v4176 = vpop.f32.mrb[0].mxu0
    %v4177 = vadd.f32 0.0, %v4176
    %v4178 = vpop.f32.mrb[0].mxu0
    %v4179 = vpop.f32.mrb[0].mxu0
    %v4180 = vadd.f32 0.0, %v4179
    %v4181 = vpop.f32.mrb[0].mxu0
    %4182 = vmatprep.mubr.bf16.mxu0 0
    %4183 = vmatmul.mubr.bf16.gmra.mrb[0].mxu0 %v4116
    %v4184 = vpop.f32.mrb[0].mxu0
    %v4185 = vadd.f32 0.0, %v4184
    %v4186 = vpop.f32.mrb[0].mxu0
    %v4187 = vpop.f32.mrb[0].mxu0
    %v4188 = vadd.f32 0.0, %v4187
    %v4189 = vpop.f32.mrb[0].mxu0
    %4190 = vmatprep.mubr.bf16.mxu0 0
    %4191 = vmatmul.mubr.bf16.gmra.mrb[0].mxu0 %v4119
    %v4192 = vpop.f32.mrb[0].mxu0
    %v4193 = vadd.f32 0.0, %v4192
    %v4194 = vpop.f32.mrb[0].mxu0
    %v4195 = vpop.f32.mrb[0].mxu0
    %v4196 = vadd.f32 0.0, %v4195
    %v4197 = vpop.f32.mrb[0].mxu0
    %4198 = vmatprep.mubr.bf16.mxu0 0
    %4199 = vmatmul.mubr.bf16.gmra.mrb[0].mxu0 %v4122
    %v4200 = vpop.f32.mrb[0].mxu0
    %v4201 = vadd.f32 0.0, %v4200
    %v4202 = vpop.f32.mrb[0].mxu0
    %v4203 = vpop.f32.mrb[0].mxu0
    %v4204 = vadd.f32 0.0, %v4203
    %v4205 = vpop.f32.mrb[0].mxu0
    %4206 = vmatprep.mubr.bf16.mxu0 0
    %4207 = vmatmul.mubr.bf16.gmra.mrb[0].mxu0 %v4125
    %v4208 = vpop.f32.mrb[0].mxu0
    %v4209 = vadd.f32 0.0, %v4208
    %v4210 = vpop.f32.mrb[0].mxu0
    %v4211 = vpop.f32.mrb[0].mxu0
    %v4212 = vadd.f32 0.0, %v4211
    %v4213 = vpop.f32.mrb[0].mxu0
    %4214 = vmatprep.mubr.bf16.mxu0 0
    %4215 = vmatmul.mubr.bf16.gmra.mrb[0].mxu0 %v4128
    %v4216 = vpop.f32.mrb[0].mxu0
    %v4217 = vadd.f32 0.0, %v4216
    %v4218 = vpop.f32.mrb[0].mxu0
    %v4219 = vpop.f32.mrb[0].mxu0
    %v4220 = vadd.f32 0.0, %v4219
    %v4221 = vpop.f32.mrb[0].mxu0
    %4222 = vmatprep.mubr.bf16.mxu0 0
    %4223 = vmatmul.mubr.bf16.gmra.mrb[0].mxu0 %v4131
    %v4224 = vpop.f32.mrb[0].mxu0
    %v4225 = vadd.f32 0.0, %v4224
    %v4226 = vpop.f32.mrb[0].mxu0
    %v4227 = vpop.f32.mrb[0].mxu0
    %v4228 = vadd.f32 0.0, %v4227
    %v4229 = vpop.f32.mrb[0].mxu0
    %4230 = vmatprep.mubr.bf16.mxu0 0
    %4231 = vmatmul.mubr.bf16.gmra.mrb[0].mxu0 %v4134
    %v4232 = vpop.f32.mrb[0].mxu0
    %v4233 = vadd.f32 0.0, %v4232
    %v4234 = vpop.f32.mrb[0].mxu0
    %v4235 = vpop.f32.mrb[0].mxu0
    %v4236 = vadd.f32 0.0, %v4235
    %v4237 = vpop.f32.mrb[0].mxu0
    %4238 = vmatprep.mubr.bf16.mxu0 0
    %4239 = vmatmul.mubr.bf16.gmra.mrb[0].mxu0 %v4137
    %v4240 = vpop.f32.mrb[0].mxu0
    %v4241 = vadd.f32 0.0, %v4240
    %v4242 = vpop.f32.mrb[0].mxu0
    %v4243 = vpop.f32.mrb[0].mxu0
    %v4244 = vadd.f32 0.0, %v4243
    %v4245 = vpop.f32.mrb[0].mxu0
    %4246 = vmatprep.mubr.bf16.mxu0 0
    %4247 = vmatmul.mubr.bf16.gmra.mrb[0].mxu0 %v4140
    %v4248 = vpop.f32.mrb[0].mxu0
    %v4249 = vadd.f32 0.0, %v4248
    %v4250 = vpop.f32.mrb[0].mxu0
    %v4251 = vpop.f32.mrb[0].mxu0
    %v4252 = vadd.f32 0.0, %v4251
    %v4253 = vpop.f32.mrb[0].mxu0
    %4254 = vdwg.mxu0
    %v4255 = vadd.f32 %v3513, %v4177
    %v4256 = vadd.f32 %v3514, %v4180
    %v4257 = vadd.f32 %v3515, %v4185
    %v4258 = vadd.f32 %v3516, %v4188
    %v4259 = vadd.f32 %v3517, %v4193
    %v4260 = vadd.f32 %v3518, %v4196
    %v4261 = vadd.f32 %v3519, %v4201
    %v4262 = vadd.f32 %v3520, %v4204
    %v4263 = vadd.f32 %v3521, %v4209
    %v4264 = vadd.f32 %v3522, %v4212
    %v4265 = vadd.f32 %v3523, %v4217
    %v4266 = vadd.f32 %v3524, %v4220
    %v4267 = vadd.f32 %v3525, %v4225
    %v4268 = vadd.f32 %v3526, %v4228
    %v4269 = vadd.f32 %v3527, %v4233
    %v4270 = vadd.f32 %v3528, %v4236
    %v4271 = vadd.f32 %v3529, %v4241
    %v4272 = vadd.f32 %v3530, %v4244
    %v4273 = vadd.f32 %v3531, %v4249
    %v4274 = vadd.f32 %v3532, %v4252
    %v4275 = vcombine.low %v1236, %v1975
    %v4277 = vunpack.c.l.s4 1983009808
    %v4278 = vunpack.c.0.s8 %v4277
    %v4279 = vlaneseq
    %v4280 = vshrl.u32 %v4279, 7
    %v4281 = vsub.s32 %v4278, %v4280
    %v4282 = vrot.slane %v4275, %v4281
    %v4283 = vcombine.low %v1612, %v4282
    %v4284 = vcombine.low %v3540, %v1251
    %v4286 = vunpack.c.l.s4 1983009808
    %v4287 = vunpack.c.0.s8 %v4286
    %v4288 = vlaneseq
    %v4289 = vshrl.u32 %v4288, 7
    %v4290 = vsub.s32 %v4287, %v4289
    %v4291 = vrot.slane %v4284, %v4290
    %v4292 = vcombine.low %v4291, %v1639
    %v4293 = vcombine.low %v1976, %v3548
    %v4295 = vunpack.c.l.s4 1983009808
    %v4296 = vunpack.c.0.s8 %v4295
    %v4297 = vlaneseq
    %v4298 = vshrl.u32 %v4297, 7
    %v4299 = vsub.s32 %v4296, %v4298
    %v4300 = vrot.slane %v4293, %v4299
    %v4301 = vcombine.low %v4300, %v1656
    %v4302 = vcombine.low %v1284, %v1977
    %v4303 = vcombine.low %v3556, %v1299
    %v4305 = vunpack.c.l.s4 1983009808
    %v4306 = vunpack.c.0.s8 %v4305
    %v4307 = vlaneseq
    %v4308 = vshrl.u32 %v4307, 7
    %v4309 = vsub.s32 %v4306, %v4308
    %v4310 = vrot.slane %v4302, %v4309
    %v4312 = vunpack.c.l.s4 1983009808
    %v4313 = vunpack.c.0.s8 %v4312
    %v4314 = vlaneseq
    %v4315 = vshrl.u32 %v4314, 7
    %v4316 = vsub.s32 %v4313, %v4315
    %v4317 = vrot.slane %v4303, %v4316
    %v4318 = vcombine.low %v4310, %v4317
    %v4319 = vcombine.low %v1978, %v3564
    %v4321 = vunpack.c.l.s4 1983009808
    %v4322 = vunpack.c.0.s8 %v4321
    %v4323 = vlaneseq
    %v4324 = vshrl.u32 %v4323, 7
    %v4325 = vsub.s32 %v4322, %v4324
    %v4326 = vrot.slane %v4319, %v4325
    %v4327 = vcombine.low %v1680, %v4326
    %v4328 = vcombine.low %v1332, %v1979
    %v4330 = vunpack.c.l.s4 1983009808
    %v4331 = vunpack.c.0.s8 %v4330
    %v4332 = vlaneseq
    %v4333 = vshrl.u32 %v4332, 7
    %v4334 = vsub.s32 %v4331, %v4333
    %v4335 = vrot.slane %v4328, %v4334
    %v4336 = vcombine.low %v1697, %v4335
    %v4337 = vcombine.low %v3572, %v1347
    %v4339 = vunpack.c.l.s4 1983009808
    %v4340 = vunpack.c.0.s8 %v4339
    %v4341 = vlaneseq
    %v4342 = vshrl.u32 %v4341, 7
    %v4343 = vsub.s32 %v4340, %v4342
    %v4344 = vrot.slane %v4337, %v4343
    %v4345 = vcombine.low %v4344, %v1724
    %v4346 = vcombine.low %v1980, %v3580
    %v4348 = vunpack.c.l.s4 1983009808
    %v4349 = vunpack.c.0.s8 %v4348
    %v4350 = vlaneseq
    %v4351 = vshrl.u32 %v4350, 7
    %v4352 = vsub.s32 %v4349, %v4351
    %v4353 = vrot.slane %v4346, %v4352
    %v4354 = vcombine.low %v4353, %v1741
    %v4355 = vcombine.low %v1380, %v1981
    %v4356 = vcombine.low %v3588, %v1395
    %v4358 = vunpack.c.l.s4 1983009808
    %v4359 = vunpack.c.0.s8 %v4358
    %v4360 = vlaneseq
    %v4361 = vshrl.u32 %v4360, 7
    %v4362 = vsub.s32 %v4359, %v4361
    %v4363 = vrot.slane %v4355, %v4362
    %v4365 = vunpack.c.l.s4 1983009808
    %v4366 = vunpack.c.0.s8 %v4365
    %v4367 = vlaneseq
    %v4368 = vshrl.u32 %v4367, 7
    %v4369 = vsub.s32 %v4366, %v4368
    %v4370 = vrot.slane %v4356, %v4369
    %v4371 = vcombine.low %v4363, %v4370
    %v4372 = vcombine.low %v1982, %v3596
    %v4374 = vunpack.c.l.s4 1983009808
    %v4375 = vunpack.c.0.s8 %v4374
    %v4376 = vlaneseq
    %v4377 = vshrl.u32 %v4376, 7
    %v4378 = vsub.s32 %v4375, %v4377
    %v4379 = vrot.slane %v4372, %v4378
    %v4380 = vcombine.low %v1765, %v4379
    %v4381 = vcombine.low %v1428, %v1983
    %v4383 = vunpack.c.l.s4 1983009808
    %v4384 = vunpack.c.0.s8 %v4383
    %v4385 = vlaneseq
    %v4386 = vshrl.u32 %v4385, 7
    %v4387 = vsub.s32 %v4384, %v4386
    %v4388 = vrot.slane %v4381, %v4387
    %v4389 = vcombine.low %v1782, %v4388
    %v4390 = vcombine.low %v3604, %v1443
    %v4392 = vunpack.c.l.s4 1983009808
    %v4393 = vunpack.c.0.s8 %v4392
    %v4394 = vlaneseq
    %v4395 = vshrl.u32 %v4394, 7
    %v4396 = vsub.s32 %v4393, %v4395
    %v4397 = vrot.slane %v4390, %v4396
    %v4398 = vcombine.low %v4397, %v1809
    %v4399 = vcombine.low %v1984, %v3612
    %v4401 = vunpack.c.l.s4 1983009808
    %v4402 = vunpack.c.0.s8 %v4401
    %v4403 = vlaneseq
    %v4404 = vshrl.u32 %v4403, 7
    %v4405 = vsub.s32 %v4402, %v4404
    %v4406 = vrot.slane %v4399, %v4405
    %v4407 = vcombine.low %v4406, %v1826
    %v4408 = vcombine.low %v1476, %v1985
    %v4409 = vcombine.low %v3620, %v1491
    %v4411 = vunpack.c.l.s4 1983009808
    %v4412 = vunpack.c.0.s8 %v4411
    %v4413 = vlaneseq
    %v4414 = vshrl.u32 %v4413, 7
    %v4415 = vsub.s32 %v4412, %v4414
    %v4416 = vrot.slane %v4408, %v4415
    %v4418 = vunpack.c.l.s4 1983009808
    %v4419 = vunpack.c.0.s8 %v4418
    %v4420 = vlaneseq
    %v4421 = vshrl.u32 %v4420, 7
    %v4422 = vsub.s32 %v4419, %v4421
    %v4423 = vrot.slane %v4409, %v4422
    %v4424 = vcombine.low %v4416, %v4423
    %v4425 = vcombine.low %v1986, %v3628
    %v4427 = vunpack.c.l.s4 1983009808
    %v4428 = vunpack.c.0.s8 %v4427
    %v4429 = vlaneseq
    %v4430 = vshrl.u32 %v4429, 7
    %v4431 = vsub.s32 %v4428, %v4430
    %v4432 = vrot.slane %v4425, %v4431
    %v4433 = vcombine.low %v1850, %v4432
    %v4434 = vcombine.low %v1524, %v1987
    %v4436 = vunpack.c.l.s4 1983009808
    %v4437 = vunpack.c.0.s8 %v4436
    %v4438 = vlaneseq
    %v4439 = vshrl.u32 %v4438, 7
    %v4440 = vsub.s32 %v4437, %v4439
    %v4441 = vrot.slane %v4434, %v4440
    %v4442 = vcombine.low %v1867, %v4441
    %v4443 = vcombine.low %v3636, %v1539
    %v4445 = vunpack.c.l.s4 1983009808
    %v4446 = vunpack.c.0.s8 %v4445
    %v4447 = vlaneseq
    %v4448 = vshrl.u32 %v4447, 7
    %v4449 = vsub.s32 %v4446, %v4448
    %v4450 = vrot.slane %v4443, %v4449
    %v4451 = vcombine.low %v4450, %v1894
    %v4452 = vcombine.low %v1988, %v3644
    %v4454 = vunpack.c.l.s4 1983009808
    %v4455 = vunpack.c.0.s8 %v4454
    %v4456 = vlaneseq
    %v4457 = vshrl.u32 %v4456, 7
    %v4458 = vsub.s32 %v4455, %v4457
    %v4459 = vrot.slane %v4452, %v4458
    %v4460 = vcombine.low %v4459, %v1911
    %v4461 = vcombine.low %v1572, %v1989
    %v4462 = vcombine.low %v3652, %v1587
    %v4464 = vunpack.c.l.s4 1983009808
    %v4465 = vunpack.c.0.s8 %v4464
    %v4466 = vlaneseq
    %v4467 = vshrl.u32 %v4466, 7
    %v4468 = vsub.s32 %v4465, %v4467
    %v4469 = vrot.slane %v4461, %v4468
    %v4471 = vunpack.c.l.s4 1983009808
    %v4472 = vunpack.c.0.s8 %v4471
    %v4473 = vlaneseq
    %v4474 = vshrl.u32 %v4473, 7
    %v4475 = vsub.s32 %v4472, %v4474
    %v4476 = vrot.slane %v4462, %v4475
    %v4477 = vcombine.low %v4469, %v4476
    %v4478 = vcombine.low %v1990, %v3660
    %v4480 = vunpack.c.l.s4 1983009808
    %v4481 = vunpack.c.0.s8 %v4480
    %v4482 = vlaneseq
    %v4483 = vshrl.u32 %v4482, 7
    %v4484 = vsub.s32 %v4481, %v4483
    %v4485 = vrot.slane %v4478, %v4484
    %v4486 = vcombine.low %v1935, %v4485
    %v4507 = vpack.c.bf16 %v4292, %v4283
    %v4508 = vpack.c.bf16 %v4318, %v4301
    %v4509 = vpack.c.bf16 %v4336, %v4327
    %v4510 = vpack.c.bf16 %v4354, %v4345
    %v4511 = vpack.c.bf16 %v4380, %v4371
    %v4512 = vpack.c.bf16 %v4398, %v4389
    %v4513 = vpack.c.bf16 %v4424, %v4407
    %v4514 = vpack.c.bf16 %v4442, %v4433
    %v4515 = vpack.c.bf16 %v4460, %v4451
    %v4516 = vpack.c.bf16 %v4486, %v4477
    %s4517 = scalar_lea.vmem [#allocation2], 128
    %v4518 = vld [vmem:[%s4517] sm:$0xf]
    %v4519 = vld [vmem:[%s4517 + $0x4] sm:$0xf]
    %v4520 = vld [vmem:[%s4517 + $0x8] sm:$0xf]
    %v4521 = vld [vmem:[%s4517 + $0xc] sm:$0xf]
    %v4522 = vld [vmem:[%s4517 + $0x10] sm:$0xf]
    %v4523 = vld [vmem:[%s4517 + $0x14] sm:$0xf]
    %v4524 = vld [vmem:[%s4517 + $0x18] sm:$0xf]
    %v4525 = vld [vmem:[%s4517 + $0x1c] sm:$0xf]
    %v4534 = vunpack.c.l.b16 %v4518
    %v4535 = vunpack.c.l.b16 %v4519
    %v4536 = vunpack.c.l.b16 %v4520
    %v4537 = vunpack.c.l.b16 %v4521
    %v4538 = vunpack.c.l.b16 %v4522
    %v4539 = vunpack.c.l.b16 %v4523
    %v4540 = vunpack.c.l.b16 %v4524
    %v4541 = vunpack.c.l.b16 %v4525
    %v4542 = vpack.c.b16 %v4535, %v4534
    %v4543 = vpack.c.b16 %v4537, %v4536
    %v4544 = vpack.c.b16 %v4539, %v4538
    %v4545 = vpack.c.b16 %v4541, %v4540
    %v4551 = vsel %vm2656, %v4507, 0
    %v4554 = vsel %vm2656, %v4508, 0
    %v4557 = vsel %vm2656, %v4509, 0
    %v4560 = vsel %vm2656, %v4510, 0
    %v4563 = vsel %vm2656, %v4511, 0
    %v4566 = vsel %vm2656, %v4512, 0
    %v4569 = vsel %vm2656, %v4513, 0
    %v4572 = vsel %vm2656, %v4514, 0
    %v4575 = vsel %vm2656, %v4515, 0
    %v4578 = vsel %vm2656, %v4516, 0
    %4580 = vmatprep.subr.bf16.mxu0 0
    %4581 = vmatpush1.bf16.msra.mxu0 %v4542
    %4582 = vmatprep.subr.bf16.mxu0 0
    %4583 = vmatpush1.bf16.msra.mxu0 %v4543
    %4584 = vmatprep.subr.bf16.mxu0 0
    %4585 = vmatpush1.bf16.msra.mxu0 %v4544
    %4586 = vmatprep.subr.bf16.mxu0 0
    %4587 = vmatpush1.bf16.msra.mxu0 %v4545
    %4588 = vmatprep.subr.bf16.mxu0 0
    %4589 = vmatpush1.bf16.msra.mxu0 0
    %4590 = vmatprep.subr.bf16.mxu0 0
    %4591 = vmatpush1.bf16.msra.mxu0 0
    %4592 = vmatprep.subr.bf16.mxu0 0
    %4593 = vmatpush1.bf16.msra.mxu0 0
    %4594 = vmatprep.subr.bf16.mxu0 0
    %4595 = vmatpush1.bf16.msra.mxu0 0
    %4596 = vmatprep.subr.bf16.mxu0 0
    %4597 = vmatpush1.bf16.msra.mxu0 0
    %4598 = vmatprep.subr.bf16.mxu0 0
    %4599 = vmatpush1.bf16.msra.mxu0 0
    %4600 = vmatprep.subr.bf16.mxu0 0
    %4601 = vmatpush1.bf16.msra.mxu0 0
    %4602 = vmatprep.subr.bf16.mxu0 0
    %4603 = vmatpush1.bf16.msra.mxu0 0
    %4604 = vmatprep.subr.bf16.mxu0 0
    %4605 = vmatpush1.bf16.msra.mxu0 0
    %4606 = vmatprep.subr.bf16.mxu0 0
    %4607 = vmatpush1.bf16.msra.mxu0 0
    %4608 = vmatprep.subr.bf16.mxu0 0
    %4609 = vmatpush1.bf16.msra.mxu0 0
    %4610 = vmatprep.subr.bf16.mxu0 0
    %4611 = vmatpush1.bf16.msra.mxu0 0
    %4612 = vmatprep.mubr.bf16.mxu0 0
    %4613 = vmatmul.mubr.bf16.gmra.mrb[0].mxu0 %v4551
    %v4614 = vpop.f32.mrb[0].mxu0
    %v4615 = vadd.f32 0.0, %v4614
    %v4616 = vpop.f32.mrb[0].mxu0
    %v4617 = vpop.f32.mrb[0].mxu0
    %v4618 = vadd.f32 0.0, %v4617
    %v4619 = vpop.f32.mrb[0].mxu0
    %4620 = vmatprep.mubr.bf16.mxu0 0
    %4621 = vmatmul.mubr.bf16.gmra.mrb[0].mxu0 %v4554
    %v4622 = vpop.f32.mrb[0].mxu0
    %v4623 = vadd.f32 0.0, %v4622
    %v4624 = vpop.f32.mrb[0].mxu0
    %v4625 = vpop.f32.mrb[0].mxu0
    %v4626 = vadd.f32 0.0, %v4625
    %v4627 = vpop.f32.mrb[0].mxu0
    %4628 = vmatprep.mubr.bf16.mxu0 0
    %4629 = vmatmul.mubr.bf16.gmra.mrb[0].mxu0 %v4557
    %v4630 = vpop.f32.mrb[0].mxu0
    %v4631 = vadd.f32 0.0, %v4630
    %v4632 = vpop.f32.mrb[0].mxu0
    %v4633 = vpop.f32.mrb[0].mxu0
    %v4634 = vadd.f32 0.0, %v4633
    %v4635 = vpop.f32.mrb[0].mxu0
    %4636 = vmatprep.mubr.bf16.mxu0 0
    %4637 = vmatmul.mubr.bf16.gmra.mrb[0].mxu0 %v4560
    %v4638 = vpop.f32.mrb[0].mxu0
    %v4639 = vadd.f32 0.0, %v4638
    %v4640 = vpop.f32.mrb[0].mxu0
    %v4641 = vpop.f32.mrb[0].mxu0
    %v4642 = vadd.f32 0.0, %v4641
    %v4643 = vpop.f32.mrb[0].mxu0
    %4644 = vmatprep.mubr.bf16.mxu0 0
    %4645 = vmatmul.mubr.bf16.gmra.mrb[0].mxu0 %v4563
    %v4646 = vpop.f32.mrb[0].mxu0
    %v4647 = vadd.f32 0.0, %v4646
    %v4648 = vpop.f32.mrb[0].mxu0
    %v4649 = vpop.f32.mrb[0].mxu0
    %v4650 = vadd.f32 0.0, %v4649
    %v4651 = vpop.f32.mrb[0].mxu0
    %4652 = vmatprep.mubr.bf16.mxu0 0
    %4653 = vmatmul.mubr.bf16.gmra.mrb[0].mxu0 %v4566
    %v4654 = vpop.f32.mrb[0].mxu0
    %v4655 = vadd.f32 0.0, %v4654
    %v4656 = vpop.f32.mrb[0].mxu0
    %v4657 = vpop.f32.mrb[0].mxu0
    %v4658 = vadd.f32 0.0, %v4657
    %v4659 = vpop.f32.mrb[0].mxu0
    %4660 = vmatprep.mubr.bf16.mxu0 0
    %4661 = vmatmul.mubr.bf16.gmra.mrb[0].mxu0 %v4569
    %v4662 = vpop.f32.mrb[0].mxu0
    %v4663 = vadd.f32 0.0, %v4662
    %v4664 = vpop.f32.mrb[0].mxu0
    %v4665 = vpop.f32.mrb[0].mxu0
    %v4666 = vadd.f32 0.0, %v4665
    %v4667 = vpop.f32.mrb[0].mxu0
    %4668 = vmatprep.mubr.bf16.mxu0 0
    %4669 = vmatmul.mubr.bf16.gmra.mrb[0].mxu0 %v4572
    %v4670 = vpop.f32.mrb[0].mxu0
    %v4671 = vadd.f32 0.0, %v4670
    %v4672 = vpop.f32.mrb[0].mxu0
    %v4673 = vpop.f32.mrb[0].mxu0
    %v4674 = vadd.f32 0.0, %v4673
    %v4675 = vpop.f32.mrb[0].mxu0
    %4676 = vmatprep.mubr.bf16.mxu0 0
    %4677 = vmatmul.mubr.bf16.gmra.mrb[0].mxu0 %v4575
    %v4678 = vpop.f32.mrb[0].mxu0
    %v4679 = vadd.f32 0.0, %v4678
    %v4680 = vpop.f32.mrb[0].mxu0
    %v4681 = vpop.f32.mrb[0].mxu0
    %v4682 = vadd.f32 0.0, %v4681
    %v4683 = vpop.f32.mrb[0].mxu0
    %4684 = vmatprep.mubr.bf16.mxu0 0
    %4685 = vmatmul.mubr.bf16.gmra.mrb[0].mxu0 %v4578
    %v4686 = vpop.f32.mrb[0].mxu0
    %v4687 = vadd.f32 0.0, %v4686
    %v4688 = vpop.f32.mrb[0].mxu0
    %v4689 = vpop.f32.mrb[0].mxu0
    %v4690 = vadd.f32 0.0, %v4689
    %v4691 = vpop.f32.mrb[0].mxu0
    %4692 = vdwg.mxu0
    %v4693 = vadd.f32 %v4255, %v4615
    %v4694 = vadd.f32 %v4256, %v4618
    %v4695 = vadd.f32 %v4257, %v4623
    %v4696 = vadd.f32 %v4258, %v4626
    %v4697 = vadd.f32 %v4259, %v4631
    %v4698 = vadd.f32 %v4260, %v4634
    %v4699 = vadd.f32 %v4261, %v4639
    %v4700 = vadd.f32 %v4262, %v4642
    %v4701 = vadd.f32 %v4263, %v4647
    %v4702 = vadd.f32 %v4264, %v4650
    %v4703 = vadd.f32 %v4265, %v4655
    %v4704 = vadd.f32 %v4266, %v4658
    %v4705 = vadd.f32 %v4267, %v4663
    %v4706 = vadd.f32 %v4268, %v4666
    %v4707 = vadd.f32 %v4269, %v4671
    %v4708 = vadd.f32 %v4270, %v4674
    %v4709 = vadd.f32 %v4271, %v4679
    %v4710 = vadd.f32 %v4272, %v4682
    %v4711 = vadd.f32 %v4273, %v4687
    %v4712 = vadd.f32 %v4274, %v4690
    %v4713 = vld [vmem:[%s3] sm:$0x1]
    %v4715 = vlaneseq
    %v4716 = vshrl.u32 %v4715, 7
    %v4717 = vsub.s32 0, %v4716
    %v4718 = vrot.slane %v4713, %v4717
    %v4720 = vadd.f32 %v4693, %v4718
    %v4721 = vadd.f32 %v4694, %v4718
    %v4722 = vadd.f32 %v4695, %v4718
    %v4723 = vadd.f32 %v4696, %v4718
    %v4724 = vadd.f32 %v4697, %v4718
    %v4725 = vadd.f32 %v4698, %v4718
    %v4726 = vadd.f32 %v4699, %v4718
    %v4727 = vadd.f32 %v4700, %v4718
    %v4728 = vadd.f32 %v4701, %v4718
    %v4729 = vadd.f32 %v4702, %v4718
    %v4730 = vadd.f32 %v4703, %v4718
    %v4731 = vadd.f32 %v4704, %v4718
    %v4732 = vadd.f32 %v4705, %v4718
    %v4733 = vadd.f32 %v4706, %v4718
    %v4734 = vadd.f32 %v4707, %v4718
    %v4735 = vadd.f32 %v4708, %v4718
    %v4736 = vadd.f32 %v4709, %v4718
    %v4737 = vadd.f32 %v4710, %v4718
    %v4738 = vadd.f32 %v4711, %v4718
    %v4739 = vadd.f32 %v4712, %v4718
    %v4740 = vmax.f32 %v4720, 0.0
    %v4741 = vmax.f32 %v4721, 0.0
    %v4742 = vmax.f32 %v4722, 0.0
    %v4743 = vmax.f32 %v4723, 0.0
    %v4744 = vmax.f32 %v4724, 0.0
    %v4745 = vmax.f32 %v4725, 0.0
    %v4746 = vmax.f32 %v4726, 0.0
    %v4747 = vmax.f32 %v4727, 0.0
    %v4748 = vmax.f32 %v4728, 0.0
    %v4749 = vmax.f32 %v4729, 0.0
    %v4750 = vmax.f32 %v4730, 0.0
    %v4751 = vmax.f32 %v4731, 0.0
    %v4752 = vmax.f32 %v4732, 0.0
    %v4753 = vmax.f32 %v4733, 0.0
    %v4754 = vmax.f32 %v4734, 0.0
    %v4755 = vmax.f32 %v4735, 0.0
    %v4756 = vmax.f32 %v4736, 0.0
    %v4757 = vmax.f32 %v4737, 0.0
    %v4758 = vmax.f32 %v4738, 0.0
    %v4759 = vmax.f32 %v4739, 0.0
    %v4780 = vcombine.high %v4740, %v4740
    %v4782 = vunpack.c.l.s4 1983009808
    %v4783 = vunpack.c.0.s8 %v4782
    %v4784 = vlaneseq
    %v4785 = vshrl.u32 %v4784, 7
    %v4786 = vsub.s32 %v4783, %v4785
    %v4787 = vrot.slane %v4740, %v4786
    %v4789 = vunpack.c.l.s4 1983009808
    %v4790 = vunpack.c.0.s8 %v4789
    %v4791 = vlaneseq
    %v4792 = vshrl.u32 %v4791, 7
    %v4793 = vsub.s32 %v4790, %v4792
    %v4794 = vrot.slane %v4780, %v4793
    %v4795 = vcombine.high %v4787, %v4787
    %v4796 = vcombine.high %v4794, %v4794
    %v4797 = vcombine.high %v4741, %v4741
    %v4799 = vunpack.c.l.s4 1983009808
    %v4800 = vunpack.c.0.s8 %v4799
    %v4801 = vlaneseq
    %v4802 = vshrl.u32 %v4801, 7
    %v4803 = vsub.s32 %v4800, %v4802
    %v4804 = vrot.slane %v4741, %v4803
    %v4806 = vunpack.c.l.s4 1983009808
    %v4807 = vunpack.c.0.s8 %v4806
    %v4808 = vlaneseq
    %v4809 = vshrl.u32 %v4808, 7
    %v4810 = vsub.s32 %v4807, %v4809
    %v4811 = vrot.slane %v4797, %v4810
    %v4812 = vcombine.high %v4804, %v4804
    %v4813 = vcombine.high %v4811, %v4811
    %v4814 = vcombine.high %v4742, %v4742
    %v4816 = vunpack.c.l.s4 1983009808
    %v4817 = vunpack.c.0.s8 %v4816
    %v4818 = vlaneseq
    %v4819 = vshrl.u32 %v4818, 7
    %v4820 = vsub.s32 %v4817, %v4819
    %v4821 = vrot.slane %v4742, %v4820
    %v4823 = vunpack.c.l.s4 1983009808
    %v4824 = vunpack.c.0.s8 %v4823
    %v4825 = vlaneseq
    %v4826 = vshrl.u32 %v4825, 7
    %v4827 = vsub.s32 %v4824, %v4826
    %v4828 = vrot.slane %v4814, %v4827
    %v4829 = vcombine.high %v4821, %v4821
    %v4830 = vcombine.high %v4828, %v4828
    %v4831 = vcombine.high %v4743, %v4743
    %v4833 = vunpack.c.l.s4 1983009808
    %v4834 = vunpack.c.0.s8 %v4833
    %v4835 = vlaneseq
    %v4836 = vshrl.u32 %v4835, 7
    %v4837 = vsub.s32 %v4834, %v4836
    %v4838 = vrot.slane %v4743, %v4837
    %v4840 = vunpack.c.l.s4 1983009808
    %v4841 = vunpack.c.0.s8 %v4840
    %v4842 = vlaneseq
    %v4843 = vshrl.u32 %v4842, 7
    %v4844 = vsub.s32 %v4841, %v4843
    %v4845 = vrot.slane %v4831, %v4844
    %v4846 = vcombine.high %v4838, %v4838
    %v4847 = vcombine.high %v4845, %v4845
    %v4848 = vcombine.high %v4744, %v4744
    %v4850 = vunpack.c.l.s4 1983009808
    %v4851 = vunpack.c.0.s8 %v4850
    %v4852 = vlaneseq
    %v4853 = vshrl.u32 %v4852, 7
    %v4854 = vsub.s32 %v4851, %v4853
    %v4855 = vrot.slane %v4744, %v4854
    %v4857 = vunpack.c.l.s4 1983009808
    %v4858 = vunpack.c.0.s8 %v4857
    %v4859 = vlaneseq
    %v4860 = vshrl.u32 %v4859, 7
    %v4861 = vsub.s32 %v4858, %v4860
    %v4862 = vrot.slane %v4848, %v4861
    %v4863 = vcombine.high %v4855, %v4855
    %v4864 = vcombine.high %v4862, %v4862
    %v4865 = vcombine.high %v4745, %v4745
    %v4867 = vunpack.c.l.s4 1983009808
    %v4868 = vunpack.c.0.s8 %v4867
    %v4869 = vlaneseq
    %v4870 = vshrl.u32 %v4869, 7
    %v4871 = vsub.s32 %v4868, %v4870
    %v4872 = vrot.slane %v4745, %v4871
    %v4874 = vunpack.c.l.s4 1983009808
    %v4875 = vunpack.c.0.s8 %v4874
    %v4876 = vlaneseq
    %v4877 = vshrl.u32 %v4876, 7
    %v4878 = vsub.s32 %v4875, %v4877
    %v4879 = vrot.slane %v4865, %v4878
    %v4880 = vcombine.high %v4872, %v4872
    %v4881 = vcombine.high %v4879, %v4879
    %v4882 = vcombine.high %v4746, %v4746
    %v4884 = vunpack.c.l.s4 1983009808
    %v4885 = vunpack.c.0.s8 %v4884
    %v4886 = vlaneseq
    %v4887 = vshrl.u32 %v4886, 7
    %v4888 = vsub.s32 %v4885, %v4887
    %v4889 = vrot.slane %v4746, %v4888
    %v4891 = vunpack.c.l.s4 1983009808
    %v4892 = vunpack.c.0.s8 %v4891
    %v4893 = vlaneseq
    %v4894 = vshrl.u32 %v4893, 7
    %v4895 = vsub.s32 %v4892, %v4894
    %v4896 = vrot.slane %v4882, %v4895
    %v4897 = vcombine.high %v4889, %v4889
    %v4898 = vcombine.high %v4896, %v4896
    %v4899 = vcombine.high %v4747, %v4747
    %v4901 = vunpack.c.l.s4 1983009808
    %v4902 = vunpack.c.0.s8 %v4901
    %v4903 = vlaneseq
    %v4904 = vshrl.u32 %v4903, 7
    %v4905 = vsub.s32 %v4902, %v4904
    %v4906 = vrot.slane %v4747, %v4905
    %v4908 = vunpack.c.l.s4 1983009808
    %v4909 = vunpack.c.0.s8 %v4908
    %v4910 = vlaneseq
    %v4911 = vshrl.u32 %v4910, 7
    %v4912 = vsub.s32 %v4909, %v4911
    %v4913 = vrot.slane %v4899, %v4912
    %v4914 = vcombine.high %v4906, %v4906
    %v4915 = vcombine.high %v4913, %v4913
    %v4916 = vcombine.high %v4748, %v4748
    %v4918 = vunpack.c.l.s4 1983009808
    %v4919 = vunpack.c.0.s8 %v4918
    %v4920 = vlaneseq
    %v4921 = vshrl.u32 %v4920, 7
    %v4922 = vsub.s32 %v4919, %v4921
    %v4923 = vrot.slane %v4748, %v4922
    %v4925 = vunpack.c.l.s4 1983009808
    %v4926 = vunpack.c.0.s8 %v4925
    %v4927 = vlaneseq
    %v4928 = vshrl.u32 %v4927, 7
    %v4929 = vsub.s32 %v4926, %v4928
    %v4930 = vrot.slane %v4916, %v4929
    %v4931 = vcombine.high %v4923, %v4923
    %v4932 = vcombine.high %v4930, %v4930
    %v4933 = vcombine.high %v4749, %v4749
    %v4935 = vunpack.c.l.s4 1983009808
    %v4936 = vunpack.c.0.s8 %v4935
    %v4937 = vlaneseq
    %v4938 = vshrl.u32 %v4937, 7
    %v4939 = vsub.s32 %v4936, %v4938
    %v4940 = vrot.slane %v4749, %v4939
    %v4942 = vunpack.c.l.s4 1983009808
    %v4943 = vunpack.c.0.s8 %v4942
    %v4944 = vlaneseq
    %v4945 = vshrl.u32 %v4944, 7
    %v4946 = vsub.s32 %v4943, %v4945
    %v4947 = vrot.slane %v4933, %v4946
    %v4948 = vcombine.high %v4940, %v4940
    %v4949 = vcombine.high %v4947, %v4947
    %v4950 = vcombine.high %v4750, %v4750
    %v4952 = vunpack.c.l.s4 1983009808
    %v4953 = vunpack.c.0.s8 %v4952
    %v4954 = vlaneseq
    %v4955 = vshrl.u32 %v4954, 7
    %v4956 = vsub.s32 %v4953, %v4955
    %v4957 = vrot.slane %v4750, %v4956
    %v4959 = vunpack.c.l.s4 1983009808
    %v4960 = vunpack.c.0.s8 %v4959
    %v4961 = vlaneseq
    %v4962 = vshrl.u32 %v4961, 7
    %v4963 = vsub.s32 %v4960, %v4962
    %v4964 = vrot.slane %v4950, %v4963
    %v4965 = vcombine.high %v4957, %v4957
    %v4966 = vcombine.high %v4964, %v4964
    %v4967 = vcombine.high %v4751, %v4751
    %v4969 = vunpack.c.l.s4 1983009808
    %v4970 = vunpack.c.0.s8 %v4969
    %v4971 = vlaneseq
    %v4972 = vshrl.u32 %v4971, 7
    %v4973 = vsub.s32 %v4970, %v4972
    %v4974 = vrot.slane %v4751, %v4973
    %v4976 = vunpack.c.l.s4 1983009808
    %v4977 = vunpack.c.0.s8 %v4976
    %v4978 = vlaneseq
    %v4979 = vshrl.u32 %v4978, 7
    %v4980 = vsub.s32 %v4977, %v4979
    %v4981 = vrot.slane %v4967, %v4980
    %v4982 = vcombine.high %v4974, %v4974
    %v4983 = vcombine.high %v4981, %v4981
    %v4984 = vcombine.high %v4752, %v4752
    %v4986 = vunpack.c.l.s4 1983009808
    %v4987 = vunpack.c.0.s8 %v4986
    %v4988 = vlaneseq
    %v4989 = vshrl.u32 %v4988, 7
    %v4990 = vsub.s32 %v4987, %v4989
    %v4991 = vrot.slane %v4752, %v4990
    %v4993 = vunpack.c.l.s4 1983009808
    %v4994 = vunpack.c.0.s8 %v4993
    %v4995 = vlaneseq
    %v4996 = vshrl.u32 %v4995, 7
    %v4997 = vsub.s32 %v4994, %v4996
    %v4998 = vrot.slane %v4984, %v4997
    %v4999 = vcombine.high %v4991, %v4991
    %v5000 = vcombine.high %v4998, %v4998
    %v5001 = vcombine.high %v4753, %v4753
    %v5003 = vunpack.c.l.s4 1983009808
    %v5004 = vunpack.c.0.s8 %v5003
    %v5005 = vlaneseq
    %v5006 = vshrl.u32 %v5005, 7
    %v5007 = vsub.s32 %v5004, %v5006
    %v5008 = vrot.slane %v4753, %v5007
    %v5010 = vunpack.c.l.s4 1983009808
    %v5011 = vunpack.c.0.s8 %v5010
    %v5012 = vlaneseq
    %v5013 = vshrl.u32 %v5012, 7
    %v5014 = vsub.s32 %v5011, %v5013
    %v5015 = vrot.slane %v5001, %v5014
    %v5016 = vcombine.high %v5008, %v5008
    %v5017 = vcombine.high %v5015, %v5015
    %v5018 = vcombine.high %v4754, %v4754
    %v5020 = vunpack.c.l.s4 1983009808
    %v5021 = vunpack.c.0.s8 %v5020
    %v5022 = vlaneseq
    %v5023 = vshrl.u32 %v5022, 7
    %v5024 = vsub.s32 %v5021, %v5023
    %v5025 = vrot.slane %v4754, %v5024
    %v5027 = vunpack.c.l.s4 1983009808
    %v5028 = vunpack.c.0.s8 %v5027
    %v5029 = vlaneseq
    %v5030 = vshrl.u32 %v5029, 7
    %v5031 = vsub.s32 %v5028, %v5030
    %v5032 = vrot.slane %v5018, %v5031
    %v5033 = vcombine.high %v5025, %v5025
    %v5034 = vcombine.high %v5032, %v5032
    %v5035 = vcombine.high %v4755, %v4755
    %v5037 = vunpack.c.l.s4 1983009808
    %v5038 = vunpack.c.0.s8 %v5037
    %v5039 = vlaneseq
    %v5040 = vshrl.u32 %v5039, 7
    %v5041 = vsub.s32 %v5038, %v5040
    %v5042 = vrot.slane %v4755, %v5041
    %v5044 = vunpack.c.l.s4 1983009808
    %v5045 = vunpack.c.0.s8 %v5044
    %v5046 = vlaneseq
    %v5047 = vshrl.u32 %v5046, 7
    %v5048 = vsub.s32 %v5045, %v5047
    %v5049 = vrot.slane %v5035, %v5048
    %v5050 = vcombine.high %v5042, %v5042
    %v5051 = vcombine.high %v5049, %v5049
    %v5052 = vcombine.high %v4756, %v4756
    %v5054 = vunpack.c.l.s4 1983009808
    %v5055 = vunpack.c.0.s8 %v5054
    %v5056 = vlaneseq
    %v5057 = vshrl.u32 %v5056, 7
    %v5058 = vsub.s32 %v5055, %v5057
    %v5059 = vrot.slane %v4756, %v5058
    %v5061 = vunpack.c.l.s4 1983009808
    %v5062 = vunpack.c.0.s8 %v5061
    %v5063 = vlaneseq
    %v5064 = vshrl.u32 %v5063, 7
    %v5065 = vsub.s32 %v5062, %v5064
    %v5066 = vrot.slane %v5052, %v5065
    %v5067 = vcombine.high %v5059, %v5059
    %v5068 = vcombine.high %v5066, %v5066
    %v5069 = vcombine.high %v4757, %v4757
    %v5071 = vunpack.c.l.s4 1983009808
    %v5072 = vunpack.c.0.s8 %v5071
    %v5073 = vlaneseq
    %v5074 = vshrl.u32 %v5073, 7
    %v5075 = vsub.s32 %v5072, %v5074
    %v5076 = vrot.slane %v4757, %v5075
    %v5078 = vunpack.c.l.s4 1983009808
    %v5079 = vunpack.c.0.s8 %v5078
    %v5080 = vlaneseq
    %v5081 = vshrl.u32 %v5080, 7
    %v5082 = vsub.s32 %v5079, %v5081
    %v5083 = vrot.slane %v5069, %v5082
    %v5084 = vcombine.high %v5076, %v5076
    %v5085 = vcombine.high %v5083, %v5083
    %v5086 = vcombine.high %v4758, %v4758
    %v5088 = vunpack.c.l.s4 1983009808
    %v5089 = vunpack.c.0.s8 %v5088
    %v5090 = vlaneseq
    %v5091 = vshrl.u32 %v5090, 7
    %v5092 = vsub.s32 %v5089, %v5091
    %v5093 = vrot.slane %v4758, %v5092
    %v5095 = vunpack.c.l.s4 1983009808
    %v5096 = vunpack.c.0.s8 %v5095
    %v5097 = vlaneseq
    %v5098 = vshrl.u32 %v5097, 7
    %v5099 = vsub.s32 %v5096, %v5098
    %v5100 = vrot.slane %v5086, %v5099
    %v5101 = vcombine.high %v5093, %v5093
    %v5102 = vcombine.high %v5100, %v5100
    %v5103 = vcombine.high %v4759, %v4759
    %v5105 = vunpack.c.l.s4 1983009808
    %v5106 = vunpack.c.0.s8 %v5105
    %v5107 = vlaneseq
    %v5108 = vshrl.u32 %v5107, 7
    %v5109 = vsub.s32 %v5106, %v5108
    %v5110 = vrot.slane %v4759, %v5109
    %v5112 = vunpack.c.l.s4 1983009808
    %v5113 = vunpack.c.0.s8 %v5112
    %v5114 = vlaneseq
    %v5115 = vshrl.u32 %v5114, 7
    %v5116 = vsub.s32 %v5113, %v5115
    %v5117 = vrot.slane %v5103, %v5116
    %v5118 = vcombine.high %v5110, %v5110
    %v5119 = vcombine.high %v5117, %v5117
    %v5120 = vcombine.low %v4787, %v4795
    %v5121 = vcombine.low %v4794, %v4796
    %v5123 = vunpack.c.l.s4 1983009808
    %v5124 = vunpack.c.0.s8 %v5123
    %v5125 = vlaneseq
    %v5126 = vshrl.u32 %v5125, 7
    %v5127 = vsub.s32 %v5124, %v5126
    %v5128 = vrot.slane %v5120, %v5127
    %v5130 = vunpack.c.l.s4 1983009808
    %v5131 = vunpack.c.0.s8 %v5130
    %v5132 = vlaneseq
    %v5133 = vshrl.u32 %v5132, 7
    %v5134 = vsub.s32 %v5131, %v5133
    %v5135 = vrot.slane %v5121, %v5134
    %v5136 = vcombine.low %v5128, %v5135
    %v5138 = vunpack.c.l.s4 1983009808
    %v5139 = vunpack.c.0.s8 %v5138
    %v5140 = vlaneseq
    %v5141 = vshrl.u32 %v5140, 7
    %v5142 = vsub.s32 %v5139, %v5141
    %v5143 = vrot.slane %v4804, %v5142
    %v5144 = vcombine.low %v4812, %v4811
    %v5145 = vcombine.low %v4813, %v4821
    %v5147 = vunpack.c.l.s4 1983009808
    %v5148 = vunpack.c.0.s8 %v5147
    %v5149 = vlaneseq
    %v5150 = vshrl.u32 %v5149, 7
    %v5151 = vsub.s32 %v5148, %v5150
    %v5152 = vrot.slane %v5144, %v5151
    %v5154 = vunpack.c.l.s4 1983009808
    %v5155 = vunpack.c.0.s8 %v5154
    %v5156 = vlaneseq
    %v5157 = vshrl.u32 %v5156, 7
    %v5158 = vsub.s32 %v5155, %v5157
    %v5159 = vrot.slane %v5145, %v5158
    %v5160 = vcombine.low %v5152, %v5159
    %v5162 = vunpack.c.l.s4 1983009808
    %v5163 = vunpack.c.0.s8 %v5162
    %v5164 = vlaneseq
    %v5165 = vshrl.u32 %v5164, 7
    %v5166 = vsub.s32 %v5163, %v5165
    %v5167 = vrot.slane %v4829, %v5166
    %v5168 = vcombine.low %v4828, %v4830
    %v5169 = vcombine.low %v4838, %v4846
    %v5171 = vunpack.c.l.s4 1983009808
    %v5172 = vunpack.c.0.s8 %v5171
    %v5173 = vlaneseq
    %v5174 = vshrl.u32 %v5173, 7
    %v5175 = vsub.s32 %v5172, %v5174
    %v5176 = vrot.slane %v5168, %v5175
    %v5178 = vunpack.c.l.s4 1983009808
    %v5179 = vunpack.c.0.s8 %v5178
    %v5180 = vlaneseq
    %v5181 = vshrl.u32 %v5180, 7
    %v5182 = vsub.s32 %v5179, %v5181
    %v5183 = vrot.slane %v5169, %v5182
    %v5184 = vcombine.low %v5176, %v5183
    %v5186 = vunpack.c.l.s4 1983009808
    %v5187 = vunpack.c.0.s8 %v5186
    %v5188 = vlaneseq
    %v5189 = vshrl.u32 %v5188, 7
    %v5190 = vsub.s32 %v5187, %v5189
    %v5191 = vrot.slane %v4845, %v5190
    %v5192 = vcombine.low %v4847, %v4855
    %v5193 = vcombine.low %v4863, %v4862
    %v5195 = vunpack.c.l.s4 1983009808
    %v5196 = vunpack.c.0.s8 %v5195
    %v5197 = vlaneseq
    %v5198 = vshrl.u32 %v5197, 7
    %v5199 = vsub.s32 %v5196, %v5198
    %v5200 = vrot.slane %v5192, %v5199
    %v5202 = vunpack.c.l.s4 1983009808
    %v5203 = vunpack.c.0.s8 %v5202
    %v5204 = vlaneseq
    %v5205 = vshrl.u32 %v5204, 7
    %v5206 = vsub.s32 %v5203, %v5205
    %v5207 = vrot.slane %v5193, %v5206
    %v5208 = vcombine.low %v5200, %v5207
    %v5210 = vunpack.c.l.s4 1983009808
    %v5211 = vunpack.c.0.s8 %v5210
    %v5212 = vlaneseq
    %v5213 = vshrl.u32 %v5212, 7
    %v5214 = vsub.s32 %v5211, %v5213
    %v5215 = vrot.slane %v4864, %v5214
    %v5216 = vcombine.low %v4872, %v4880
    %v5217 = vcombine.low %v4879, %v4881
    %v5219 = vunpack.c.l.s4 1983009808
    %v5220 = vunpack.c.0.s8 %v5219
    %v5221 = vlaneseq
    %v5222 = vshrl.u32 %v5221, 7
    %v5223 = vsub.s32 %v5220, %v5222
    %v5224 = vrot.slane %v5216, %v5223
    %v5226 = vunpack.c.l.s4 1983009808
    %v5227 = vunpack.c.0.s8 %v5226
    %v5228 = vlaneseq
    %v5229 = vshrl.u32 %v5228, 7
    %v5230 = vsub.s32 %v5227, %v5229
    %v5231 = vrot.slane %v5217, %v5230
    %v5232 = vcombine.low %v5224, %v5231
    %v5234 = vunpack.c.l.s4 1983009808
    %v5235 = vunpack.c.0.s8 %v5234
    %v5236 = vlaneseq
    %v5237 = vshrl.u32 %v5236, 7
    %v5238 = vsub.s32 %v5235, %v5237
    %v5239 = vrot.slane %v4889, %v5238
    %v5240 = vcombine.low %v4897, %v4896
    %v5241 = vcombine.low %v4898, %v4906
    %v5243 = vunpack.c.l.s4 1983009808
    %v5244 = vunpack.c.0.s8 %v5243
    %v5245 = vlaneseq
    %v5246 = vshrl.u32 %v5245, 7
    %v5247 = vsub.s32 %v5244, %v5246
    %v5248 = vrot.slane %v5240, %v5247
    %v5250 = vunpack.c.l.s4 1983009808
    %v5251 = vunpack.c.0.s8 %v5250
    %v5252 = vlaneseq
    %v5253 = vshrl.u32 %v5252, 7
    %v5254 = vsub.s32 %v5251, %v5253
    %v5255 = vrot.slane %v5241, %v5254
    %v5256 = vcombine.low %v5248, %v5255
    %v5258 = vunpack.c.l.s4 1983009808
    %v5259 = vunpack.c.0.s8 %v5258
    %v5260 = vlaneseq
    %v5261 = vshrl.u32 %v5260, 7
    %v5262 = vsub.s32 %v5259, %v5261
    %v5263 = vrot.slane %v4914, %v5262
    %v5264 = vcombine.low %v4913, %v4915
    %v5265 = vcombine.low %v4923, %v4931
    %v5267 = vunpack.c.l.s4 1983009808
    %v5268 = vunpack.c.0.s8 %v5267
    %v5269 = vlaneseq
    %v5270 = vshrl.u32 %v5269, 7
    %v5271 = vsub.s32 %v5268, %v5270
    %v5272 = vrot.slane %v5264, %v5271
    %v5274 = vunpack.c.l.s4 1983009808
    %v5275 = vunpack.c.0.s8 %v5274
    %v5276 = vlaneseq
    %v5277 = vshrl.u32 %v5276, 7
    %v5278 = vsub.s32 %v5275, %v5277
    %v5279 = vrot.slane %v5265, %v5278
    %v5280 = vcombine.low %v5272, %v5279
    %v5282 = vunpack.c.l.s4 1983009808
    %v5283 = vunpack.c.0.s8 %v5282
    %v5284 = vlaneseq
    %v5285 = vshrl.u32 %v5284, 7
    %v5286 = vsub.s32 %v5283, %v5285
    %v5287 = vrot.slane %v4930, %v5286
    %v5288 = vcombine.low %v4932, %v4940
    %v5289 = vcombine.low %v4948, %v4947
    %v5291 = vunpack.c.l.s4 1983009808
    %v5292 = vunpack.c.0.s8 %v5291
    %v5293 = vlaneseq
    %v5294 = vshrl.u32 %v5293, 7
    %v5295 = vsub.s32 %v5292, %v5294
    %v5296 = vrot.slane %v5288, %v5295
    %v5298 = vunpack.c.l.s4 1983009808
    %v5299 = vunpack.c.0.s8 %v5298
    %v5300 = vlaneseq
    %v5301 = vshrl.u32 %v5300, 7
    %v5302 = vsub.s32 %v5299, %v5301
    %v5303 = vrot.slane %v5289, %v5302
    %v5304 = vcombine.low %v5296, %v5303
    %v5306 = vunpack.c.l.s4 1983009808
    %v5307 = vunpack.c.0.s8 %v5306
    %v5308 = vlaneseq
    %v5309 = vshrl.u32 %v5308, 7
    %v5310 = vsub.s32 %v5307, %v5309
    %v5311 = vrot.slane %v4949, %v5310
    %v5312 = vcombine.low %v4957, %v4965
    %v5313 = vcombine.low %v4964, %v4966
    %v5315 = vunpack.c.l.s4 1983009808
    %v5316 = vunpack.c.0.s8 %v5315
    %v5317 = vlaneseq
    %v5318 = vshrl.u32 %v5317, 7
    %v5319 = vsub.s32 %v5316, %v5318
    %v5320 = vrot.slane %v5312, %v5319
    %v5322 = vunpack.c.l.s4 1983009808
    %v5323 = vunpack.c.0.s8 %v5322
    %v5324 = vlaneseq
    %v5325 = vshrl.u32 %v5324, 7
    %v5326 = vsub.s32 %v5323, %v5325
    %v5327 = vrot.slane %v5313, %v5326
    %v5328 = vcombine.low %v5320, %v5327
    %v5330 = vunpack.c.l.s4 1983009808
    %v5331 = vunpack.c.0.s8 %v5330
    %v5332 = vlaneseq
    %v5333 = vshrl.u32 %v5332, 7
    %v5334 = vsub.s32 %v5331, %v5333
    %v5335 = vrot.slane %v4974, %v5334
    %v5336 = vcombine.low %v4982, %v4981
    %v5337 = vcombine.low %v4983, %v4991
    %v5339 = vunpack.c.l.s4 1983009808
    %v5340 = vunpack.c.0.s8 %v5339
    %v5341 = vlaneseq
    %v5342 = vshrl.u32 %v5341, 7
    %v5343 = vsub.s32 %v5340, %v5342
    %v5344 = vrot.slane %v5336, %v5343
    %v5346 = vunpack.c.l.s4 1983009808
    %v5347 = vunpack.c.0.s8 %v5346
    %v5348 = vlaneseq
    %v5349 = vshrl.u32 %v5348, 7
    %v5350 = vsub.s32 %v5347, %v5349
    %v5351 = vrot.slane %v5337, %v5350
    %v5352 = vcombine.low %v5344, %v5351
    %v5354 = vunpack.c.l.s4 1983009808
    %v5355 = vunpack.c.0.s8 %v5354
    %v5356 = vlaneseq
    %v5357 = vshrl.u32 %v5356, 7
    %v5358 = vsub.s32 %v5355, %v5357
    %v5359 = vrot.slane %v4999, %v5358
    %v5360 = vcombine.low %v4998, %v5000
    %v5361 = vcombine.low %v5008, %v5016
    %v5363 = vunpack.c.l.s4 1983009808
    %v5364 = vunpack.c.0.s8 %v5363
    %v5365 = vlaneseq
    %v5366 = vshrl.u32 %v5365, 7
    %v5367 = vsub.s32 %v5364, %v5366
    %v5368 = vrot.slane %v5360, %v5367
    %v5370 = vunpack.c.l.s4 1983009808
    %v5371 = vunpack.c.0.s8 %v5370
    %v5372 = vlaneseq
    %v5373 = vshrl.u32 %v5372, 7
    %v5374 = vsub.s32 %v5371, %v5373
    %v5375 = vrot.slane %v5361, %v5374
    %v5376 = vcombine.low %v5368, %v5375
    %v5378 = vunpack.c.l.s4 1983009808
    %v5379 = vunpack.c.0.s8 %v5378
    %v5380 = vlaneseq
    %v5381 = vshrl.u32 %v5380, 7
    %v5382 = vsub.s32 %v5379, %v5381
    %v5383 = vrot.slane %v5015, %v5382
    %v5384 = vcombine.low %v5017, %v5025
    %v5385 = vcombine.low %v5033, %v5032
    %v5387 = vunpack.c.l.s4 1983009808
    %v5388 = vunpack.c.0.s8 %v5387
    %v5389 = vlaneseq
    %v5390 = vshrl.u32 %v5389, 7
    %v5391 = vsub.s32 %v5388, %v5390
    %v5392 = vrot.slane %v5384, %v5391
    %v5394 = vunpack.c.l.s4 1983009808
    %v5395 = vunpack.c.0.s8 %v5394
    %v5396 = vlaneseq
    %v5397 = vshrl.u32 %v5396, 7
    %v5398 = vsub.s32 %v5395, %v5397
    %v5399 = vrot.slane %v5385, %v5398
    %v5400 = vcombine.low %v5392, %v5399
    %v5402 = vunpack.c.l.s4 1983009808
    %v5403 = vunpack.c.0.s8 %v5402
    %v5404 = vlaneseq
    %v5405 = vshrl.u32 %v5404, 7
    %v5406 = vsub.s32 %v5403, %v5405
    %v5407 = vrot.slane %v5034, %v5406
    %v5408 = vcombine.low %v5042, %v5050
    %v5409 = vcombine.low %v5049, %v5051
    %v5411 = vunpack.c.l.s4 1983009808
    %v5412 = vunpack.c.0.s8 %v5411
    %v5413 = vlaneseq
    %v5414 = vshrl.u32 %v5413, 7
    %v5415 = vsub.s32 %v5412, %v5414
    %v5416 = vrot.slane %v5408, %v5415
    %v5418 = vunpack.c.l.s4 1983009808
    %v5419 = vunpack.c.0.s8 %v5418
    %v5420 = vlaneseq
    %v5421 = vshrl.u32 %v5420, 7
    %v5422 = vsub.s32 %v5419, %v5421
    %v5423 = vrot.slane %v5409, %v5422
    %v5424 = vcombine.low %v5416, %v5423
    %v5426 = vunpack.c.l.s4 1983009808
    %v5427 = vunpack.c.0.s8 %v5426
    %v5428 = vlaneseq
    %v5429 = vshrl.u32 %v5428, 7
    %v5430 = vsub.s32 %v5427, %v5429
    %v5431 = vrot.slane %v5059, %v5430
    %v5432 = vcombine.low %v5067, %v5066
    %v5433 = vcombine.low %v5068, %v5076
    %v5435 = vunpack.c.l.s4 1983009808
    %v5436 = vunpack.c.0.s8 %v5435
    %v5437 = vlaneseq
    %v5438 = vshrl.u32 %v5437, 7
    %v5439 = vsub.s32 %v5436, %v5438
    %v5440 = vrot.slane %v5432, %v5439
    %v5442 = vunpack.c.l.s4 1983009808
    %v5443 = vunpack.c.0.s8 %v5442
    %v5444 = vlaneseq
    %v5445 = vshrl.u32 %v5444, 7
    %v5446 = vsub.s32 %v5443, %v5445
    %v5447 = vrot.slane %v5433, %v5446
    %v5448 = vcombine.low %v5440, %v5447
    %v5450 = vunpack.c.l.s4 1983009808
    %v5451 = vunpack.c.0.s8 %v5450
    %v5452 = vlaneseq
    %v5453 = vshrl.u32 %v5452, 7
    %v5454 = vsub.s32 %v5451, %v5453
    %v5455 = vrot.slane %v5084, %v5454
    %v5456 = vcombine.low %v5083, %v5085
    %v5457 = vcombine.low %v5093, %v5101
    %v5459 = vunpack.c.l.s4 1983009808
    %v5460 = vunpack.c.0.s8 %v5459
    %v5461 = vlaneseq
    %v5462 = vshrl.u32 %v5461, 7
    %v5463 = vsub.s32 %v5460, %v5462
    %v5464 = vrot.slane %v5456, %v5463
    %v5466 = vunpack.c.l.s4 1983009808
    %v5467 = vunpack.c.0.s8 %v5466
    %v5468 = vlaneseq
    %v5469 = vshrl.u32 %v5468, 7
    %v5470 = vsub.s32 %v5467, %v5469
    %v5471 = vrot.slane %v5457, %v5470
    %v5472 = vcombine.low %v5464, %v5471
    %v5474 = vunpack.c.l.s4 1983009808
    %v5475 = vunpack.c.0.s8 %v5474
    %v5476 = vlaneseq
    %v5477 = vshrl.u32 %v5476, 7
    %v5478 = vsub.s32 %v5475, %v5477
    %v5479 = vrot.slane %v5100, %v5478
    %v5480 = vcombine.low %v5102, %v5110
    %v5481 = vcombine.low %v5118, %v5117
    %v5483 = vunpack.c.l.s4 1983009808
    %v5484 = vunpack.c.0.s8 %v5483
    %v5485 = vlaneseq
    %v5486 = vshrl.u32 %v5485, 7
    %v5487 = vsub.s32 %v5484, %v5486
    %v5488 = vrot.slane %v5480, %v5487
    %v5490 = vunpack.c.l.s4 1983009808
    %v5491 = vunpack.c.0.s8 %v5490
    %v5492 = vlaneseq
    %v5493 = vshrl.u32 %v5492, 7
    %v5494 = vsub.s32 %v5491, %v5493
    %v5495 = vrot.slane %v5481, %v5494
    %v5496 = vcombine.low %v5488, %v5495
    %v5498 = vunpack.c.l.s4 1983009808
    %v5499 = vunpack.c.0.s8 %v5498
    %v5500 = vlaneseq
    %v5501 = vshrl.u32 %v5500, 7
    %v5502 = vsub.s32 %v5499, %v5501
    %v5503 = vrot.slane %v5119, %v5502
    %vm5536 = vcmask 1041408
    %v5537 = vsel %vm5536, %v5143, -inf
    %v5538 = vmax.f32 %v5136, %v5537
    %v5539 = vrot.slane %v5538, 4
    %v5540 = vmax.f32 %v5538, %v5539
    %v5541 = vrot.slane %v5540, 2
    %v5542 = vmax.f32 %v5540, %v5541
    %v5543 = vrot.slane %v5542, 1
    %v5544 = vmax.f32 %v5542, %v5543
    %v5545 = vsel %vm5536, %v5167, -inf
    %v5546 = vmax.f32 %v5160, %v5545
    %v5547 = vrot.slane %v5546, 4
    %v5548 = vmax.f32 %v5546, %v5547
    %v5549 = vrot.slane %v5548, 2
    %v5550 = vmax.f32 %v5548, %v5549
    %v5551 = vrot.slane %v5550, 1
    %v5552 = vmax.f32 %v5550, %v5551
    %v5553 = vsel %vm5536, %v5191, -inf
    %v5554 = vmax.f32 %v5184, %v5553
    %v5555 = vrot.slane %v5554, 4
    %v5556 = vmax.f32 %v5554, %v5555
    %v5557 = vrot.slane %v5556, 2
    %v5558 = vmax.f32 %v5556, %v5557
    %v5559 = vrot.slane %v5558, 1
    %v5560 = vmax.f32 %v5558, %v5559
    %v5561 = vsel %vm5536, %v5215, -inf
    %v5562 = vmax.f32 %v5208, %v5561
    %v5563 = vrot.slane %v5562, 4
    %v5564 = vmax.f32 %v5562, %v5563
    %v5565 = vrot.slane %v5564, 2
    %v5566 = vmax.f32 %v5564, %v5565
    %v5567 = vrot.slane %v5566, 1
    %v5568 = vmax.f32 %v5566, %v5567
    %v5569 = vsel %vm5536, %v5239, -inf
    %v5570 = vmax.f32 %v5232, %v5569
    %v5571 = vrot.slane %v5570, 4
    %v5572 = vmax.f32 %v5570, %v5571
    %v5573 = vrot.slane %v5572, 2
    %v5574 = vmax.f32 %v5572, %v5573
    %v5575 = vrot.slane %v5574, 1
    %v5576 = vmax.f32 %v5574, %v5575
    %v5577 = vsel %vm5536, %v5263, -inf
    %v5578 = vmax.f32 %v5256, %v5577
    %v5579 = vrot.slane %v5578, 4
    %v5580 = vmax.f32 %v5578, %v5579
    %v5581 = vrot.slane %v5580, 2
    %v5582 = vmax.f32 %v5580, %v5581
    %v5583 = vrot.slane %v5582, 1
    %v5584 = vmax.f32 %v5582, %v5583
    %v5585 = vsel %vm5536, %v5287, -inf
    %v5586 = vmax.f32 %v5280, %v5585
    %v5587 = vrot.slane %v5586, 4
    %v5588 = vmax.f32 %v5586, %v5587
    %v5589 = vrot.slane %v5588, 2
    %v5590 = vmax.f32 %v5588, %v5589
    %v5591 = vrot.slane %v5590, 1
    %v5592 = vmax.f32 %v5590, %v5591
    %v5593 = vsel %vm5536, %v5311, -inf
    %v5594 = vmax.f32 %v5304, %v5593
    %v5595 = vrot.slane %v5594, 4
    %v5596 = vmax.f32 %v5594, %v5595
    %v5597 = vrot.slane %v5596, 2
    %v5598 = vmax.f32 %v5596, %v5597
    %v5599 = vrot.slane %v5598, 1
    %v5600 = vmax.f32 %v5598, %v5599
    %v5601 = vsel %vm5536, %v5335, -inf
    %v5602 = vmax.f32 %v5328, %v5601
    %v5603 = vrot.slane %v5602, 4
    %v5604 = vmax.f32 %v5602, %v5603
    %v5605 = vrot.slane %v5604, 2
    %v5606 = vmax.f32 %v5604, %v5605
    %v5607 = vrot.slane %v5606, 1
    %v5608 = vmax.f32 %v5606, %v5607
    %v5609 = vsel %vm5536, %v5359, -inf
    %v5610 = vmax.f32 %v5352, %v5609
    %v5611 = vrot.slane %v5610, 4
    %v5612 = vmax.f32 %v5610, %v5611
    %v5613 = vrot.slane %v5612, 2
    %v5614 = vmax.f32 %v5612, %v5613
    %v5615 = vrot.slane %v5614, 1
    %v5616 = vmax.f32 %v5614, %v5615
    %v5617 = vsel %vm5536, %v5383, -inf
    %v5618 = vmax.f32 %v5376, %v5617
    %v5619 = vrot.slane %v5618, 4
    %v5620 = vmax.f32 %v5618, %v5619
    %v5621 = vrot.slane %v5620, 2
    %v5622 = vmax.f32 %v5620, %v5621
    %v5623 = vrot.slane %v5622, 1
    %v5624 = vmax.f32 %v5622, %v5623
    %v5625 = vsel %vm5536, %v5407, -inf
    %v5626 = vmax.f32 %v5400, %v5625
    %v5627 = vrot.slane %v5626, 4
    %v5628 = vmax.f32 %v5626, %v5627
    %v5629 = vrot.slane %v5628, 2
    %v5630 = vmax.f32 %v5628, %v5629
    %v5631 = vrot.slane %v5630, 1
    %v5632 = vmax.f32 %v5630, %v5631
    %v5633 = vsel %vm5536, %v5431, -inf
    %v5634 = vmax.f32 %v5424, %v5633
    %v5635 = vrot.slane %v5634, 4
    %v5636 = vmax.f32 %v5634, %v5635
    %v5637 = vrot.slane %v5636, 2
    %v5638 = vmax.f32 %v5636, %v5637
    %v5639 = vrot.slane %v5638, 1
    %v5640 = vmax.f32 %v5638, %v5639
    %v5641 = vsel %vm5536, %v5455, -inf
    %v5642 = vmax.f32 %v5448, %v5641
    %v5643 = vrot.slane %v5642, 4
    %v5644 = vmax.f32 %v5642, %v5643
    %v5645 = vrot.slane %v5644, 2
    %v5646 = vmax.f32 %v5644, %v5645
    %v5647 = vrot.slane %v5646, 1
    %v5648 = vmax.f32 %v5646, %v5647
    %v5649 = vsel %vm5536, %v5479, -inf
    %v5650 = vmax.f32 %v5472, %v5649
    %v5651 = vrot.slane %v5650, 4
    %v5652 = vmax.f32 %v5650, %v5651
    %v5653 = vrot.slane %v5652, 2
    %v5654 = vmax.f32 %v5652, %v5653
    %v5655 = vrot.slane %v5654, 1
    %v5656 = vmax.f32 %v5654, %v5655
    %v5657 = vsel %vm5536, %v5503, -inf
    %v5658 = vmax.f32 %v5496, %v5657
    %v5659 = vrot.slane %v5658, 4
    %v5660 = vmax.f32 %v5658, %v5659
    %v5661 = vrot.slane %v5660, 2
    %v5662 = vmax.f32 %v5660, %v5661
    %v5663 = vrot.slane %v5662, 1
    %v5664 = vmax.f32 %v5662, %v5663
    %v5665 = vpack.c.bf16 %v5544, %v5544
    %v5666 = vpack.c.bf16 %v5552, %v5552
    %v5667 = vpack.c.bf16 %v5560, %v5560
    %v5668 = vpack.c.bf16 %v5568, %v5568
    %v5669 = vpack.c.bf16 %v5576, %v5576
    %v5670 = vpack.c.bf16 %v5584, %v5584
    %v5671 = vpack.c.bf16 %v5592, %v5592
    %v5672 = vpack.c.bf16 %v5600, %v5600
    %v5673 = vpack.c.bf16 %v5608, %v5608
    %v5674 = vpack.c.bf16 %v5616, %v5616
    %v5675 = vpack.c.bf16 %v5624, %v5624
    %v5676 = vpack.c.bf16 %v5632, %v5632
    %v5677 = vpack.c.bf16 %v5640, %v5640
    %v5678 = vpack.c.bf16 %v5648, %v5648
    %v5679 = vpack.c.bf16 %v5656, %v5656
    %v5680 = vpack.c.bf16 %v5664, %v5664
    %v5681 = vld [vmem:[#allocation5] sm:$0xff]
    %v5682 = vld [vmem:[#allocation5 + $0x8] sm:$0xff]
    %v5683 = vld [vmem:[#allocation5 + $0x10] sm:$0xff]
    %v5684 = vld [vmem:[#allocation5 + $0x18] sm:$0xff]
    %v5685 = vld [vmem:[#allocation5 + $0x20] sm:$0xff]
    %v5686 = vld [vmem:[#allocation5 + $0x28] sm:$0xff]
    %v5687 = vld [vmem:[#allocation5 + $0x30] sm:$0xff]
    %v5688 = vld [vmem:[#allocation5 + $0x38] sm:$0xff]
    %v5689 = vld [vmem:[#allocation5 + $0x40] sm:$0xff]
    %v5690 = vld [vmem:[#allocation5 + $0x48] sm:$0xff]
    %v5691 = vld [vmem:[#allocation5 + $0x50] sm:$0xff]
    %v5692 = vld [vmem:[#allocation5 + $0x58] sm:$0xff]
    %v5693 = vld [vmem:[#allocation5 + $0x60] sm:$0xff]
    %v5694 = vld [vmem:[#allocation5 + $0x68] sm:$0xff]
    %v5695 = vld [vmem:[#allocation5 + $0x70] sm:$0xff]
    %v5696 = vld [vmem:[#allocation5 + $0x78] sm:$0xff]
    %v5697 = vld [vmem:[%s5] sm:$0x3]
    %v5699 = vlaneseq
    %v5700 = vshrl.u32 %v5699, 7
    %v5701 = vsub.s32 0, %v5700
    %v5702 = vrot.slane %v5697, %v5701
    %v5703 = vlaneseq
    %v5704 = vshrl.u32 %v5703, 7
    %v5705 = vsub.s32 1, %v5704
    %v5706 = vrot.slane %v5697, %v5705
    %v5725 = vunpack.c.l.b16 %v5665
    %v5726 = vunpack.c.l.b16 %v5666
    %v5727 = vunpack.c.l.b16 %v5667
    %v5728 = vunpack.c.l.b16 %v5668
    %v5729 = vunpack.c.l.b16 %v5669
    %v5730 = vunpack.c.l.b16 %v5670
    %v5731 = vunpack.c.l.b16 %v5671
    %v5732 = vunpack.c.l.b16 %v5672
    %v5733 = vunpack.c.l.b16 %v5673
    %v5734 = vunpack.c.l.b16 %v5674
    %v5735 = vunpack.c.l.b16 %v5675
    %v5736 = vunpack.c.l.b16 %v5676
    %v5737 = vunpack.c.l.b16 %v5677
    %v5738 = vunpack.c.l.b16 %v5678
    %v5739 = vunpack.c.l.b16 %v5679
    %v5740 = vunpack.c.l.b16 %v5680
    %vm5741 = vcmask 1041409
    %v5742 = vsel %vm5741, %v5726, %v5725
    %v5743 = vsel %vm1991, %v5727, %v5742
    %vm5744 = vcmask 1043459
    %v5745 = vsel %vm5744, %v5728, %v5743
    %v5746 = vsel %vm1993, %v5729, %v5745
    %vm5747 = vcmask 1045509
    %v5748 = vsel %vm5747, %v5730, %v5746
    %v5749 = vsel %vm1995, %v5731, %v5748
    %vm5750 = vcmask 1047559
    %v5751 = vsel %vm5750, %v5732, %v5749
    %v5752 = vsel %vm5741, %v5734, %v5733
    %v5753 = vsel %vm1991, %v5735, %v5752
    %v5754 = vsel %vm5744, %v5736, %v5753
    %v5755 = vsel %vm1993, %v5737, %v5754
    %v5756 = vsel %vm5747, %v5738, %v5755
    %v5757 = vsel %vm1995, %v5739, %v5756
    %v5758 = vsel %vm5750, %v5740, %v5757
    %v5759 = vpack.c.b16 %v5758, %v5751
    %v5777 = vunpack.c.l.b16 %v5681
    %v5778 = vunpack.c.h.b16 %v5681
    %v5779 = vunpack.c.l.b16 %v5682
    %v5780 = vunpack.c.h.b16 %v5682
    %v5781 = vunpack.c.l.b16 %v5683
    %v5782 = vunpack.c.h.b16 %v5683
    %v5783 = vunpack.c.l.b16 %v5684
    %v5784 = vunpack.c.h.b16 %v5684
    %v5785 = vunpack.c.l.b16 %v5685
    %v5786 = vunpack.c.h.b16 %v5685
    %v5787 = vunpack.c.l.b16 %v5686
    %v5788 = vunpack.c.h.b16 %v5686
    %v5789 = vunpack.c.l.b16 %v5687
    %v5790 = vunpack.c.h.b16 %v5687
    %v5791 = vunpack.c.l.b16 %v5688
    %v5792 = vunpack.c.h.b16 %v5688
    %v5793 = vunpack.c.l.b16 %v5689
    %v5794 = vunpack.c.h.b16 %v5689
    %v5795 = vunpack.c.l.b16 %v5690
    %v5796 = vunpack.c.h.b16 %v5690
    %v5797 = vunpack.c.l.b16 %v5691
    %v5798 = vunpack.c.h.b16 %v5691
    %v5799 = vunpack.c.l.b16 %v5692
    %v5800 = vunpack.c.h.b16 %v5692
    %v5801 = vunpack.c.l.b16 %v5693
    %v5802 = vunpack.c.h.b16 %v5693
    %v5803 = vunpack.c.l.b16 %v5694
    %v5804 = vunpack.c.h.b16 %v5694
    %v5805 = vunpack.c.l.b16 %v5695
    %v5806 = vunpack.c.h.b16 %v5695
    %v5807 = vunpack.c.l.b16 %v5696
    %v5808 = vunpack.c.h.b16 %v5696
    %v5809 = vpack.c.b16 %v5779, %v5777
    %v5810 = vpack.c.b16 %v5780, %v5778
    %v5811 = vpack.c.b16 %v5783, %v5781
    %v5812 = vpack.c.b16 %v5784, %v5782
    %v5813 = vpack.c.b16 %v5787, %v5785
    %v5814 = vpack.c.b16 %v5788, %v5786
    %v5815 = vpack.c.b16 %v5791, %v5789
    %v5816 = vpack.c.b16 %v5792, %v5790
    %v5817 = vpack.c.b16 %v5795, %v5793
    %v5818 = vpack.c.b16 %v5796, %v5794
    %v5819 = vpack.c.b16 %v5799, %v5797
    %v5820 = vpack.c.b16 %v5800, %v5798
    %v5821 = vpack.c.b16 %v5803, %v5801
    %v5822 = vpack.c.b16 %v5804, %v5802
    %v5823 = vpack.c.b16 %v5807, %v5805
    %v5824 = vpack.c.b16 %v5808, %v5806
    %5841 = vmatprep.subr.bf16.mxu0 %v5810
    %5842 = vmatpush1.bf16.msra.mxu0 %v5809
    %5843 = vmatprep.subr.bf16.mxu0 %v5812
    %5844 = vmatpush1.bf16.msra.mxu0 %v5811
    %5845 = vmatprep.subr.bf16.mxu0 %v5814
    %5846 = vmatpush1.bf16.msra.mxu0 %v5813
    %5847 = vmatprep.subr.bf16.mxu0 %v5816
    %5848 = vmatpush1.bf16.msra.mxu0 %v5815
    %5849 = vmatprep.subr.bf16.mxu0 %v5818
    %5850 = vmatpush1.bf16.msra.mxu0 %v5817
    %5851 = vmatprep.subr.bf16.mxu0 %v5820
    %5852 = vmatpush1.bf16.msra.mxu0 %v5819
    %5853 = vmatprep.subr.bf16.mxu0 %v5822
    %5854 = vmatpush1.bf16.msra.mxu0 %v5821
    %5855 = vmatprep.subr.bf16.mxu0 %v5824
    %5856 = vmatpush1.bf16.msra.mxu0 %v5823
    %5857 = vmatprep.subr.bf16.mxu0 0
    %5858 = vmatpush1.bf16.msra.mxu0 0
    %5859 = vmatprep.subr.bf16.mxu0 0
    %5860 = vmatpush1.bf16.msra.mxu0 0
    %5861 = vmatprep.subr.bf16.mxu0 0
    %5862 = vmatpush1.bf16.msra.mxu0 0
    %5863 = vmatprep.subr.bf16.mxu0 0
    %5864 = vmatpush1.bf16.msra.mxu0 0
    %5865 = vmatprep.subr.bf16.mxu0 0
    %5866 = vmatpush1.bf16.msra.mxu0 0
    %5867 = vmatprep.subr.bf16.mxu0 0
    %5868 = vmatpush1.bf16.msra.mxu0 0
    %5869 = vmatprep.subr.bf16.mxu0 0
    %5870 = vmatpush1.bf16.msra.mxu0 0
    %5871 = vmatprep.subr.bf16.mxu0 0
    %5872 = vmatpush1.bf16.msra.mxu0 0
    %5873 = vmatprep.mubr.bf16.mxu0 0
    %5874 = vmatmul.mubr.bf16.gmra.mrb[0].mxu0 %v5759
    %v5875 = vpop.f32.mrb[0].mxu0
    %v5876 = vadd.f32 %v5702, %v5875
    %v5877 = vpop.f32.mrb[0].mxu0
    %v5878 = vadd.f32 %v5706, %v5877
    %v5879 = vpop.f32.mrb[0].mxu0
    %v5880 = vadd.f32 %v5702, %v5879
    %v5881 = vpop.f32.mrb[0].mxu0
    %v5882 = vadd.f32 %v5706, %v5881
    %5883 = vdwg.mxu0
    %v5884 = vmax.f32 %v5876, 0.0
    %v5885 = vmax.f32 %v5880, 0.0
    %v5886 = vxor.u32 %v5878, 2147483648
    %v5887 = vxor.u32 %v5882, 2147483648
    %v5888 = vmul.f32 %v5886, 1.442695
    %v5889 = vpow.pop %v5888
    %v5890 = vmul.f32 %v5887, 1.442695
    %v5891 = vpow.pop %v5890
    %v5892 = vadd.f32 %v5889, 1.0
    %v5893 = vadd.f32 %v5891, 1.0
    %v5894 = vrcp.pop %v5892
    %v5895 = vmul.f32 1.0, %v5894
    %v5896 = vrcp.pop %v5893
    %v5897 = vmul.f32 1.0, %v5896
    %v5898 = vmul.f32 %v5895, %v5884
    %v5899 = vmul.f32 %v5897, %v5885
    %v5900 = vsub.f32 1.0, %v5895
    %v5901 = vsub.f32 1.0, %v5897
    %v5918 = vsel %vm5741, %v5552, %v5544
    %v5919 = vsel %vm1991, %v5560, %v5918
    %v5920 = vsel %vm5744, %v5568, %v5919
    %v5921 = vsel %vm1993, %v5576, %v5920
    %v5922 = vsel %vm5747, %v5584, %v5921
    %v5923 = vsel %vm1995, %v5592, %v5922
    %v5924 = vsel %vm5750, %v5600, %v5923
    %v5925 = vsel %vm5741, %v5616, %v5608
    %v5926 = vsel %vm1991, %v5624, %v5925
    %v5927 = vsel %vm5744, %v5632, %v5926
    %v5928 = vsel %vm1993, %v5640, %v5927
    %v5929 = vsel %vm5747, %v5648, %v5928
    %v5930 = vsel %vm1995, %v5656, %v5929
    %v5931 = vsel %vm5750, %v5664, %v5930
    %v5934 = vmul.f32 %v5900, %v5924
    %v5935 = vmul.f32 %v5901, %v5931
    %v5936 = vadd.f32 %v5898, %v5934
    %v5937 = vadd.f32 %v5899, %v5935
    %5938 = vst [vmem:[#allocation7] sm:$0xff] %v5936
    %5939 = vst [vmem:[#allocation7 + $0x8] sm:$0xff] %v5937
    // Predicated region
    $region34: #{tpu_custom_call.1} parent=1 // pred_check
      _
    $region35: #{tpu_custom_call.1} parent=1 // pred_check_branch
      %5941 = sbr.rel (0) target = $region37
    $region36: #{tpu_custom_call.1} parent=1 // pred_region
      %s5943 = ssub.s32 256, 256
      %5944 = vsyncadd [#allocation4], %s5943
      %s5945 = sshll.u32 [#allocation7], 4
      %s5946 = int_to_ptr.vmem [resolvable:$true] %s5945
      %5951 = dma.vmem_to_hbm [thread:$0]  %s5946, 256, %s6, [#allocation4], 128, 128, 8
    $region37: #{tpu_custom_call.1} parent=1 // pred_fallthru
      _
    // Predicated region
    $region38: #{tpu_custom_call.1} parent=1 // pred_check
      _
    $region39: #{tpu_custom_call.1} parent=1 // pred_check_branch
      %5953 = sbr.rel (0) target = $region41
    $region40: #{tpu_custom_call.1} parent=1 // pred_region
      %5954 = dma.done [#allocation4], 256
    $region41: #{tpu_custom_call.1} parent=1 // pred_fallthru
      _
    %5955 = vsyncpa [#allocation3], 1
    %5956 = vsyncpa [#allocation6], 1
    %5957 = vsyncpa [#allocation4], 1

</llo_original>
